<compile_context>
chip_gen: v7x
topology: tpu7x:2x2x1
jax: 0.10.0
libtpu: 0.0.40
codegen_flags: <defaults>
</compile_context>

<pallas_src>
import numpy as np
import jax
import jax.numpy as jnp
from jax import lax
from jax.experimental import pallas as pl
from jax.experimental.pallas import tpu as pltpu


# ----------------------------------------------------------------------------
# Chip-dependent (static, trace-time) heuristics
# ----------------------------------------------------------------------------
def _device_kind() -> str:
    try:
        return (jax.devices()[0].device_kind or "").lower()
    except Exception:
        return ""


def _tensorcores_per_chip() -> int:
    # v7x has 2 TensorCores per chip; v5e/v6e have 1, where the grid is a
    # serial loop and splitting BN only halves MXU sublane fill.
    return 2 if "v7" in _device_kind() else 1


def _blockdiag_score_cap() -> int:
    # Largest M for which a single (M, M) block-diagonal score matmul is still
    # roughly one MXU tile: 128 on v5e (4x128^2 MXU), 256 on v6e/v7x.
    return 128 if "v5" in _device_kind() else 256


# ----------------------------------------------------------------------------
# Fused forward kernel (whole network per grid step)
# ----------------------------------------------------------------------------
def _make_fused_kernel(use_blockdiag: bool):
    def kernel(x_ref, in_w_ref, in_b_ref, wqkv_ref, wo_ref,
               wff1_ref, bff1_ref, wff2_ref, bff2_ref,
               out_w_ref, out_b_ref, o_ref):
        """Whole Transformer forward for a block of BN_tile sequences.

        x_ref    : (BN_tile, T, IC)    input sequences (time-major, channel-last)
        in_w/b   : (IC, C), (1, C)     in_conv (1x1 conv == linear)
        wqkv     : (L, 3C, 3H)         fused [wq | wk | pad(wv)] per layer
        wo       : (L, H, C)
        wff1/2   : (L, C, C), bff1/2: (L, 1, C)
        out_w/b  : (C, Ppad), (1, Ppad) lane-dense padded out_conv
        o_ref    : (BN_tile, Ppad)
        """
        f32 = jnp.float32
        BNt, T, IC = x_ref.shape
        C = in_w_ref.shape[1]
        L, _, H3 = wqkv_ref.shape
        H = H3 // 3
        M = BNt * T

        # ---- in_conv: pointwise linear on the flattened (M, IC) slab ----
        x2d = x_ref[...].reshape(M, IC)
        h = jnp.dot(x2d, in_w_ref[...], preferred_element_type=f32) + in_b_ref[...]

        # ---- masks built ONCE per grid step (hoisted out of the layer loop) ----
        t_idx3 = lax.broadcasted_iota(jnp.int32, (BNt, T, C), 1)
        keep1 = (t_idx3 >= 1).astype(f32)      # zero the (wrapped) row at t < 1
        keep2 = (t_idx3 >= 2).astype(f32)      # zero the (wrapped) rows at t < 2

        if use_blockdiag:
            # Block-diagonal + causal penalty over flattened (M, M) scores.
            #   same-seq, non-causal -> 1000  (matches the torch module)
            #   cross-sequence       -> 1e9   (exp underflows to exactly 0)
            seq_row = lax.broadcasted_iota(jnp.int32, (BNt, T, M), 0).reshape(M, M)
            t_row = lax.broadcasted_iota(jnp.int32, (BNt, T, M), 1).reshape(M, M)
            col = lax.broadcasted_iota(jnp.int32, (M, M), 1)
            seq_lo = seq_row * T
            same_seq = (col >= seq_lo) & (col < seq_lo + T)
            causal = col <= seq_lo + t_row
            penalty = jnp.where(same_seq,
                                jnp.where(causal, 0.0, 1000.0),
                                1e9).astype(f32)
        else:
            rowT = lax.broadcasted_iota(jnp.int32, (T, T), 0)
            colT = lax.broadcasted_iota(jnp.int32, (T, T), 1)
            penalty = (colT > rowT).astype(f32) * 1000.0

        # ---- n_layers x Attention (statically unrolled; fine at small L) ----
        for l in range(L):
            h3 = h.reshape(BNt, T, C)
            # causal taps: h1[t]=h[t-1], h2[t]=h[t-2] (Conv1d(k=3,pad=2)+Chomp1d(2))
            h1 = (pltpu.roll(h3, shift=1, axis=1) * keep1).reshape(M, C)
            h2 = (pltpu.roll(h3, shift=2, axis=1) * keep2).reshape(M, C)
            x_cat = jnp.concatenate([h2, h1, h], axis=-1)            # (M, 3C)

            # Fused Q/K/V projection: one matmul, then lane slices.
            qkv = jnp.dot(x_cat, wqkv_ref[l], preferred_element_type=f32)
            q = qkv[:, :H]
            k = qkv[:, H:2 * H]
            v = qkv[:, 2 * H:]

            if use_blockdiag:
                s = jnp.dot(q, k.T, preferred_element_type=f32) - penalty
                s = s - jnp.max(s, axis=-1, keepdims=True)
                p = jnp.exp(s)
                p = p * pl.reciprocal(jnp.sum(p, axis=-1, keepdims=True),
                                      approx=True)
                ao = jnp.dot(p, v, preferred_element_type=f32)        # (M, H)
            else:
                qb = q.reshape(BNt, T, H)
                kb = k.reshape(BNt, T, H)
                vb = v.reshape(BNt, T, H)
                s = jnp.einsum('bqh,bkh->bqk', qb, kb,
                               preferred_element_type=f32) - penalty
                s = s - jnp.max(s, axis=-1, keepdims=True)
                p = jnp.exp(s)
                p = p * pl.reciprocal(jnp.sum(p, axis=-1, keepdims=True),
                                      approx=True)
                ao = jnp.einsum('bqk,bkh->bqh', p, vb,
                                preferred_element_type=f32).reshape(M, H)

            out2d = h + jnp.dot(ao, wo_ref[l], preferred_element_type=f32)
            ffh = jnp.maximum(
                jnp.dot(out2d, wff1_ref[l], preferred_element_type=f32)
                + bff1_ref[l], 0.0)
            ff = jnp.dot(ffh, wff2_ref[l], preferred_element_type=f32) + bff2_ref[l]
            h = out2d + ff

        # ---- out_conv on the last time step only (x[..., -1:]) ----
        last = h.reshape(BNt, T, C)[:, T - 1, :]                     # (BNt, C)
        o_ref[...] = (jnp.dot(last, out_w_ref[...], preferred_element_type=f32)
                      + out_b_ref[...])

    return kernel


# ----------------------------------------------------------------------------
# Transformer forward (training path: returns `out` only)
# ----------------------------------------------------------------------------
def transformer_forward(x_btni, params):
    b, t, n, ic = x_btni.shape
    BN = b * n
    # torch: x.permute(0,3,2,1) -> (b, ic, n, t); internally: (b*n, t, ic)
    x = jnp.transpose(x_btni, (0, 2, 1, 3)).reshape(BN, t, ic)

    C = params["in_w"].shape[1]
    H = C // 2
    layers = params["layers"]
    L = len(layers)
    n_pred = params["out_w"].shape[1]

    # Stack per-layer weights along a leading n_layers axis; fuse Q/K/V into a
    # single (3C, 3H) contraction matrix (wv padded into the last-C rows since
    # x_cat = [x[t-2], x[t-1], x[t]]; tap rows ordered to match x_cat).
    zeros2C = jnp.zeros((2 * C, H), jnp.float32)
    wqkv = jnp.stack([
        jnp.concatenate([lp["wq"].reshape(3 * C, H),
                         lp["wk"].reshape(3 * C, H),
                         jnp.concatenate([zeros2C, lp["wv"]], axis=0)], axis=1)
        for lp in layers])                                            # (L, 3C, 3H)
    wo = jnp.stack([lp["wo"] for lp in layers])
    wff1 = jnp.stack([lp["wff1"] for lp in layers])
    bff1 = jnp.stack([lp["bff1"] for lp in layers])
    wff2 = jnp.stack([lp["wff2"] for lp in layers])
    bff2 = jnp.stack([lp["bff2"] for lp in layers])

    # Lane-dense output: pad out_conv to a 128-wide slab (sliced back below).
    P_pad = max(128, ((n_pred + 127) // 128) * 128)
    out_w = jnp.zeros((C, P_pad), jnp.float32).at[:, :n_pred].set(params["out_w"])
    out_b = jnp.zeros((1, P_pad), jnp.float32).at[:, :n_pred].set(params["out_b"])

    # Grid: single step on 1-TC chips (v5e/v6e); split BN across the two
    # TensorCores only on v7x and only when each core still gets M >= 128 rows.
    bn_block = BN
    n_tc = _tensorcores_per_chip()
    if n_tc >= 2 and BN % n_tc == 0:
        cand = BN // n_tc
        if cand % 8 == 0 and cand * t >= 128:
            bn_block = cand
    grid = (BN // bn_block,)
    use_blockdiag = (bn_block * t) <= _blockdiag_score_cap()

    def rep(shape):  # weight blocks: full array, same block every grid step
        zeros = (0,) * len(shape)
        return pl.BlockSpec(shape, lambda i, _z=zeros: _z)

    out = pl.pallas_call(
        _make_fused_kernel(use_blockdiag),
        out_shape=jax.ShapeDtypeStruct((BN, P_pad), jnp.float32),
        grid_spec=pltpu.PrefetchScalarGridSpec(
            num_scalar_prefetch=0,
            grid=grid,
            in_specs=[
                pl.BlockSpec((bn_block, t, ic), lambda i: (i, 0, 0)),
                rep((ic, C)), rep((1, C)),
                rep((L, 3 * C, 3 * H)), rep((L, H, C)),
                rep((L, C, C)), rep((L, 1, C)), rep((L, C, C)), rep((L, 1, C)),
                rep((C, P_pad)), rep((1, P_pad)),
            ],
            out_specs=pl.BlockSpec((bn_block, P_pad), lambda i: (i, 0)),
        ),
        compiler_params=pltpu.CompilerParams(
            dimension_semantics=("parallel",)),
    )(x, params["in_w"], params["in_b"], wqkv, wo,
      wff1, bff1, wff2, bff2, out_w, out_b)

    out = out[:, :n_pred]
    # back to the PyTorch (b, n_pred, n, 1) output layout
    return jnp.transpose(out.reshape(b, n, n_pred), (0, 2, 1))[..., None]


# ----------------------------------------------------------------------------
# Pure-JAX reference (for verification)
# ----------------------------------------------------------------------------
def ref_attention(x, lp):
    BN, T, C = x.shape
    xp = jnp.pad(x, ((0, 0), (2, 0), (0, 0)))
    q = sum(xp[:, k:k + T, :] @ lp["wq"][k] for k in range(3))
    kk = sum(xp[:, k:k + T, :] @ lp["wk"][k] for k in range(3))
    v = x @ lp["wv"]
    attn = jnp.einsum("bth,bsh->bts", q, kk)
    mask = jnp.triu(jnp.ones((T, T), jnp.float32), k=1)
    attn = jax.nn.softmax(attn - 1000.0 * mask, axis=-1)
    ao = jnp.einsum("bts,bsh->bth", attn, v)
    out = x + ao @ lp["wo"]
    ff = jnp.maximum(out @ lp["wff1"] + lp["bff1"], 0.0) @ lp["wff2"] + lp["bff2"]
    return out + ff


def ref_forward(x_btni, params):
    b, t, n, ic = x_btni.shape
    x = jnp.transpose(x_btni, (0, 2, 1, 3)).reshape(b * n, t, ic)
    h = x @ params["in_w"] + params["in_b"]
    for lp in params["layers"]:
        h = ref_attention(h, lp)
    out = h[:, -1, :] @ params["out_w"] + params["out_b"]
    return jnp.transpose(out.reshape(b, n, -1), (0, 2, 1))[..., None]


# ----------------------------------------------------------------------------
# Deterministic parameter init (shapes follow the torch module's __init__)
# ----------------------------------------------------------------------------
def init_params(key, ic, hidden, n_pred, n_layers):
    keys = jax.random.split(key, 4 + n_layers)

    def u(k, shape, fan_in):
        bound = 1.0 / np.sqrt(fan_in)
        return jax.random.uniform(k, shape, jnp.float32, -bound, bound)

    C, H = hidden, hidden // 2
    params = {
        "in_w": u(keys[0], (ic, hidden), ic),           # Conv2d(ic, hidden, 1).weight^T
        "in_b": u(keys[1], (1, hidden), ic),
        "out_w": u(keys[2], (hidden, n_pred), hidden),  # Conv2d(hidden, n_pred, 1).weight^T
        "out_b": u(keys[3], (1, n_pred), hidden),
        "layers": [],
    }
    for i in range(n_layers):
        lk = jax.random.split(keys[4 + i], 8)
        params["layers"].append({
            "wq": u(lk[0], (3, C, H), 3 * C),   # Conv1d(C, H, 3).weight, per-tap transposed
            "wk": u(lk[1], (3, C, H), 3 * C),
            "wv": u(lk[2], (C, H), C),          # Conv1d(C, H, 1)
            "wo": u(lk[3], (H, C), H),          # Conv1d(H, C, 1)
            "wff1": u(lk[4], (C, C), C),
            "bff1": u(lk[5], (1, C), C),
            "wff2": u(lk[6], (C, C), C),
            "bff2": u(lk[7], (1, C), C),
        })
    return params


if __name__ == "__main__":
    # small shapes: batch=2, n_his(t)=8, num_nodes(n)=8, in_channels=2,
    # hidden_channels=32, n_pred=3, n_layers=2, st1=st2=False
    b, t, n, ic = 2, 8, 8, 2
    hidden, n_pred, n_layers = 32, 3, 2

    key = jax.random.PRNGKey(0)
    kx, kp = jax.random.split(key)
    x = jax.random.normal(kx, (b, t, n, ic), jnp.float32)
    params = init_params(kp, ic, hidden, n_pred, n_layers)

    fwd = jax.jit(transformer_forward)
    out = jax.block_until_ready(fwd(x, params))

    ref = ref_forward(x, params)
    np.testing.assert_allclose(np.asarray(out), np.asarray(ref),
                               rtol=5e-3, atol=5e-3)
    assert out.shape == (b, n_pred, n, 1)
    print("KERNEL_OK")
</pallas_src>

<mosaic_0001>
module attributes {stable_mosaic.version = 11 : i64} {
  func.func @kernel(%arg0: i32, %arg1: memref<16x8x2xf32, #tpu.memory_space<vmem>>, %arg2: memref<2x32xf32, #tpu.memory_space<vmem>>, %arg3: memref<1x32xf32, #tpu.memory_space<vmem>>, %arg4: memref<2x96x48xf32, #tpu.memory_space<vmem>>, %arg5: memref<2x16x32xf32, #tpu.memory_space<vmem>>, %arg6: memref<2x32x32xf32, #tpu.memory_space<vmem>>, %arg7: memref<2x1x32xf32, #tpu.memory_space<vmem>>, %arg8: memref<2x32x32xf32, #tpu.memory_space<vmem>>, %arg9: memref<2x1x32xf32, #tpu.memory_space<vmem>>, %arg10: memref<32x128xf32, #tpu.memory_space<vmem>>, %arg11: memref<1x128xf32, #tpu.memory_space<vmem>>, %arg12: memref<16x128xf32, #tpu.memory_space<vmem>>) attributes {dimension_semantics = [#tpu.dimension_semantics<parallel>], iteration_bounds = array<i64: 1>, scalar_prefetch = 0 : i64, scratch_operands = 0 : i64, tpu.core_type = #tpu.core_type<tc>, window_params = [{transform_indices = @transform_0, window_bounds = array<i64: 16, 8, 2>}, {pipeline_mode = #tpu.pipeline_mode<synchronous>, transform_indices = @transform_1, window_bounds = array<i64: 2, 32>}, {pipeline_mode = #tpu.pipeline_mode<synchronous>, transform_indices = @transform_2, window_bounds = array<i64: 1, 32>}, {pipeline_mode = #tpu.pipeline_mode<synchronous>, transform_indices = @transform_3, window_bounds = array<i64: 2, 96, 48>}, {pipeline_mode = #tpu.pipeline_mode<synchronous>, transform_indices = @transform_4, window_bounds = array<i64: 2, 16, 32>}, {pipeline_mode = #tpu.pipeline_mode<synchronous>, transform_indices = @transform_5, window_bounds = array<i64: 2, 32, 32>}, {pipeline_mode = #tpu.pipeline_mode<synchronous>, transform_indices = @transform_6, window_bounds = array<i64: 2, 1, 32>}, {pipeline_mode = #tpu.pipeline_mode<synchronous>, transform_indices = @transform_7, window_bounds = array<i64: 2, 32, 32>}, {pipeline_mode = #tpu.pipeline_mode<synchronous>, transform_indices = @transform_8, window_bounds = array<i64: 2, 1, 32>}, {pipeline_mode = #tpu.pipeline_mode<synchronous>, transform_indices = @transform_9, window_bounds = array<i64: 32, 128>}, {pipeline_mode = #tpu.pipeline_mode<synchronous>, transform_indices = @transform_10, window_bounds = array<i64: 1, 128>}, {transform_indices = @transform_11, window_bounds = array<i64: 16, 128>}]} {
    %c0 = arith.constant 0 : index
    %c0_0 = arith.constant 0 : index
    %c0_1 = arith.constant 0 : index
    %0 = vector.load %arg1[%c0, %c0_0, %c0_1] : memref<16x8x2xf32, #tpu.memory_space<vmem>>, vector<16x8x2xf32>
    %1 = vector.shape_cast %0 : vector<16x8x2xf32> to vector<128x2xf32>
    %c0_2 = arith.constant 0 : index
    %c0_3 = arith.constant 0 : index
    %2 = vector.load %arg2[%c0_2, %c0_3] : memref<2x32xf32, #tpu.memory_space<vmem>>, vector<2x32xf32>
    %cst = arith.constant dense<0.000000e+00> : vector<128x32xf32>
    %3 = tpu.matmul %1, %2, %cst {dimension_numbers = #tpu.dot_dimension_numbers<[1], [0], [0], [1], [0, 0, 1, 1], [], []>} : vector<128x2xf32>, vector<2x32xf32>, vector<128x32xf32> -> vector<128x32xf32>
    %c0_4 = arith.constant 0 : index
    %c0_5 = arith.constant 0 : index
    %4 = vector.load %arg3[%c0_4, %c0_5] : memref<1x32xf32, #tpu.memory_space<vmem>>, vector<1x32xf32>
    %5 = vector.broadcast %4 : vector<1x32xf32> to vector<128x32xf32>
    %6 = arith.addf %3, %5 : vector<128x32xf32>
    %7 = tpu.iota {dimensions = array<i32: 1>} : vector<16x8x32xi32>
    %c1_i32 = arith.constant 1 : i32
    %8 = vector.broadcast %c1_i32 : i32 to vector<16x8x32xi32>
    %9 = arith.cmpi sge, %7, %8 : vector<16x8x32xi32>
    %10 = arith.extui %9 : vector<16x8x32xi1> to vector<16x8x32xi32>
    %11 = arith.sitofp %10 : vector<16x8x32xi32> to vector<16x8x32xf32>
    %c2_i32 = arith.constant 2 : i32
    %12 = vector.broadcast %c2_i32 : i32 to vector<16x8x32xi32>
    %13 = arith.cmpi sge, %7, %12 : vector<16x8x32xi32>
    %14 = arith.extui %13 : vector<16x8x32xi1> to vector<16x8x32xi32>
    %15 = arith.sitofp %14 : vector<16x8x32xi32> to vector<16x8x32xf32>
    %16 = tpu.iota {dimensions = array<i32: 0>} : vector<16x8x128xi32>
    %17 = vector.shape_cast %16 : vector<16x8x128xi32> to vector<128x128xi32>
    %18 = tpu.iota {dimensions = array<i32: 1>} : vector<16x8x128xi32>
    %19 = vector.shape_cast %18 : vector<16x8x128xi32> to vector<128x128xi32>
    %20 = tpu.iota {dimensions = array<i32: 1>} : vector<128x128xi32>
    %c8_i32 = arith.constant 8 : i32
    %21 = vector.broadcast %c8_i32 : i32 to vector<128x128xi32>
    %22 = arith.muli %17, %21 : vector<128x128xi32>
    %23 = arith.cmpi sge, %20, %22 : vector<128x128xi32>
    %c8_i32_6 = arith.constant 8 : i32
    %24 = vector.broadcast %c8_i32_6 : i32 to vector<128x128xi32>
    %25 = arith.addi %22, %24 : vector<128x128xi32>
    %26 = arith.cmpi slt, %20, %25 : vector<128x128xi32>
    %27 = arith.andi %23, %26 : vector<128x128xi1>
    %28 = arith.addi %22, %19 : vector<128x128xi32>
    %29 = arith.cmpi sle, %20, %28 : vector<128x128xi32>
    %cst_7 = arith.constant 0.000000e+00 : f32
    %cst_8 = arith.constant 1.000000e+03 : f32
    %30 = vector.broadcast %cst_7 : f32 to vector<128x128xf32>
    %31 = vector.broadcast %cst_8 : f32 to vector<128x128xf32>
    %32 = arith.select %29, %30, %31 : vector<128x128xi1>, vector<128x128xf32>
    %cst_9 = arith.constant 1.000000e+09 : f32
    %33 = vector.broadcast %cst_9 : f32 to vector<128x128xf32>
    %34 = arith.select %27, %32, %33 : vector<128x128xi1>, vector<128x128xf32>
    %35 = vector.shape_cast %6 : vector<128x32xf32> to vector<16x8x32xf32>
    %c1_i32_10 = arith.constant 1 : i32
    %36 = tpu.dynamic_rotate %35 by %c1_i32_10 dim 1 : vector<16x8x32xf32>, i32 -> vector<16x8x32xf32>
    %37 = arith.mulf %36, %11 : vector<16x8x32xf32>
    %38 = vector.shape_cast %37 : vector<16x8x32xf32> to vector<128x32xf32>
    %c2_i32_11 = arith.constant 2 : i32
    %39 = tpu.dynamic_rotate %35 by %c2_i32_11 dim 1 : vector<16x8x32xf32>, i32 -> vector<16x8x32xf32>
    %40 = arith.mulf %39, %15 : vector<16x8x32xf32>
    %41 = vector.shape_cast %40 : vector<16x8x32xf32> to vector<128x32xf32>
    %42 = tpu.concatenate %41, %38, %6 in 1 : vector<128x32xf32>, vector<128x32xf32>, vector<128x32xf32> -> vector<128x96xf32>
    %c0_12 = arith.constant 0 : index
    %c0_13 = arith.constant 0 : index
    %c0_14 = arith.constant 0 : index
    %43 = vector.load %arg4[%c0_12, %c0_13, %c0_14] : memref<2x96x48xf32, #tpu.memory_space<vmem>>, vector<1x96x48xf32>
    %44 = vector.shape_cast %43 : vector<1x96x48xf32> to vector<96x48xf32>
    %cst_15 = arith.constant dense<0.000000e+00> : vector<128x48xf32>
    %45 = tpu.matmul %42, %44, %cst_15 {dimension_numbers = #tpu.dot_dimension_numbers<[1], [0], [0], [1], [0, 0, 1, 1], [], []>} : vector<128x96xf32>, vector<96x48xf32>, vector<128x48xf32> -> vector<128x48xf32>
    %46 = vector.extract_strided_slice %45 {offsets = [0, 0], sizes = [128, 16], strides = [1, 1]} : vector<128x48xf32> to vector<128x16xf32>
    %47 = vector.extract_strided_slice %45 {offsets = [0, 16], sizes = [128, 16], strides = [1, 1]} : vector<128x48xf32> to vector<128x16xf32>
    %48 = vector.extract_strided_slice %45 {offsets = [0, 32], sizes = [128, 16], strides = [1, 1]} : vector<128x48xf32> to vector<128x16xf32>
    %49 = tpu.transpose %47, [1, 0] : vector<128x16xf32> -> vector<16x128xf32>
    %cst_16 = arith.constant dense<0.000000e+00> : vector<128x128xf32>
    %50 = tpu.matmul %46, %49, %cst_16 {dimension_numbers = #tpu.dot_dimension_numbers<[1], [0], [0], [1], [0, 0, 1, 1], [], []>} : vector<128x16xf32>, vector<16x128xf32>, vector<128x128xf32> -> vector<128x128xf32>
    %51 = arith.subf %50, %34 : vector<128x128xf32>
    %cst_17 = arith.constant dense<0xFF800000> : vector<128xf32>
    %52 = vector.multi_reduction <maximumf>, %51, %cst_17 [1] : vector<128x128xf32> to vector<128xf32>
    %53 = vector.shape_cast %52 : vector<128xf32> to vector<128x1xf32>
    %54 = vector.broadcast %53 : vector<128x1xf32> to vector<128x128xf32>
    %55 = arith.subf %51, %54 : vector<128x128xf32>
    %56 = math.exp %55 : vector<128x128xf32>
    %cst_18 = arith.constant dense<0.000000e+00> : vector<128xf32>
    %57 = vector.multi_reduction <add>, %56, %cst_18 [1] : vector<128x128xf32> to vector<128xf32>
    %58 = vector.shape_cast %57 : vector<128xf32> to vector<128x1xf32>
    %59 = tpu.reciprocal %58 {approx = true} : vector<128x1xf32> -> vector<128x1xf32>
    %60 = vector.broadcast %59 : vector<128x1xf32> to vector<128x128xf32>
    %61 = arith.mulf %56, %60 : vector<128x128xf32>
    %cst_19 = arith.constant dense<0.000000e+00> : vector<128x16xf32>
    %62 = tpu.matmul %61, %48, %cst_19 {dimension_numbers = #tpu.dot_dimension_numbers<[1], [0], [0], [1], [0, 0, 1, 1], [], []>} : vector<128x128xf32>, vector<128x16xf32>, vector<128x16xf32> -> vector<128x16xf32>
    %c0_20 = arith.constant 0 : index
    %c0_21 = arith.constant 0 : index
    %c0_22 = arith.constant 0 : index
    %63 = vector.load %arg5[%c0_20, %c0_21, %c0_22] : memref<2x16x32xf32, #tpu.memory_space<vmem>>, vector<1x16x32xf32>
    %64 = vector.shape_cast %63 : vector<1x16x32xf32> to vector<16x32xf32>
    %cst_23 = arith.constant dense<0.000000e+00> : vector<128x32xf32>
    %65 = tpu.matmul %62, %64, %cst_23 {dimension_numbers = #tpu.dot_dimension_numbers<[1], [0], [0], [1], [0, 0, 1, 1], [], []>} : vector<128x16xf32>, vector<16x32xf32>, vector<128x32xf32> -> vector<128x32xf32>
    %66 = arith.addf %6, %65 : vector<128x32xf32>
    %c0_24 = arith.constant 0 : index
    %c0_25 = arith.constant 0 : index
    %c0_26 = arith.constant 0 : index
    %67 = vector.load %arg6[%c0_24, %c0_25, %c0_26] : memref<2x32x32xf32, #tpu.memory_space<vmem>>, vector<1x32x32xf32>
    %68 = vector.shape_cast %67 : vector<1x32x32xf32> to vector<32x32xf32>
    %cst_27 = arith.constant dense<0.000000e+00> : vector<128x32xf32>
    %69 = tpu.matmul %66, %68, %cst_27 {dimension_numbers = #tpu.dot_dimension_numbers<[1], [0], [0], [1], [0, 0, 1, 1], [], []>} : vector<128x32xf32>, vector<32x32xf32>, vector<128x32xf32> -> vector<128x32xf32>
    %c0_28 = arith.constant 0 : index
    %c0_29 = arith.constant 0 : index
    %c0_30 = arith.constant 0 : index
    %70 = vector.load %arg7[%c0_28, %c0_29, %c0_30] : memref<2x1x32xf32, #tpu.memory_space<vmem>>, vector<1x1x32xf32>
    %71 = vector.shape_cast %70 : vector<1x1x32xf32> to vector<1x32xf32>
    %72 = vector.broadcast %71 : vector<1x32xf32> to vector<128x32xf32>
    %73 = arith.addf %69, %72 : vector<128x32xf32>
    %cst_31 = arith.constant 0.000000e+00 : f32
    %74 = vector.broadcast %cst_31 : f32 to vector<128x32xf32>
    %75 = arith.maximumf %73, %74 : vector<128x32xf32>
    %c0_32 = arith.constant 0 : index
    %c0_33 = arith.constant 0 : index
    %c0_34 = arith.constant 0 : index
    %76 = vector.load %arg8[%c0_32, %c0_33, %c0_34] : memref<2x32x32xf32, #tpu.memory_space<vmem>>, vector<1x32x32xf32>
    %77 = vector.shape_cast %76 : vector<1x32x32xf32> to vector<32x32xf32>
    %cst_35 = arith.constant dense<0.000000e+00> : vector<128x32xf32>
    %78 = tpu.matmul %75, %77, %cst_35 {dimension_numbers = #tpu.dot_dimension_numbers<[1], [0], [0], [1], [0, 0, 1, 1], [], []>} : vector<128x32xf32>, vector<32x32xf32>, vector<128x32xf32> -> vector<128x32xf32>
    %c0_36 = arith.constant 0 : index
    %c0_37 = arith.constant 0 : index
    %c0_38 = arith.constant 0 : index
    %79 = vector.load %arg9[%c0_36, %c0_37, %c0_38] : memref<2x1x32xf32, #tpu.memory_space<vmem>>, vector<1x1x32xf32>
    %80 = vector.shape_cast %79 : vector<1x1x32xf32> to vector<1x32xf32>
    %81 = vector.broadcast %80 : vector<1x32xf32> to vector<128x32xf32>
    %82 = arith.addf %78, %81 : vector<128x32xf32>
    %83 = arith.addf %66, %82 : vector<128x32xf32>
    %84 = vector.shape_cast %83 : vector<128x32xf32> to vector<16x8x32xf32>
    %c1_i32_39 = arith.constant 1 : i32
    %85 = tpu.dynamic_rotate %84 by %c1_i32_39 dim 1 : vector<16x8x32xf32>, i32 -> vector<16x8x32xf32>
    %86 = arith.mulf %85, %11 : vector<16x8x32xf32>
    %87 = vector.shape_cast %86 : vector<16x8x32xf32> to vector<128x32xf32>
    %c2_i32_40 = arith.constant 2 : i32
    %88 = tpu.dynamic_rotate %84 by %c2_i32_40 dim 1 : vector<16x8x32xf32>, i32 -> vector<16x8x32xf32>
    %89 = arith.mulf %88, %15 : vector<16x8x32xf32>
    %90 = vector.shape_cast %89 : vector<16x8x32xf32> to vector<128x32xf32>
    %91 = tpu.concatenate %90, %87, %83 in 1 : vector<128x32xf32>, vector<128x32xf32>, vector<128x32xf32> -> vector<128x96xf32>
    %c1 = arith.constant 1 : index
    %c0_41 = arith.constant 0 : index
    %c0_42 = arith.constant 0 : index
    %92 = vector.load %arg4[%c1, %c0_41, %c0_42] : memref<2x96x48xf32, #tpu.memory_space<vmem>>, vector<1x96x48xf32>
    %93 = vector.shape_cast %92 : vector<1x96x48xf32> to vector<96x48xf32>
    %cst_43 = arith.constant dense<0.000000e+00> : vector<128x48xf32>
    %94 = tpu.matmul %91, %93, %cst_43 {dimension_numbers = #tpu.dot_dimension_numbers<[1], [0], [0], [1], [0, 0, 1, 1], [], []>} : vector<128x96xf32>, vector<96x48xf32>, vector<128x48xf32> -> vector<128x48xf32>
    %95 = vector.extract_strided_slice %94 {offsets = [0, 0], sizes = [128, 16], strides = [1, 1]} : vector<128x48xf32> to vector<128x16xf32>
    %96 = vector.extract_strided_slice %94 {offsets = [0, 16], sizes = [128, 16], strides = [1, 1]} : vector<128x48xf32> to vector<128x16xf32>
    %97 = vector.extract_strided_slice %94 {offsets = [0, 32], sizes = [128, 16], strides = [1, 1]} : vector<128x48xf32> to vector<128x16xf32>
    %98 = tpu.transpose %96, [1, 0] : vector<128x16xf32> -> vector<16x128xf32>
    %cst_44 = arith.constant dense<0.000000e+00> : vector<128x128xf32>
    %99 = tpu.matmul %95, %98, %cst_44 {dimension_numbers = #tpu.dot_dimension_numbers<[1], [0], [0], [1], [0, 0, 1, 1], [], []>} : vector<128x16xf32>, vector<16x128xf32>, vector<128x128xf32> -> vector<128x128xf32>
    %100 = arith.subf %99, %34 : vector<128x128xf32>
    %cst_45 = arith.constant dense<0xFF800000> : vector<128xf32>
    %101 = vector.multi_reduction <maximumf>, %100, %cst_45 [1] : vector<128x128xf32> to vector<128xf32>
    %102 = vector.shape_cast %101 : vector<128xf32> to vector<128x1xf32>
    %103 = vector.broadcast %102 : vector<128x1xf32> to vector<128x128xf32>
    %104 = arith.subf %100, %103 : vector<128x128xf32>
    %105 = math.exp %104 : vector<128x128xf32>
    %cst_46 = arith.constant dense<0.000000e+00> : vector<128xf32>
    %106 = vector.multi_reduction <add>, %105, %cst_46 [1] : vector<128x128xf32> to vector<128xf32>
    %107 = vector.shape_cast %106 : vector<128xf32> to vector<128x1xf32>
    %108 = tpu.reciprocal %107 {approx = true} : vector<128x1xf32> -> vector<128x1xf32>
    %109 = vector.broadcast %108 : vector<128x1xf32> to vector<128x128xf32>
    %110 = arith.mulf %105, %109 : vector<128x128xf32>
    %cst_47 = arith.constant dense<0.000000e+00> : vector<128x16xf32>
    %111 = tpu.matmul %110, %97, %cst_47 {dimension_numbers = #tpu.dot_dimension_numbers<[1], [0], [0], [1], [0, 0, 1, 1], [], []>} : vector<128x128xf32>, vector<128x16xf32>, vector<128x16xf32> -> vector<128x16xf32>
    %c1_48 = arith.constant 1 : index
    %c0_49 = arith.constant 0 : index
    %c0_50 = arith.constant 0 : index
    %112 = vector.load %arg5[%c1_48, %c0_49, %c0_50] : memref<2x16x32xf32, #tpu.memory_space<vmem>>, vector<1x16x32xf32>
    %113 = vector.shape_cast %112 : vector<1x16x32xf32> to vector<16x32xf32>
    %cst_51 = arith.constant dense<0.000000e+00> : vector<128x32xf32>
    %114 = tpu.matmul %111, %113, %cst_51 {dimension_numbers = #tpu.dot_dimension_numbers<[1], [0], [0], [1], [0, 0, 1, 1], [], []>} : vector<128x16xf32>, vector<16x32xf32>, vector<128x32xf32> -> vector<128x32xf32>
    %115 = arith.addf %83, %114 : vector<128x32xf32>
    %c1_52 = arith.constant 1 : index
    %c0_53 = arith.constant 0 : index
    %c0_54 = arith.constant 0 : index
    %116 = vector.load %arg6[%c1_52, %c0_53, %c0_54] : memref<2x32x32xf32, #tpu.memory_space<vmem>>, vector<1x32x32xf32>
    %117 = vector.shape_cast %116 : vector<1x32x32xf32> to vector<32x32xf32>
    %cst_55 = arith.constant dense<0.000000e+00> : vector<128x32xf32>
    %118 = tpu.matmul %115, %117, %cst_55 {dimension_numbers = #tpu.dot_dimension_numbers<[1], [0], [0], [1], [0, 0, 1, 1], [], []>} : vector<128x32xf32>, vector<32x32xf32>, vector<128x32xf32> -> vector<128x32xf32>
    %c1_56 = arith.constant 1 : index
    %c0_57 = arith.constant 0 : index
    %c0_58 = arith.constant 0 : index
    %119 = vector.load %arg7[%c1_56, %c0_57, %c0_58] : memref<2x1x32xf32, #tpu.memory_space<vmem>>, vector<1x1x32xf32>
    %120 = vector.shape_cast %119 : vector<1x1x32xf32> to vector<1x32xf32>
    %121 = vector.broadcast %120 : vector<1x32xf32> to vector<128x32xf32>
    %122 = arith.addf %118, %121 : vector<128x32xf32>
    %cst_59 = arith.constant 0.000000e+00 : f32
    %123 = vector.broadcast %cst_59 : f32 to vector<128x32xf32>
    %124 = arith.maximumf %122, %123 : vector<128x32xf32>
    %c1_60 = arith.constant 1 : index
    %c0_61 = arith.constant 0 : index
    %c0_62 = arith.constant 0 : index
    %125 = vector.load %arg8[%c1_60, %c0_61, %c0_62] : memref<2x32x32xf32, #tpu.memory_space<vmem>>, vector<1x32x32xf32>
    %126 = vector.shape_cast %125 : vector<1x32x32xf32> to vector<32x32xf32>
    %cst_63 = arith.constant dense<0.000000e+00> : vector<128x32xf32>
    %127 = tpu.matmul %124, %126, %cst_63 {dimension_numbers = #tpu.dot_dimension_numbers<[1], [0], [0], [1], [0, 0, 1, 1], [], []>} : vector<128x32xf32>, vector<32x32xf32>, vector<128x32xf32> -> vector<128x32xf32>
    %c1_64 = arith.constant 1 : index
    %c0_65 = arith.constant 0 : index
    %c0_66 = arith.constant 0 : index
    %128 = vector.load %arg9[%c1_64, %c0_65, %c0_66] : memref<2x1x32xf32, #tpu.memory_space<vmem>>, vector<1x1x32xf32>
    %129 = vector.shape_cast %128 : vector<1x1x32xf32> to vector<1x32xf32>
    %130 = vector.broadcast %129 : vector<1x32xf32> to vector<128x32xf32>
    %131 = arith.addf %127, %130 : vector<128x32xf32>
    %132 = arith.addf %115, %131 : vector<128x32xf32>
    %133 = vector.shape_cast %132 : vector<128x32xf32> to vector<16x8x32xf32>
    %134 = vector.extract_strided_slice %133 {offsets = [0, 7, 0], sizes = [16, 1, 32], strides = [1, 1, 1]} : vector<16x8x32xf32> to vector<16x1x32xf32>
    %135 = vector.shape_cast %134 : vector<16x1x32xf32> to vector<16x32xf32>
    %c0_67 = arith.constant 0 : index
    %c0_68 = arith.constant 0 : index
    %136 = vector.load %arg10[%c0_67, %c0_68] : memref<32x128xf32, #tpu.memory_space<vmem>>, vector<32x128xf32>
    %cst_69 = arith.constant dense<0.000000e+00> : vector<16x128xf32>
    %137 = tpu.matmul %135, %136, %cst_69 {dimension_numbers = #tpu.dot_dimension_numbers<[1], [0], [0], [1], [0, 0, 1, 1], [], []>} : vector<16x32xf32>, vector<32x128xf32>, vector<16x128xf32> -> vector<16x128xf32>
    %c0_70 = arith.constant 0 : index
    %c0_71 = arith.constant 0 : index
    %138 = vector.load %arg11[%c0_70, %c0_71] : memref<1x128xf32, #tpu.memory_space<vmem>>, vector<1x128xf32>
    %139 = vector.broadcast %138 : vector<1x128xf32> to vector<16x128xf32>
    %140 = arith.addf %137, %139 : vector<16x128xf32>
    %c0_72 = arith.constant 0 : index
    %c0_73 = arith.constant 0 : index
    %141 = vector.load %arg12[%c0_72, %c0_73] : memref<16x128xf32, #tpu.memory_space<vmem>>, vector<16x128xf32>
    tpu.vector_store %arg12[%c0_72, %c0_73], %140 {strides = array<i32>} : memref<16x128xf32, #tpu.memory_space<vmem>>, vector<16x128xf32>,
    return
  }
  func.func @transform_0(%arg0: i32) -> (i32, i32, i32) {
    %c0_i32 = arith.constant 0 : i32
    %c0_i32_0 = arith.constant 0 : i32
    %c0_i32_1 = arith.constant 0 : i32
    return %arg0, %c0_i32, %c0_i32_0 : i32, i32, i32
  }
  func.func @transform_1(%arg0: i32) -> (i32, i32) {
    %c0_i32 = arith.constant 0 : i32
    %c0_i32_0 = arith.constant 0 : i32
    %c0_i32_1 = arith.constant 0 : i32
    return %c0_i32, %c0_i32_0 : i32, i32
  }
  func.func @transform_2(%arg0: i32) -> (i32, i32) {
    %c0_i32 = arith.constant 0 : i32
    %c0_i32_0 = arith.constant 0 : i32
    %c0_i32_1 = arith.constant 0 : i32
    return %c0_i32, %c0_i32_0 : i32, i32
  }
  func.func @transform_3(%arg0: i32) -> (i32, i32, i32) {
    %c0_i32 = arith.constant 0 : i32
    %c0_i32_0 = arith.constant 0 : i32
    %c0_i32_1 = arith.constant 0 : i32
    %c0_i32_2 = arith.constant 0 : i32
    return %c0_i32, %c0_i32_0, %c0_i32_1 : i32, i32, i32
  }
  func.func @transform_4(%arg0: i32) -> (i32, i32, i32) {
    %c0_i32 = arith.constant 0 : i32
    %c0_i32_0 = arith.constant 0 : i32
    %c0_i32_1 = arith.constant 0 : i32
    %c0_i32_2 = arith.constant 0 : i32
    return %c0_i32, %c0_i32_0, %c0_i32_1 : i32, i32, i32
  }
  func.func @transform_5(%arg0: i32) -> (i32, i32, i32) {
    %c0_i32 = arith.constant 0 : i32
    %c0_i32_0 = arith.constant 0 : i32
    %c0_i32_1 = arith.constant 0 : i32
    %c0_i32_2 = arith.constant 0 : i32
    return %c0_i32, %c0_i32_0, %c0_i32_1 : i32, i32, i32
  }
  func.func @transform_6(%arg0: i32) -> (i32, i32, i32) {
    %c0_i32 = arith.constant 0 : i32
    %c0_i32_0 = arith.constant 0 : i32
    %c0_i32_1 = arith.constant 0 : i32
    %c0_i32_2 = arith.constant 0 : i32
    return %c0_i32, %c0_i32_0, %c0_i32_1 : i32, i32, i32
  }
  func.func @transform_7(%arg0: i32) -> (i32, i32, i32) {
    %c0_i32 = arith.constant 0 : i32
    %c0_i32_0 = arith.constant 0 : i32
    %c0_i32_1 = arith.constant 0 : i32
    %c0_i32_2 = arith.constant 0 : i32
    return %c0_i32, %c0_i32_0, %c0_i32_1 : i32, i32, i32
  }
  func.func @transform_8(%arg0: i32) -> (i32, i32, i32) {
    %c0_i32 = arith.constant 0 : i32
    %c0_i32_0 = arith.constant 0 : i32
    %c0_i32_1 = arith.constant 0 : i32
    %c0_i32_2 = arith.constant 0 : i32
    return %c0_i32, %c0_i32_0, %c0_i32_1 : i32, i32, i32
  }
  func.func @transform_9(%arg0: i32) -> (i32, i32) {
    %c0_i32 = arith.constant 0 : i32
    %c0_i32_0 = arith.constant 0 : i32
    %c0_i32_1 = arith.constant 0 : i32
    return %c0_i32, %c0_i32_0 : i32, i32
  }
  func.func @transform_10(%arg0: i32) -> (i32, i32) {
    %c0_i32 = arith.constant 0 : i32
    %c0_i32_0 = arith.constant 0 : i32
    %c0_i32_1 = arith.constant 0 : i32
    return %c0_i32, %c0_i32_0 : i32, i32
  }
  func.func @transform_11(%arg0: i32) -> (i32, i32) {
    %c0_i32 = arith.constant 0 : i32
    %c0_i32_0 = arith.constant 0 : i32
    return %arg0, %c0_i32 : i32, i32
  }
}

</mosaic_0001>

<llo_original>
// kernel: transformer_forward.1
$region0: #{transformer_forward.1}
  #allocation0 [shape = 'u32[]', space=smem, size = 0x4, offset = 0x4, fixed_abs, tag = 'smem constant byte address 0x4 - core index']
  #allocation1 [shape = 'u32[144,128]{1,0:T(1,128)}', space=vmem, size = 0x12000, scoped, tag = 'internal scratch']
  %s0 = inlined_call_operand.vmem [shape: f32[16,8,2], index: 0, kind: input, shape index: {}]
  %s1 = inlined_call_operand.vmem [shape: f32[2,32], index: 1, kind: input, shape index: {}]
  %s2 = inlined_call_operand.vmem [shape: f32[1,32], index: 2, kind: input, shape index: {}]
  %s3 = inlined_call_operand.vmem [shape: f32[2,96,48], index: 3, kind: input, shape index: {}]
  %s4 = inlined_call_operand.vmem [shape: f32[2,16,32], index: 4, kind: input, shape index: {}]
  %s5 = inlined_call_operand.vmem [shape: f32[2,32,32], index: 5, kind: input, shape index: {}]
  %s6 = inlined_call_operand.vmem [shape: f32[2,1,32], index: 6, kind: input, shape index: {}]
  %s7 = inlined_call_operand.vmem [shape: f32[2,32,32], index: 7, kind: input, shape index: {}]
  %s8 = inlined_call_operand.vmem [shape: f32[2,1,32], index: 8, kind: input, shape index: {}]
  %s9 = inlined_call_operand.vmem [shape: f32[32,128], index: 9, kind: input, shape index: {}]
  %s10 = inlined_call_operand.vmem [shape: f32[1,128], index: 10, kind: input, shape index: {}]
  %s11 = inlined_call_operand.vmem [shape: f32[16,128], index: 11, kind: output, shape index: {}]
  %s12 = sld [smem:[#allocation0]]
  $region54: #{transformer_forward.1} parent=0
    _
  %s14 = ssub.s32 1, %s12
  %s15 = scalar_select 0, %s14, %s12
  // Predicated region
  $region2: #{transformer_forward.1} parent=0 // pred_check
    _
  $region3: #{transformer_forward.1} parent=0 // pred_check_branch
    %17 = sbr.rel (0) target = $region5
  $region4: #{transformer_forward.1} parent=0 // pred_region
    _
  $region5: #{transformer_forward.1} parent=0 // pred_fallthru
    _
  // Predicated region
  $region6: #{transformer_forward.1} parent=0 // pred_check
    _
  $region7: #{transformer_forward.1} parent=0 // pred_check_branch
    %19 = sbr.rel (0) target = $region9
  $region8: #{transformer_forward.1} parent=0 // pred_region
    _
  $region9: #{transformer_forward.1} parent=0 // pred_fallthru
    _
  // Predicated region
  $region10: #{transformer_forward.1} parent=0 // pred_check
    _
  $region11: #{transformer_forward.1} parent=0 // pred_check_branch
    %21 = sbr.rel (0) target = $region13
  $region12: #{transformer_forward.1} parent=0 // pred_region
    _
  $region13: #{transformer_forward.1} parent=0 // pred_fallthru
    _
  // Predicated region
  $region14: #{transformer_forward.1} parent=0 // pred_check
    _
  $region15: #{transformer_forward.1} parent=0 // pred_check_branch
    %23 = sbr.rel (0) target = $region17
  $region16: #{transformer_forward.1} parent=0 // pred_region
    _
  $region17: #{transformer_forward.1} parent=0 // pred_fallthru
    _
  // Predicated region
  $region18: #{transformer_forward.1} parent=0 // pred_check
    _
  $region19: #{transformer_forward.1} parent=0 // pred_check_branch
    %25 = sbr.rel (0) target = $region21
  $region20: #{transformer_forward.1} parent=0 // pred_region
    _
  $region21: #{transformer_forward.1} parent=0 // pred_fallthru
    _
  // Predicated region
  $region22: #{transformer_forward.1} parent=0 // pred_check
    _
  $region23: #{transformer_forward.1} parent=0 // pred_check_branch
    %27 = sbr.rel (0) target = $region25
  $region24: #{transformer_forward.1} parent=0 // pred_region
    _
  $region25: #{transformer_forward.1} parent=0 // pred_fallthru
    _
  // Predicated region
  $region26: #{transformer_forward.1} parent=0 // pred_check
    _
  $region27: #{transformer_forward.1} parent=0 // pred_check_branch
    %29 = sbr.rel (0) target = $region29
  $region28: #{transformer_forward.1} parent=0 // pred_region
    _
  $region29: #{transformer_forward.1} parent=0 // pred_fallthru
    _
  // Predicated region
  $region30: #{transformer_forward.1} parent=0 // pred_check
    _
  $region31: #{transformer_forward.1} parent=0 // pred_check_branch
    %31 = sbr.rel (0) target = $region33
  $region32: #{transformer_forward.1} parent=0 // pred_region
    _
  $region33: #{transformer_forward.1} parent=0 // pred_fallthru
    _
  // Predicated region
  $region34: #{transformer_forward.1} parent=0 // pred_check
    _
  $region35: #{transformer_forward.1} parent=0 // pred_check_branch
    %33 = sbr.rel (0) target = $region37
  $region36: #{transformer_forward.1} parent=0 // pred_region
    _
  $region37: #{transformer_forward.1} parent=0 // pred_fallthru
    _
  // Predicated region
  $region38: #{transformer_forward.1} parent=0 // pred_check
    _
  $region39: #{transformer_forward.1} parent=0 // pred_check_branch
    %35 = sbr.rel (0) target = $region41
  $region40: #{transformer_forward.1} parent=0 // pred_region
    _
  $region41: #{transformer_forward.1} parent=0 // pred_fallthru
    _
  // Predicated region
  $region42: #{transformer_forward.1} parent=0 // pred_check
    _
  $region43: #{transformer_forward.1} parent=0 // pred_check_branch
    %37 = sbr.rel (0) target = $region45
  $region44: #{transformer_forward.1} parent=0 // pred_region
    _
  $region45: #{transformer_forward.1} parent=0 // pred_fallthru
    _
  %v38 = vld [vmem:[%s0] sm:$0xff]
  %v39 = vld [vmem:[%s0 + $0x8] sm:$0xff]
  %v40 = vld [vmem:[%s0 + $0x10] sm:$0xff]
  %v41 = vld [vmem:[%s0 + $0x18] sm:$0xff]
  %v42 = vld [vmem:[%s0 + $0x20] sm:$0xff]
  %v43 = vld [vmem:[%s0 + $0x28] sm:$0xff]
  %v44 = vld [vmem:[%s0 + $0x30] sm:$0xff]
  %v45 = vld [vmem:[%s0 + $0x38] sm:$0xff]
  %v46 = vld [vmem:[%s0 + $0x40] sm:$0xff]
  %v47 = vld [vmem:[%s0 + $0x48] sm:$0xff]
  %v48 = vld [vmem:[%s0 + $0x50] sm:$0xff]
  %v49 = vld [vmem:[%s0 + $0x58] sm:$0xff]
  %v50 = vld [vmem:[%s0 + $0x60] sm:$0xff]
  %v51 = vld [vmem:[%s0 + $0x68] sm:$0xff]
  %v52 = vld [vmem:[%s0 + $0x70] sm:$0xff]
  %v53 = vld [vmem:[%s0 + $0x78] sm:$0xff]
  %v54 = vld [vmem:[%s1] sm:$0x3]
  %v55 = vld [vmem:[%s2] sm:$0x1]
  %v57 = vlaneseq
  %v58 = vshrl.u32 %v57, 7
  %v59 = vsub.s32 0, %v58
  %v60 = vrot.slane %v55, %v59
  %vm62 = vcmask 15360
  %v64 = vsel %vm62, %v38, 0
  %v67 = vsel %vm62, %v39, 0
  %v70 = vsel %vm62, %v40, 0
  %v73 = vsel %vm62, %v41, 0
  %v76 = vsel %vm62, %v42, 0
  %v79 = vsel %vm62, %v43, 0
  %v82 = vsel %vm62, %v44, 0
  %v85 = vsel %vm62, %v45, 0
  %v88 = vsel %vm62, %v46, 0
  %v91 = vsel %vm62, %v47, 0
  %v94 = vsel %vm62, %v48, 0
  %v97 = vsel %vm62, %v49, 0
  %v100 = vsel %vm62, %v50, 0
  %v103 = vsel %vm62, %v51, 0
  %v106 = vsel %vm62, %v52, 0
  %v109 = vsel %vm62, %v53, 0
  %vm111 = vcmask 1041408
  %v113 = vsel %vm111, %v54, 0
  %115 = vmatprep.subr.mxu0 0.0
  %116 = vmatpush1.msra.mxu0 %v113
  %117 = vmatprep.subr.mxu0 0.0
  %118 = vmatpush1.msra.mxu0 0.0
  %119 = vmatprep.subr.mxu0 0.0
  %120 = vmatpush1.msra.mxu0 0.0
  %121 = vmatprep.subr.mxu0 0.0
  %122 = vmatpush1.msra.mxu0 0.0
  %123 = vmatprep.subr.mxu0 0.0
  %124 = vmatpush1.msra.mxu0 0.0
  %125 = vmatprep.subr.mxu0 0.0
  %126 = vmatpush1.msra.mxu0 0.0
  %127 = vmatprep.subr.mxu0 0.0
  %128 = vmatpush1.msra.mxu0 0.0
  %129 = vmatprep.subr.mxu0 0.0
  %130 = vmatpush1.msra.mxu0 0.0
  %131 = vmatprep.subr.mxu0 0.0
  %132 = vmatpush1.msra.mxu0 0.0
  %133 = vmatprep.subr.mxu0 0.0
  %134 = vmatpush1.msra.mxu0 0.0
  %135 = vmatprep.subr.mxu0 0.0
  %136 = vmatpush1.msra.mxu0 0.0
  %137 = vmatprep.subr.mxu0 0.0
  %138 = vmatpush1.msra.mxu0 0.0
  %139 = vmatprep.subr.mxu0 0.0
  %140 = vmatpush1.msra.mxu0 0.0
  %141 = vmatprep.subr.mxu0 0.0
  %142 = vmatpush1.msra.mxu0 0.0
  %143 = vmatprep.subr.mxu0 0.0
  %144 = vmatpush1.msra.mxu0 0.0
  %145 = vmatprep.subr.mxu0 0.0
  %146 = vmatpush1.msra.mxu0 0.0
  %147 = vmatprep.subr.mxu0 0.0
  %148 = vmatpush1.msra.mxu0 0.0
  %149 = vmatprep.subr.mxu0 0.0
  %150 = vmatpush1.msra.mxu0 0.0
  %151 = vmatprep.subr.mxu0 0.0
  %152 = vmatpush1.msra.mxu0 0.0
  %153 = vmatprep.subr.mxu0 0.0
  %154 = vmatpush1.msra.mxu0 0.0
  %155 = vmatprep.subr.mxu0 0.0
  %156 = vmatpush1.msra.mxu0 0.0
  %157 = vmatprep.subr.mxu0 0.0
  %158 = vmatpush1.msra.mxu0 0.0
  %159 = vmatprep.subr.mxu0 0.0
  %160 = vmatpush1.msra.mxu0 0.0
  %161 = vmatprep.subr.mxu0 0.0
  %162 = vmatpush1.msra.mxu0 0.0
  %163 = vmatprep.subr.mxu0 0.0
  %164 = vmatpush1.msra.mxu0 0.0
  %165 = vmatprep.subr.mxu0 0.0
  %166 = vmatpush1.msra.mxu0 0.0
  %167 = vmatprep.subr.mxu0 0.0
  %168 = vmatpush1.msra.mxu0 0.0
  %169 = vmatprep.subr.mxu0 0.0
  %170 = vmatpush1.msra.mxu0 0.0
  %171 = vmatprep.subr.mxu0 0.0
  %172 = vmatpush1.msra.mxu0 0.0
  %173 = vmatprep.subr.mxu0 0.0
  %174 = vmatpush1.msra.mxu0 0.0
  %175 = vmatprep.subr.mxu0 0.0
  %176 = vmatpush1.msra.mxu0 0.0
  %177 = vmatprep.subr.mxu0 0.0
  %178 = vmatpush1.msra.mxu0 0.0
  %179 = vmatprep.mubr.f32.mxu0 0.0
  %180 = vmatmul.mubr.f32.gmra.mrb[0].mxu0 %v64
  %v181 = vpop.f32.mrb[0].mxu0
  %v182 = vadd.f32 %v60, %v181
  %v183 = vpop.f32.mrb[0].mxu0
  %184 = vmatprep.mubr.f32.mxu0 0.0
  %185 = vmatmul.mubr.f32.gmra.mrb[0].mxu0 %v67
  %v186 = vpop.f32.mrb[0].mxu0
  %v187 = vadd.f32 %v60, %v186
  %v188 = vpop.f32.mrb[0].mxu0
  %189 = vmatprep.mubr.f32.mxu0 0.0
  %190 = vmatmul.mubr.f32.gmra.mrb[0].mxu0 %v70
  %v191 = vpop.f32.mrb[0].mxu0
  %v192 = vadd.f32 %v60, %v191
  %v193 = vpop.f32.mrb[0].mxu0
  %194 = vmatprep.mubr.f32.mxu0 0.0
  %195 = vmatmul.mubr.f32.gmra.mrb[0].mxu0 %v73
  %v196 = vpop.f32.mrb[0].mxu0
  %v197 = vadd.f32 %v60, %v196
  %v198 = vpop.f32.mrb[0].mxu0
  %199 = vmatprep.mubr.f32.mxu0 0.0
  %200 = vmatmul.mubr.f32.gmra.mrb[0].mxu0 %v76
  %v201 = vpop.f32.mrb[0].mxu0
  %v202 = vadd.f32 %v60, %v201
  %v203 = vpop.f32.mrb[0].mxu0
  %204 = vmatprep.mubr.f32.mxu0 0.0
  %205 = vmatmul.mubr.f32.gmra.mrb[0].mxu0 %v79
  %v206 = vpop.f32.mrb[0].mxu0
  %v207 = vadd.f32 %v60, %v206
  %v208 = vpop.f32.mrb[0].mxu0
  %209 = vmatprep.mubr.f32.mxu0 0.0
  %210 = vmatmul.mubr.f32.gmra.mrb[0].mxu0 %v82
  %v211 = vpop.f32.mrb[0].mxu0
  %v212 = vadd.f32 %v60, %v211
  %v213 = vpop.f32.mrb[0].mxu0
  %214 = vmatprep.mubr.f32.mxu0 0.0
  %215 = vmatmul.mubr.f32.gmra.mrb[0].mxu0 %v85
  %v216 = vpop.f32.mrb[0].mxu0
  %v217 = vadd.f32 %v60, %v216
  %v218 = vpop.f32.mrb[0].mxu0
  %219 = vmatprep.mubr.f32.mxu0 0.0
  %220 = vmatmul.mubr.f32.gmra.mrb[0].mxu0 %v88
  %v221 = vpop.f32.mrb[0].mxu0
  %v222 = vadd.f32 %v60, %v221
  %v223 = vpop.f32.mrb[0].mxu0
  %224 = vmatprep.mubr.f32.mxu0 0.0
  %225 = vmatmul.mubr.f32.gmra.mrb[0].mxu0 %v91
  %v226 = vpop.f32.mrb[0].mxu0
  %v227 = vadd.f32 %v60, %v226
  %v228 = vpop.f32.mrb[0].mxu0
  %229 = vmatprep.mubr.f32.mxu0 0.0
  %230 = vmatmul.mubr.f32.gmra.mrb[0].mxu0 %v94
  %v231 = vpop.f32.mrb[0].mxu0
  %v232 = vadd.f32 %v60, %v231
  %v233 = vpop.f32.mrb[0].mxu0
  %234 = vmatprep.mubr.f32.mxu0 0.0
  %235 = vmatmul.mubr.f32.gmra.mrb[0].mxu0 %v97
  %v236 = vpop.f32.mrb[0].mxu0
  %v237 = vadd.f32 %v60, %v236
  %v238 = vpop.f32.mrb[0].mxu0
  %239 = vmatprep.mubr.f32.mxu0 0.0
  %240 = vmatmul.mubr.f32.gmra.mrb[0].mxu0 %v100
  %v241 = vpop.f32.mrb[0].mxu0
  %v242 = vadd.f32 %v60, %v241
  %v243 = vpop.f32.mrb[0].mxu0
  %244 = vmatprep.mubr.f32.mxu0 0.0
  %245 = vmatmul.mubr.f32.gmra.mrb[0].mxu0 %v103
  %v246 = vpop.f32.mrb[0].mxu0
  %v247 = vadd.f32 %v60, %v246
  %v248 = vpop.f32.mrb[0].mxu0
  %249 = vmatprep.mubr.f32.mxu0 0.0
  %250 = vmatmul.mubr.f32.gmra.mrb[0].mxu0 %v106
  %v251 = vpop.f32.mrb[0].mxu0
  %v252 = vadd.f32 %v60, %v251
  %v253 = vpop.f32.mrb[0].mxu0
  %254 = vmatprep.mubr.f32.mxu0 0.0
  %255 = vmatmul.mubr.f32.gmra.mrb[0].mxu0 %v109
  %v256 = vpop.f32.mrb[0].mxu0
  %v257 = vadd.f32 %v60, %v256
  %v258 = vpop.f32.mrb[0].mxu0
  %259 = vdwg.mxu0
  %v260 = vlaneseq
  %v261 = vshrl.u32 %v260, 7
  %vm262 = vcmp.ge.s32.totalorder %v261, 1
  %v263 = vsel %vm262, 1, 0
  %v264 = vcvt.s32.f32 %v263
  %vm265 = vcmp.ge.s32.totalorder %v261, 2
  %v266 = vsel %vm265, 1, 0
  %v267 = vcvt.s32.f32 %v266
  %v268 = vlaneseq
  %v269 = vand.u32 %v268, 127
  %vm270 = vcmp.ge.s32.totalorder %v269, 0
  %vm271 = vcmp.ge.s32.totalorder %v269, 8
  %vm272 = vcmp.ge.s32.totalorder %v269, 16
  %vm273 = vcmp.ge.s32.totalorder %v269, 24
  %vm274 = vcmp.ge.s32.totalorder %v269, 32
  %vm275 = vcmp.ge.s32.totalorder %v269, 40
  %vm276 = vcmp.ge.s32.totalorder %v269, 48
  %vm277 = vcmp.ge.s32.totalorder %v269, 56
  %vm278 = vcmp.ge.s32.totalorder %v269, 64
  %vm279 = vcmp.ge.s32.totalorder %v269, 72
  %vm280 = vcmp.ge.s32.totalorder %v269, 80
  %vm281 = vcmp.ge.s32.totalorder %v269, 88
  %vm282 = vcmp.ge.s32.totalorder %v269, 96
  %vm283 = vcmp.ge.s32.totalorder %v269, 104
  %vm284 = vcmp.ge.s32.totalorder %v269, 112
  %vm285 = vcmp.ge.s32.totalorder %v269, 120
  %vm286 = vcmp.lt.s32.totalorder %v269, 8
  %vm287 = vcmp.lt.s32.totalorder %v269, 16
  %vm288 = vcmp.lt.s32.totalorder %v269, 24
  %vm289 = vcmp.lt.s32.totalorder %v269, 32
  %vm290 = vcmp.lt.s32.totalorder %v269, 40
  %vm291 = vcmp.lt.s32.totalorder %v269, 48
  %vm292 = vcmp.lt.s32.totalorder %v269, 56
  %vm293 = vcmp.lt.s32.totalorder %v269, 64
  %vm294 = vcmp.lt.s32.totalorder %v269, 72
  %vm295 = vcmp.lt.s32.totalorder %v269, 80
  %vm296 = vcmp.lt.s32.totalorder %v269, 88
  %vm297 = vcmp.lt.s32.totalorder %v269, 96
  %vm298 = vcmp.lt.s32.totalorder %v269, 104
  %vm299 = vcmp.lt.s32.totalorder %v269, 112
  %vm300 = vcmp.lt.s32.totalorder %v269, 120
  %vm301 = vcmp.lt.s32.totalorder %v269, 128
  %vm302 = vmand %vm270, %vm286
  %vm303 = vmand %vm271, %vm287
  %vm304 = vmand %vm272, %vm288
  %vm305 = vmand %vm273, %vm289
  %vm306 = vmand %vm274, %vm290
  %vm307 = vmand %vm275, %vm291
  %vm308 = vmand %vm276, %vm292
  %vm309 = vmand %vm277, %vm293
  %vm310 = vmand %vm278, %vm294
  %vm311 = vmand %vm279, %vm295
  %vm312 = vmand %vm280, %vm296
  %vm313 = vmand %vm281, %vm297
  %vm314 = vmand %vm282, %vm298
  %vm315 = vmand %vm283, %vm299
  %vm316 = vmand %vm284, %vm300
  %vm317 = vmand %vm285, %vm301
  %v318 = vadd.s32 %v261, 8
  %v319 = vadd.s32 %v261, 16
  %v320 = vadd.s32 %v261, 24
  %v321 = vadd.s32 %v261, 32
  %v322 = vadd.s32 %v261, 40
  %v323 = vadd.s32 %v261, 48
  %v324 = vadd.s32 %v261, 56
  %v325 = vadd.s32 %v261, 64
  %v326 = vadd.s32 %v261, 72
  %v327 = vadd.s32 %v261, 80
  %v328 = vadd.s32 %v261, 88
  %v329 = vadd.s32 %v261, 96
  %v330 = vadd.s32 %v261, 104
  %v331 = vadd.s32 %v261, 112
  %v332 = vadd.s32 %v261, 120
  %vm333 = vcmp.le.s32.totalorder %v269, %v261
  %vm334 = vcmp.le.s32.totalorder %v269, %v318
  %vm335 = vcmp.le.s32.totalorder %v269, %v319
  %vm336 = vcmp.le.s32.totalorder %v269, %v320
  %vm337 = vcmp.le.s32.totalorder %v269, %v321
  %vm338 = vcmp.le.s32.totalorder %v269, %v322
  %vm339 = vcmp.le.s32.totalorder %v269, %v323
  %vm340 = vcmp.le.s32.totalorder %v269, %v324
  %vm341 = vcmp.le.s32.totalorder %v269, %v325
  %vm342 = vcmp.le.s32.totalorder %v269, %v326
  %vm343 = vcmp.le.s32.totalorder %v269, %v327
  %vm344 = vcmp.le.s32.totalorder %v269, %v328
  %vm345 = vcmp.le.s32.totalorder %v269, %v329
  %vm346 = vcmp.le.s32.totalorder %v269, %v330
  %vm347 = vcmp.le.s32.totalorder %v269, %v331
  %vm348 = vcmp.le.s32.totalorder %v269, %v332
  %v349 = vsel %vm333, 0.0, 1000.0
  %v350 = vsel %vm334, 0.0, 1000.0
  %v351 = vsel %vm335, 0.0, 1000.0
  %v352 = vsel %vm336, 0.0, 1000.0
  %v353 = vsel %vm337, 0.0, 1000.0
  %v354 = vsel %vm338, 0.0, 1000.0
  %v355 = vsel %vm339, 0.0, 1000.0
  %v356 = vsel %vm340, 0.0, 1000.0
  %v357 = vsel %vm341, 0.0, 1000.0
  %v358 = vsel %vm342, 0.0, 1000.0
  %v359 = vsel %vm343, 0.0, 1000.0
  %v360 = vsel %vm344, 0.0, 1000.0
  %v361 = vsel %vm345, 0.0, 1000.0
  %v362 = vsel %vm346, 0.0, 1000.0
  %v363 = vsel %vm347, 0.0, 1000.0
  %v364 = vsel %vm348, 0.0, 1000.0
  %v365 = vsel %vm302, %v349, 1e+09
  %v366 = vsel %vm303, %v350, 1e+09
  %v367 = vsel %vm304, %v351, 1e+09
  %v368 = vsel %vm305, %v352, 1e+09
  %v369 = vsel %vm306, %v353, 1e+09
  %v370 = vsel %vm307, %v354, 1e+09
  %v371 = vsel %vm308, %v355, 1e+09
  %v372 = vsel %vm309, %v356, 1e+09
  %v373 = vsel %vm310, %v357, 1e+09
  %v374 = vsel %vm311, %v358, 1e+09
  %v375 = vsel %vm312, %v359, 1e+09
  %v376 = vsel %vm313, %v360, 1e+09
  %v377 = vsel %vm314, %v361, 1e+09
  %v378 = vsel %vm315, %v362, 1e+09
  %v379 = vsel %vm316, %v363, 1e+09
  %v380 = vsel %vm317, %v364, 1e+09
  %v381 = vrot.slane %v182, 7
  %v382 = vrot.slane %v187, 7
  %v383 = vrot.slane %v192, 7
  %v384 = vrot.slane %v197, 7
  %v385 = vrot.slane %v202, 7
  %v386 = vrot.slane %v207, 7
  %v387 = vrot.slane %v212, 7
  %v388 = vrot.slane %v217, 7
  %v389 = vrot.slane %v222, 7
  %v390 = vrot.slane %v227, 7
  %v391 = vrot.slane %v232, 7
  %v392 = vrot.slane %v237, 7
  %v393 = vrot.slane %v242, 7
  %v394 = vrot.slane %v247, 7
  %v395 = vrot.slane %v252, 7
  %v396 = vrot.slane %v257, 7
  %v397 = vmul.f32 %v381, %v264
  %v398 = vmul.f32 %v382, %v264
  %v399 = vmul.f32 %v383, %v264
  %v400 = vmul.f32 %v384, %v264
  %v401 = vmul.f32 %v385, %v264
  %v402 = vmul.f32 %v386, %v264
  %v403 = vmul.f32 %v387, %v264
  %v404 = vmul.f32 %v388, %v264
  %v405 = vmul.f32 %v389, %v264
  %v406 = vmul.f32 %v390, %v264
  %v407 = vmul.f32 %v391, %v264
  %v408 = vmul.f32 %v392, %v264
  %v409 = vmul.f32 %v393, %v264
  %v410 = vmul.f32 %v394, %v264
  %v411 = vmul.f32 %v395, %v264
  %v412 = vmul.f32 %v396, %v264
  %v413 = vrot.slane %v182, 6
  %v414 = vrot.slane %v187, 6
  %v415 = vrot.slane %v192, 6
  %v416 = vrot.slane %v197, 6
  %v417 = vrot.slane %v202, 6
  %v418 = vrot.slane %v207, 6
  %v419 = vrot.slane %v212, 6
  %v420 = vrot.slane %v217, 6
  %v421 = vrot.slane %v222, 6
  %v422 = vrot.slane %v227, 6
  %v423 = vrot.slane %v232, 6
  %v424 = vrot.slane %v237, 6
  %v425 = vrot.slane %v242, 6
  %v426 = vrot.slane %v247, 6
  %v427 = vrot.slane %v252, 6
  %v428 = vrot.slane %v257, 6
  %v429 = vmul.f32 %v413, %v267
  %v430 = vmul.f32 %v414, %v267
  %v431 = vmul.f32 %v415, %v267
  %v432 = vmul.f32 %v416, %v267
  %v433 = vmul.f32 %v417, %v267
  %v434 = vmul.f32 %v418, %v267
  %v435 = vmul.f32 %v419, %v267
  %v436 = vmul.f32 %v420, %v267
  %v437 = vmul.f32 %v421, %v267
  %v438 = vmul.f32 %v422, %v267
  %v439 = vmul.f32 %v423, %v267
  %v440 = vmul.f32 %v424, %v267
  %v441 = vmul.f32 %v425, %v267
  %v442 = vmul.f32 %v426, %v267
  %v443 = vmul.f32 %v427, %v267
  %v444 = vmul.f32 %v428, %v267
  %461 = vrot.lane.b32.xlu0 %v397, 32
  %v462 = vpop.permute.xlu0 %461
  %463 = vrot.lane.b32.xlu0 %v398, 32
  %v464 = vpop.permute.xlu0 %463
  %465 = vrot.lane.b32.xlu0 %v399, 32
  %v466 = vpop.permute.xlu0 %465
  %467 = vrot.lane.b32.xlu0 %v400, 32
  %v468 = vpop.permute.xlu0 %467
  %469 = vrot.lane.b32.xlu0 %v401, 32
  %v470 = vpop.permute.xlu0 %469
  %471 = vrot.lane.b32.xlu0 %v402, 32
  %v472 = vpop.permute.xlu0 %471
  %473 = vrot.lane.b32.xlu0 %v403, 32
  %v474 = vpop.permute.xlu0 %473
  %475 = vrot.lane.b32.xlu0 %v404, 32
  %v476 = vpop.permute.xlu0 %475
  %477 = vrot.lane.b32.xlu0 %v405, 32
  %v478 = vpop.permute.xlu0 %477
  %479 = vrot.lane.b32.xlu0 %v406, 32
  %v480 = vpop.permute.xlu0 %479
  %481 = vrot.lane.b32.xlu0 %v407, 32
  %v482 = vpop.permute.xlu0 %481
  %483 = vrot.lane.b32.xlu0 %v408, 32
  %v484 = vpop.permute.xlu0 %483
  %485 = vrot.lane.b32.xlu0 %v409, 32
  %v486 = vpop.permute.xlu0 %485
  %487 = vrot.lane.b32.xlu0 %v410, 32
  %v488 = vpop.permute.xlu0 %487
  %489 = vrot.lane.b32.xlu0 %v411, 32
  %v490 = vpop.permute.xlu0 %489
  %491 = vrot.lane.b32.xlu0 %v412, 32
  %v492 = vpop.permute.xlu0 %491
  %525 = vrot.lane.b32.xlu0 %v182, 64
  %v526 = vpop.permute.xlu0 %525
  %527 = vrot.lane.b32.xlu0 %v187, 64
  %v528 = vpop.permute.xlu0 %527
  %529 = vrot.lane.b32.xlu0 %v192, 64
  %v530 = vpop.permute.xlu0 %529
  %531 = vrot.lane.b32.xlu0 %v197, 64
  %v532 = vpop.permute.xlu0 %531
  %533 = vrot.lane.b32.xlu0 %v202, 64
  %v534 = vpop.permute.xlu0 %533
  %535 = vrot.lane.b32.xlu0 %v207, 64
  %v536 = vpop.permute.xlu0 %535
  %537 = vrot.lane.b32.xlu0 %v212, 64
  %v538 = vpop.permute.xlu0 %537
  %539 = vrot.lane.b32.xlu0 %v217, 64
  %v540 = vpop.permute.xlu0 %539
  %541 = vrot.lane.b32.xlu0 %v222, 64
  %v542 = vpop.permute.xlu0 %541
  %543 = vrot.lane.b32.xlu0 %v227, 64
  %v544 = vpop.permute.xlu0 %543
  %545 = vrot.lane.b32.xlu0 %v232, 64
  %v546 = vpop.permute.xlu0 %545
  %547 = vrot.lane.b32.xlu0 %v237, 64
  %v548 = vpop.permute.xlu0 %547
  %549 = vrot.lane.b32.xlu0 %v242, 64
  %v550 = vpop.permute.xlu0 %549
  %551 = vrot.lane.b32.xlu0 %v247, 64
  %v552 = vpop.permute.xlu0 %551
  %553 = vrot.lane.b32.xlu0 %v252, 64
  %v554 = vpop.permute.xlu0 %553
  %555 = vrot.lane.b32.xlu0 %v257, 64
  %v556 = vpop.permute.xlu0 %555
  %vm573 = vcmask 261120
  %v574 = vsel %vm573, %v429, %v462
  %v575 = vsel %vm573, %v430, %v464
  %v576 = vsel %vm573, %v431, %v466
  %v577 = vsel %vm573, %v432, %v468
  %v578 = vsel %vm573, %v433, %v470
  %v579 = vsel %vm573, %v434, %v472
  %v580 = vsel %vm573, %v435, %v474
  %v581 = vsel %vm573, %v436, %v476
  %v582 = vsel %vm573, %v437, %v478
  %v583 = vsel %vm573, %v438, %v480
  %v584 = vsel %vm573, %v439, %v482
  %v585 = vsel %vm573, %v440, %v484
  %v586 = vsel %vm573, %v441, %v486
  %v587 = vsel %vm573, %v442, %v488
  %v588 = vsel %vm573, %v443, %v490
  %v589 = vsel %vm573, %v444, %v492
  %vm590 = vcmask 523264
  %v591 = vsel %vm590, %v574, %v526
  %v592 = vsel %vm590, %v575, %v528
  %v593 = vsel %vm590, %v576, %v530
  %v594 = vsel %vm590, %v577, %v532
  %v595 = vsel %vm590, %v578, %v534
  %v596 = vsel %vm590, %v579, %v536
  %v597 = vsel %vm590, %v580, %v538
  %v598 = vsel %vm590, %v581, %v540
  %v599 = vsel %vm590, %v582, %v542
  %v600 = vsel %vm590, %v583, %v544
  %v601 = vsel %vm590, %v584, %v546
  %v602 = vsel %vm590, %v585, %v548
  %v603 = vsel %vm590, %v586, %v550
  %v604 = vsel %vm590, %v587, %v552
  %v605 = vsel %vm590, %v588, %v554
  %v606 = vsel %vm590, %v589, %v556
  %v607 = vld [vmem:[%s3] sm:$0xff]
  %v608 = vld [vmem:[%s3 + $0x8] sm:$0xff]
  %v609 = vld [vmem:[%s3 + $0x10] sm:$0xff]
  %v610 = vld [vmem:[%s3 + $0x18] sm:$0xff]
  %v611 = vld [vmem:[%s3 + $0x20] sm:$0xff]
  %v612 = vld [vmem:[%s3 + $0x28] sm:$0xff]
  %v613 = vld [vmem:[%s3 + $0x30] sm:$0xff]
  %v614 = vld [vmem:[%s3 + $0x38] sm:$0xff]
  %v615 = vld [vmem:[%s3 + $0x40] sm:$0xff]
  %v616 = vld [vmem:[%s3 + $0x48] sm:$0xff]
  %v617 = vld [vmem:[%s3 + $0x50] sm:$0xff]
  %v618 = vld [vmem:[%s3 + $0x58] sm:$0xff]
  %vm619 = vcmask 785408
  %v621 = vsel %vm619, %v591, 0
  %v624 = vsel %vm619, %v592, 0
  %v627 = vsel %vm619, %v593, 0
  %v630 = vsel %vm619, %v594, 0
  %v633 = vsel %vm619, %v595, 0
  %v636 = vsel %vm619, %v596, 0
  %v639 = vsel %vm619, %v597, 0
  %v642 = vsel %vm619, %v598, 0
  %v645 = vsel %vm619, %v599, 0
  %v648 = vsel %vm619, %v600, 0
  %v651 = vsel %vm619, %v601, 0
  %v654 = vsel %vm619, %v602, 0
  %v657 = vsel %vm619, %v603, 0
  %v660 = vsel %vm619, %v604, 0
  %v663 = vsel %vm619, %v605, 0
  %v666 = vsel %vm619, %v606, 0
  %668 = vmatprep.subr.mxu0 0.0
  %669 = vmatpush1.msra.mxu0 %v607
  %670 = vmatprep.subr.mxu0 0.0
  %671 = vmatpush1.msra.mxu0 %v608
  %672 = vmatprep.subr.mxu0 0.0
  %673 = vmatpush1.msra.mxu0 %v609
  %674 = vmatprep.subr.mxu0 0.0
  %675 = vmatpush1.msra.mxu0 %v610
  %676 = vmatprep.subr.mxu0 0.0
  %677 = vmatpush1.msra.mxu0 %v611
  %678 = vmatprep.subr.mxu0 0.0
  %679 = vmatpush1.msra.mxu0 %v612
  %680 = vmatprep.subr.mxu0 0.0
  %681 = vmatpush1.msra.mxu0 %v613
  %682 = vmatprep.subr.mxu0 0.0
  %683 = vmatpush1.msra.mxu0 %v614
  %684 = vmatprep.subr.mxu0 0.0
  %685 = vmatpush1.msra.mxu0 %v615
  %686 = vmatprep.subr.mxu0 0.0
  %687 = vmatpush1.msra.mxu0 %v616
  %688 = vmatprep.subr.mxu0 0.0
  %689 = vmatpush1.msra.mxu0 %v617
  %690 = vmatprep.subr.mxu0 0.0
  %691 = vmatpush1.msra.mxu0 %v618
  %692 = vmatprep.subr.mxu0 0.0
  %693 = vmatpush1.msra.mxu0 0.0
  %694 = vmatprep.subr.mxu0 0.0
  %695 = vmatpush1.msra.mxu0 0.0
  %696 = vmatprep.subr.mxu0 0.0
  %697 = vmatpush1.msra.mxu0 0.0
  %698 = vmatprep.subr.mxu0 0.0
  %699 = vmatpush1.msra.mxu0 0.0
  %700 = vmatprep.subr.mxu0 0.0
  %701 = vmatpush1.msra.mxu0 0.0
  %702 = vmatprep.subr.mxu0 0.0
  %703 = vmatpush1.msra.mxu0 0.0
  %704 = vmatprep.subr.mxu0 0.0
  %705 = vmatpush1.msra.mxu0 0.0
  %706 = vmatprep.subr.mxu0 0.0
  %707 = vmatpush1.msra.mxu0 0.0
  %708 = vmatprep.subr.mxu0 0.0
  %709 = vmatpush1.msra.mxu0 0.0
  %710 = vmatprep.subr.mxu0 0.0
  %711 = vmatpush1.msra.mxu0 0.0
  %712 = vmatprep.subr.mxu0 0.0
  %713 = vmatpush1.msra.mxu0 0.0
  %714 = vmatprep.subr.mxu0 0.0
  %715 = vmatpush1.msra.mxu0 0.0
  %716 = vmatprep.subr.mxu0 0.0
  %717 = vmatpush1.msra.mxu0 0.0
  %718 = vmatprep.subr.mxu0 0.0
  %719 = vmatpush1.msra.mxu0 0.0
  %720 = vmatprep.subr.mxu0 0.0
  %721 = vmatpush1.msra.mxu0 0.0
  %722 = vmatprep.subr.mxu0 0.0
  %723 = vmatpush1.msra.mxu0 0.0
  %724 = vmatprep.subr.mxu0 0.0
  %725 = vmatpush1.msra.mxu0 0.0
  %726 = vmatprep.subr.mxu0 0.0
  %727 = vmatpush1.msra.mxu0 0.0
  %728 = vmatprep.subr.mxu0 0.0
  %729 = vmatpush1.msra.mxu0 0.0
  %730 = vmatprep.subr.mxu0 0.0
  %731 = vmatpush1.msra.mxu0 0.0
  %732 = vmatprep.mubr.f32.mxu0 0.0
  %733 = vmatmul.mubr.f32.gmra.mrb[0].mxu0 %v621
  %v734 = vpop.f32.mrb[0].mxu0
  %v735 = vadd.f32 0.0, %v734
  %v736 = vpop.f32.mrb[0].mxu0
  %737 = vmatprep.mubr.f32.mxu0 0.0
  %738 = vmatmul.mubr.f32.gmra.mrb[0].mxu0 %v624
  %v739 = vpop.f32.mrb[0].mxu0
  %v740 = vadd.f32 0.0, %v739
  %v741 = vpop.f32.mrb[0].mxu0
  %742 = vmatprep.mubr.f32.mxu0 0.0
  %743 = vmatmul.mubr.f32.gmra.mrb[0].mxu0 %v627
  %v744 = vpop.f32.mrb[0].mxu0
  %v745 = vadd.f32 0.0, %v744
  %v746 = vpop.f32.mrb[0].mxu0
  %747 = vmatprep.mubr.f32.mxu0 0.0
  %748 = vmatmul.mubr.f32.gmra.mrb[0].mxu0 %v630
  %v749 = vpop.f32.mrb[0].mxu0
  %v750 = vadd.f32 0.0, %v749
  %v751 = vpop.f32.mrb[0].mxu0
  %752 = vmatprep.mubr.f32.mxu0 0.0
  %753 = vmatmul.mubr.f32.gmra.mrb[0].mxu0 %v633
  %v754 = vpop.f32.mrb[0].mxu0
  %v755 = vadd.f32 0.0, %v754
  %v756 = vpop.f32.mrb[0].mxu0
  %757 = vmatprep.mubr.f32.mxu0 0.0
  %758 = vmatmul.mubr.f32.gmra.mrb[0].mxu0 %v636
  %v759 = vpop.f32.mrb[0].mxu0
  %v760 = vadd.f32 0.0, %v759
  %v761 = vpop.f32.mrb[0].mxu0
  %762 = vmatprep.mubr.f32.mxu0 0.0
  %763 = vmatmul.mubr.f32.gmra.mrb[0].mxu0 %v639
  %v764 = vpop.f32.mrb[0].mxu0
  %v765 = vadd.f32 0.0, %v764
  %v766 = vpop.f32.mrb[0].mxu0
  %767 = vmatprep.mubr.f32.mxu0 0.0
  %768 = vmatmul.mubr.f32.gmra.mrb[0].mxu0 %v642
  %v769 = vpop.f32.mrb[0].mxu0
  %v770 = vadd.f32 0.0, %v769
  %v771 = vpop.f32.mrb[0].mxu0
  %772 = vmatprep.mubr.f32.mxu0 0.0
  %773 = vmatmul.mubr.f32.gmra.mrb[0].mxu0 %v645
  %v774 = vpop.f32.mrb[0].mxu0
  %v775 = vadd.f32 0.0, %v774
  %v776 = vpop.f32.mrb[0].mxu0
  %777 = vmatprep.mubr.f32.mxu0 0.0
  %778 = vmatmul.mubr.f32.gmra.mrb[0].mxu0 %v648
  %v779 = vpop.f32.mrb[0].mxu0
  %v780 = vadd.f32 0.0, %v779
  %v781 = vpop.f32.mrb[0].mxu0
  %782 = vmatprep.mubr.f32.mxu0 0.0
  %783 = vmatmul.mubr.f32.gmra.mrb[0].mxu0 %v651
  %v784 = vpop.f32.mrb[0].mxu0
  %v785 = vadd.f32 0.0, %v784
  %v786 = vpop.f32.mrb[0].mxu0
  %787 = vmatprep.mubr.f32.mxu0 0.0
  %788 = vmatmul.mubr.f32.gmra.mrb[0].mxu0 %v654
  %v789 = vpop.f32.mrb[0].mxu0
  %v790 = vadd.f32 0.0, %v789
  %v791 = vpop.f32.mrb[0].mxu0
  %792 = vmatprep.mubr.f32.mxu0 0.0
  %793 = vmatmul.mubr.f32.gmra.mrb[0].mxu0 %v657
  %v794 = vpop.f32.mrb[0].mxu0
  %v795 = vadd.f32 0.0, %v794
  %v796 = vpop.f32.mrb[0].mxu0
  %797 = vmatprep.mubr.f32.mxu0 0.0
  %798 = vmatmul.mubr.f32.gmra.mrb[0].mxu0 %v660
  %v799 = vpop.f32.mrb[0].mxu0
  %v800 = vadd.f32 0.0, %v799
  %v801 = vpop.f32.mrb[0].mxu0
  %802 = vmatprep.mubr.f32.mxu0 0.0
  %803 = vmatmul.mubr.f32.gmra.mrb[0].mxu0 %v663
  %v804 = vpop.f32.mrb[0].mxu0
  %v805 = vadd.f32 0.0, %v804
  %v806 = vpop.f32.mrb[0].mxu0
  %807 = vmatprep.mubr.f32.mxu0 0.0
  %808 = vmatmul.mubr.f32.gmra.mrb[0].mxu0 %v666
  %v809 = vpop.f32.mrb[0].mxu0
  %v810 = vadd.f32 0.0, %v809
  %v811 = vpop.f32.mrb[0].mxu0
  %812 = vdwg.mxu0
  %829 = vrot.lane.b32.xlu0 %v735, 112
  %v830 = vpop.permute.xlu0 %829
  %831 = vrot.lane.b32.xlu0 %v740, 112
  %v832 = vpop.permute.xlu0 %831
  %833 = vrot.lane.b32.xlu0 %v745, 112
  %v834 = vpop.permute.xlu0 %833
  %835 = vrot.lane.b32.xlu0 %v750, 112
  %v836 = vpop.permute.xlu0 %835
  %837 = vrot.lane.b32.xlu0 %v755, 112
  %v838 = vpop.permute.xlu0 %837
  %839 = vrot.lane.b32.xlu0 %v760, 112
  %v840 = vpop.permute.xlu0 %839
  %841 = vrot.lane.b32.xlu0 %v765, 112
  %v842 = vpop.permute.xlu0 %841
  %843 = vrot.lane.b32.xlu0 %v770, 112
  %v844 = vpop.permute.xlu0 %843
  %845 = vrot.lane.b32.xlu0 %v775, 112
  %v846 = vpop.permute.xlu0 %845
  %847 = vrot.lane.b32.xlu0 %v780, 112
  %v848 = vpop.permute.xlu0 %847
  %849 = vrot.lane.b32.xlu0 %v785, 112
  %v850 = vpop.permute.xlu0 %849
  %851 = vrot.lane.b32.xlu0 %v790, 112
  %v852 = vpop.permute.xlu0 %851
  %853 = vrot.lane.b32.xlu0 %v795, 112
  %v854 = vpop.permute.xlu0 %853
  %855 = vrot.lane.b32.xlu0 %v800, 112
  %v856 = vpop.permute.xlu0 %855
  %857 = vrot.lane.b32.xlu0 %v805, 112
  %v858 = vpop.permute.xlu0 %857
  %859 = vrot.lane.b32.xlu0 %v810, 112
  %v860 = vpop.permute.xlu0 %859
  %vm861 = vcmask 130048
  %v862 = vsel %vm861, %v735, 0
  %v864 = vsel %vm861, %v740, 0
  %v866 = vsel %vm861, %v745, 0
  %v868 = vsel %vm861, %v750, 0
  %v870 = vsel %vm861, %v755, 0
  %v872 = vsel %vm861, %v760, 0
  %v874 = vsel %vm861, %v765, 0
  %v876 = vsel %vm861, %v770, 0
  %v878 = vsel %vm861, %v775, 0
  %v880 = vsel %vm861, %v780, 0
  %v882 = vsel %vm861, %v785, 0
  %v884 = vsel %vm861, %v790, 0
  %v886 = vsel %vm861, %v795, 0
  %v888 = vsel %vm861, %v800, 0
  %v890 = vsel %vm861, %v805, 0
  %v892 = vsel %vm861, %v810, 0
  %v894 = vsel %vm861, %v830, 0
  %v896 = vsel %vm861, %v832, 0
  %v898 = vsel %vm861, %v834, 0
  %v900 = vsel %vm861, %v836, 0
  %v902 = vsel %vm861, %v838, 0
  %v904 = vsel %vm861, %v840, 0
  %v906 = vsel %vm861, %v842, 0
  %v908 = vsel %vm861, %v844, 0
  %v910 = vsel %vm861, %v846, 0
  %v912 = vsel %vm861, %v848, 0
  %v914 = vsel %vm861, %v850, 0
  %v916 = vsel %vm861, %v852, 0
  %v918 = vsel %vm861, %v854, 0
  %v920 = vsel %vm861, %v856, 0
  %v922 = vsel %vm861, %v858, 0
  %v924 = vsel %vm861, %v860, 0
  %926 = vmatprep.subr.mxu0 0.0
  %927 = vmatpush1.xpose.msra.mxu0 %v894
  %928 = vmatprep.subr.mxu0 0.0
  %929 = vmatpush1.xpose.msra.mxu0 %v896
  %930 = vmatprep.subr.mxu0 0.0
  %931 = vmatpush1.xpose.msra.mxu0 %v898
  %932 = vmatprep.subr.mxu0 0.0
  %933 = vmatpush1.xpose.msra.mxu0 %v900
  %934 = vmatprep.subr.mxu0 0.0
  %935 = vmatpush1.xpose.msra.mxu0 %v902
  %936 = vmatprep.subr.mxu0 0.0
  %937 = vmatpush1.xpose.msra.mxu0 %v904
  %938 = vmatprep.subr.mxu0 0.0
  %939 = vmatpush1.xpose.msra.mxu0 %v906
  %940 = vmatprep.subr.mxu0 0.0
  %941 = vmatpush1.xpose.msra.mxu0 %v908
  %942 = vmatprep.subr.mxu0 0.0
  %943 = vmatpush1.xpose.msra.mxu0 %v910
  %944 = vmatprep.subr.mxu0 0.0
  %945 = vmatpush1.xpose.msra.mxu0 %v912
  %946 = vmatprep.subr.mxu0 0.0
  %947 = vmatpush1.xpose.msra.mxu0 %v914
  %948 = vmatprep.subr.mxu0 0.0
  %949 = vmatpush1.xpose.msra.mxu0 %v916
  %950 = vmatprep.subr.mxu0 0.0
  %951 = vmatpush1.xpose.msra.mxu0 %v918
  %952 = vmatprep.subr.mxu0 0.0
  %953 = vmatpush1.xpose.msra.mxu0 %v920
  %954 = vmatprep.subr.mxu0 0.0
  %955 = vmatpush1.xpose.msra.mxu0 %v922
  %956 = vmatprep.subr.mxu0 0.0
  %957 = vmatpush1.xpose.msra.mxu0 %v924
  %958 = vmatprep.subr.mxu0 0.0
  %959 = vmatpush1.xpose.msra.mxu0 0.0
  %960 = vmatprep.subr.mxu0 0.0
  %961 = vmatpush1.xpose.msra.mxu0 0.0
  %962 = vmatprep.subr.mxu0 0.0
  %963 = vmatpush1.xpose.msra.mxu0 0.0
  %964 = vmatprep.subr.mxu0 0.0
  %965 = vmatpush1.xpose.msra.mxu0 0.0
  %966 = vmatprep.subr.mxu0 0.0
  %967 = vmatpush1.xpose.msra.mxu0 0.0
  %968 = vmatprep.subr.mxu0 0.0
  %969 = vmatpush1.xpose.msra.mxu0 0.0
  %970 = vmatprep.subr.mxu0 0.0
  %971 = vmatpush1.xpose.msra.mxu0 0.0
  %972 = vmatprep.subr.mxu0 0.0
  %973 = vmatpush1.xpose.msra.mxu0 0.0
  %974 = vmatprep.subr.mxu0 0.0
  %975 = vmatpush1.xpose.msra.mxu0 0.0
  %976 = vmatprep.subr.mxu0 0.0
  %977 = vmatpush1.xpose.msra.mxu0 0.0
  %978 = vmatprep.subr.mxu0 0.0
  %979 = vmatpush1.xpose.msra.mxu0 0.0
  %980 = vmatprep.subr.mxu0 0.0
  %981 = vmatpush1.xpose.msra.mxu0 0.0
  %982 = vmatprep.subr.mxu0 0.0
  %983 = vmatpush1.xpose.msra.mxu0 0.0
  %984 = vmatprep.subr.mxu0 0.0
  %985 = vmatpush1.xpose.msra.mxu0 0.0
  %986 = vmatprep.subr.mxu0 0.0
  %987 = vmatpush1.xpose.msra.mxu0 0.0
  %988 = vmatprep.subr.mxu0 0.0
  %989 = vmatpush1.xpose.msra.mxu0 0.0
  %990 = vmatprep.mubr.f32.mxu0 0.0
  %991 = vmatmul.mubr.f32.gmra.mrb[0].mxu0 %v862
  %v992 = vpop.f32.mrb[0].mxu0
  %v993 = vadd.f32 0.0, %v992
  %v994 = vpop.f32.mrb[0].mxu0
  %995 = vmatprep.mubr.f32.mxu0 0.0
  %996 = vmatmul.mubr.f32.gmra.mrb[0].mxu0 %v864
  %v997 = vpop.f32.mrb[0].mxu0
  %v998 = vadd.f32 0.0, %v997
  %v999 = vpop.f32.mrb[0].mxu0
  %1000 = vmatprep.mubr.f32.mxu0 0.0
  %1001 = vmatmul.mubr.f32.gmra.mrb[0].mxu0 %v866
  %v1002 = vpop.f32.mrb[0].mxu0
  %v1003 = vadd.f32 0.0, %v1002
  %v1004 = vpop.f32.mrb[0].mxu0
  %1005 = vmatprep.mubr.f32.mxu0 0.0
  %1006 = vmatmul.mubr.f32.gmra.mrb[0].mxu0 %v868
  %v1007 = vpop.f32.mrb[0].mxu0
  %v1008 = vadd.f32 0.0, %v1007
  %v1009 = vpop.f32.mrb[0].mxu0
  %1010 = vmatprep.mubr.f32.mxu0 0.0
  %1011 = vmatmul.mubr.f32.gmra.mrb[0].mxu0 %v870
  %v1012 = vpop.f32.mrb[0].mxu0
  %v1013 = vadd.f32 0.0, %v1012
  %v1014 = vpop.f32.mrb[0].mxu0
  %1015 = vmatprep.mubr.f32.mxu0 0.0
  %1016 = vmatmul.mubr.f32.gmra.mrb[0].mxu0 %v872
  %v1017 = vpop.f32.mrb[0].mxu0
  %v1018 = vadd.f32 0.0, %v1017
  %v1019 = vpop.f32.mrb[0].mxu0
  %1020 = vmatprep.mubr.f32.mxu0 0.0
  %1021 = vmatmul.mubr.f32.gmra.mrb[0].mxu0 %v874
  %v1022 = vpop.f32.mrb[0].mxu0
  %v1023 = vadd.f32 0.0, %v1022
  %v1024 = vpop.f32.mrb[0].mxu0
  %1025 = vmatprep.mubr.f32.mxu0 0.0
  %1026 = vmatmul.mubr.f32.gmra.mrb[0].mxu0 %v876
  %v1027 = vpop.f32.mrb[0].mxu0
  %v1028 = vadd.f32 0.0, %v1027
  %v1029 = vpop.f32.mrb[0].mxu0
  %1030 = vmatprep.mubr.f32.mxu0 0.0
  %1031 = vmatmul.mubr.f32.gmra.mrb[0].mxu0 %v878
  %v1032 = vpop.f32.mrb[0].mxu0
  %v1033 = vadd.f32 0.0, %v1032
  %v1034 = vpop.f32.mrb[0].mxu0
  %1035 = vmatprep.mubr.f32.mxu0 0.0
  %1036 = vmatmul.mubr.f32.gmra.mrb[0].mxu0 %v880
  %v1037 = vpop.f32.mrb[0].mxu0
  %v1038 = vadd.f32 0.0, %v1037
  %v1039 = vpop.f32.mrb[0].mxu0
  %1040 = vmatprep.mubr.f32.mxu0 0.0
  %1041 = vmatmul.mubr.f32.gmra.mrb[0].mxu0 %v882
  %v1042 = vpop.f32.mrb[0].mxu0
  %v1043 = vadd.f32 0.0, %v1042
  %v1044 = vpop.f32.mrb[0].mxu0
  %1045 = vmatprep.mubr.f32.mxu0 0.0
  %1046 = vmatmul.mubr.f32.gmra.mrb[0].mxu0 %v884
  %v1047 = vpop.f32.mrb[0].mxu0
  %v1048 = vadd.f32 0.0, %v1047
  %v1049 = vpop.f32.mrb[0].mxu0
  %1050 = vmatprep.mubr.f32.mxu0 0.0
  %1051 = vmatmul.mubr.f32.gmra.mrb[0].mxu0 %v886
  %v1052 = vpop.f32.mrb[0].mxu0
  %v1053 = vadd.f32 0.0, %v1052
  %v1054 = vpop.f32.mrb[0].mxu0
  %1055 = vmatprep.mubr.f32.mxu0 0.0
  %1056 = vmatmul.mubr.f32.gmra.mrb[0].mxu0 %v888
  %v1057 = vpop.f32.mrb[0].mxu0
  %v1058 = vadd.f32 0.0, %v1057
  %v1059 = vpop.f32.mrb[0].mxu0
  %1060 = vmatprep.mubr.f32.mxu0 0.0
  %1061 = vmatmul.mubr.f32.gmra.mrb[0].mxu0 %v890
  %v1062 = vpop.f32.mrb[0].mxu0
  %v1063 = vadd.f32 0.0, %v1062
  %v1064 = vpop.f32.mrb[0].mxu0
  %1065 = vmatprep.mubr.f32.mxu0 0.0
  %1066 = vmatmul.mubr.f32.gmra.mrb[0].mxu0 %v892
  %v1067 = vpop.f32.mrb[0].mxu0
  %v1068 = vadd.f32 0.0, %v1067
  %v1069 = vpop.f32.mrb[0].mxu0
  %1070 = vdwg.mxu0
  %v1071 = vsub.f32 %v993, %v365
  %v1072 = vsub.f32 %v998, %v366
  %v1073 = vsub.f32 %v1003, %v367
  %v1074 = vsub.f32 %v1008, %v368
  %v1075 = vsub.f32 %v1013, %v369
  %v1076 = vsub.f32 %v1018, %v370
  %v1077 = vsub.f32 %v1023, %v371
  %v1078 = vsub.f32 %v1028, %v372
  %v1079 = vsub.f32 %v1033, %v373
  %v1080 = vsub.f32 %v1038, %v374
  %v1081 = vsub.f32 %v1043, %v375
  %v1082 = vsub.f32 %v1048, %v376
  %v1083 = vsub.f32 %v1053, %v377
  %v1084 = vsub.f32 %v1058, %v378
  %v1085 = vsub.f32 %v1063, %v379
  %v1086 = vsub.f32 %v1068, %v380
  %1087 = vmax.xlane.f32.xlu0 %v1071
  %v1088 = vpop.xlane.xlu0 %1087
  %1089 = vmax.xlane.f32.xlu0 %v1072
  %v1090 = vpop.xlane.xlu0 %1089
  %1091 = vmax.xlane.f32.xlu0 %v1073
  %v1092 = vpop.xlane.xlu0 %1091
  %1093 = vmax.xlane.f32.xlu0 %v1074
  %v1094 = vpop.xlane.xlu0 %1093
  %1095 = vmax.xlane.f32.xlu0 %v1075
  %v1096 = vpop.xlane.xlu0 %1095
  %1097 = vmax.xlane.f32.xlu0 %v1076
  %v1098 = vpop.xlane.xlu0 %1097
  %1099 = vmax.xlane.f32.xlu0 %v1077
  %v1100 = vpop.xlane.xlu0 %1099
  %1101 = vmax.xlane.f32.xlu0 %v1078
  %v1102 = vpop.xlane.xlu0 %1101
  %1103 = vmax.xlane.f32.xlu0 %v1079
  %v1104 = vpop.xlane.xlu0 %1103
  %1105 = vmax.xlane.f32.xlu0 %v1080
  %v1106 = vpop.xlane.xlu0 %1105
  %1107 = vmax.xlane.f32.xlu0 %v1081
  %v1108 = vpop.xlane.xlu0 %1107
  %1109 = vmax.xlane.f32.xlu0 %v1082
  %v1110 = vpop.xlane.xlu0 %1109
  %1111 = vmax.xlane.f32.xlu0 %v1083
  %v1112 = vpop.xlane.xlu0 %1111
  %1113 = vmax.xlane.f32.xlu0 %v1084
  %v1114 = vpop.xlane.xlu0 %1113
  %1115 = vmax.xlane.f32.xlu0 %v1085
  %v1116 = vpop.xlane.xlu0 %1115
  %1117 = vmax.xlane.f32.xlu0 %v1086
  %v1118 = vpop.xlane.xlu0 %1117
  %v1119 = vsub.f32 %v1071, %v1088
  %v1120 = vsub.f32 %v1072, %v1090
  %v1121 = vsub.f32 %v1073, %v1092
  %v1122 = vsub.f32 %v1074, %v1094
  %v1123 = vsub.f32 %v1075, %v1096
  %v1124 = vsub.f32 %v1076, %v1098
  %v1125 = vsub.f32 %v1077, %v1100
  %v1126 = vsub.f32 %v1078, %v1102
  %v1127 = vsub.f32 %v1079, %v1104
  %v1128 = vsub.f32 %v1080, %v1106
  %v1129 = vsub.f32 %v1081, %v1108
  %v1130 = vsub.f32 %v1082, %v1110
  %v1131 = vsub.f32 %v1083, %v1112
  %v1132 = vsub.f32 %v1084, %v1114
  %v1133 = vsub.f32 %v1085, %v1116
  %v1134 = vsub.f32 %v1086, %v1118
  %v1135 = vmul.f32 %v1119, 1.442695
  %v1136 = vpow.pop %v1135
  %v1137 = vmul.f32 %v1120, 1.442695
  %v1138 = vpow.pop %v1137
  %v1139 = vmul.f32 %v1121, 1.442695
  %v1140 = vpow.pop %v1139
  %v1141 = vmul.f32 %v1122, 1.442695
  %v1142 = vpow.pop %v1141
  %v1143 = vmul.f32 %v1123, 1.442695
  %v1144 = vpow.pop %v1143
  %v1145 = vmul.f32 %v1124, 1.442695
  %v1146 = vpow.pop %v1145
  %v1147 = vmul.f32 %v1125, 1.442695
  %v1148 = vpow.pop %v1147
  %v1149 = vmul.f32 %v1126, 1.442695
  %v1150 = vpow.pop %v1149
  %v1151 = vmul.f32 %v1127, 1.442695
  %v1152 = vpow.pop %v1151
  %v1153 = vmul.f32 %v1128, 1.442695
  %v1154 = vpow.pop %v1153
  %v1155 = vmul.f32 %v1129, 1.442695
  %v1156 = vpow.pop %v1155
  %v1157 = vmul.f32 %v1130, 1.442695
  %v1158 = vpow.pop %v1157
  %v1159 = vmul.f32 %v1131, 1.442695
  %v1160 = vpow.pop %v1159
  %v1161 = vmul.f32 %v1132, 1.442695
  %v1162 = vpow.pop %v1161
  %v1163 = vmul.f32 %v1133, 1.442695
  %v1164 = vpow.pop %v1163
  %v1165 = vmul.f32 %v1134, 1.442695
  %v1166 = vpow.pop %v1165
  %1167 = vadd.xlane.f32.xlu0 %v1136
  %v1168 = vpop.xlane.xlu0 %1167
  %1169 = vadd.xlane.f32.xlu0 %v1138
  %v1170 = vpop.xlane.xlu0 %1169
  %1171 = vadd.xlane.f32.xlu0 %v1140
  %v1172 = vpop.xlane.xlu0 %1171
  %1173 = vadd.xlane.f32.xlu0 %v1142
  %v1174 = vpop.xlane.xlu0 %1173
  %1175 = vadd.xlane.f32.xlu0 %v1144
  %v1176 = vpop.xlane.xlu0 %1175
  %1177 = vadd.xlane.f32.xlu0 %v1146
  %v1178 = vpop.xlane.xlu0 %1177
  %1179 = vadd.xlane.f32.xlu0 %v1148
  %v1180 = vpop.xlane.xlu0 %1179
  %1181 = vadd.xlane.f32.xlu0 %v1150
  %v1182 = vpop.xlane.xlu0 %1181
  %1183 = vadd.xlane.f32.xlu0 %v1152
  %v1184 = vpop.xlane.xlu0 %1183
  %1185 = vadd.xlane.f32.xlu0 %v1154
  %v1186 = vpop.xlane.xlu0 %1185
  %1187 = vadd.xlane.f32.xlu0 %v1156
  %v1188 = vpop.xlane.xlu0 %1187
  %1189 = vadd.xlane.f32.xlu0 %v1158
  %v1190 = vpop.xlane.xlu0 %1189
  %1191 = vadd.xlane.f32.xlu0 %v1160
  %v1192 = vpop.xlane.xlu0 %1191
  %1193 = vadd.xlane.f32.xlu0 %v1162
  %v1194 = vpop.xlane.xlu0 %1193
  %1195 = vadd.xlane.f32.xlu0 %v1164
  %v1196 = vpop.xlane.xlu0 %1195
  %1197 = vadd.xlane.f32.xlu0 %v1166
  %v1198 = vpop.xlane.xlu0 %1197
  %v1199 = vrcp.pop %v1168
  %v1200 = vrcp.pop %v1170
  %v1201 = vrcp.pop %v1172
  %v1202 = vrcp.pop %v1174
  %v1203 = vrcp.pop %v1176
  %v1204 = vrcp.pop %v1178
  %v1205 = vrcp.pop %v1180
  %v1206 = vrcp.pop %v1182
  %v1207 = vrcp.pop %v1184
  %v1208 = vrcp.pop %v1186
  %v1209 = vrcp.pop %v1188
  %v1210 = vrcp.pop %v1190
  %v1211 = vrcp.pop %v1192
  %v1212 = vrcp.pop %v1194
  %v1213 = vrcp.pop %v1196
  %v1214 = vrcp.pop %v1198
  %v1215 = vmul.f32 %v1136, %v1199
  %v1216 = vmul.f32 %v1138, %v1200
  %v1217 = vmul.f32 %v1140, %v1201
  %v1218 = vmul.f32 %v1142, %v1202
  %v1219 = vmul.f32 %v1144, %v1203
  %v1220 = vmul.f32 %v1146, %v1204
  %v1221 = vmul.f32 %v1148, %v1205
  %v1222 = vmul.f32 %v1150, %v1206
  %v1223 = vmul.f32 %v1152, %v1207
  %v1224 = vmul.f32 %v1154, %v1208
  %v1225 = vmul.f32 %v1156, %v1209
  %v1226 = vmul.f32 %v1158, %v1210
  %v1227 = vmul.f32 %v1160, %v1211
  %v1228 = vmul.f32 %v1162, %v1212
  %v1229 = vmul.f32 %v1164, %v1213
  %v1230 = vmul.f32 %v1166, %v1214
  %1231 = vrot.lane.b32.xlu0 %v735, 96
  %v1232 = vpop.permute.xlu0 %1231
  %1233 = vrot.lane.b32.xlu0 %v740, 96
  %v1234 = vpop.permute.xlu0 %1233
  %1235 = vrot.lane.b32.xlu0 %v745, 96
  %v1236 = vpop.permute.xlu0 %1235
  %1237 = vrot.lane.b32.xlu0 %v750, 96
  %v1238 = vpop.permute.xlu0 %1237
  %1239 = vrot.lane.b32.xlu0 %v755, 96
  %v1240 = vpop.permute.xlu0 %1239
  %1241 = vrot.lane.b32.xlu0 %v760, 96
  %v1242 = vpop.permute.xlu0 %1241
  %1243 = vrot.lane.b32.xlu0 %v765, 96
  %v1244 = vpop.permute.xlu0 %1243
  %1245 = vrot.lane.b32.xlu0 %v770, 96
  %v1246 = vpop.permute.xlu0 %1245
  %1247 = vrot.lane.b32.xlu0 %v775, 96
  %v1248 = vpop.permute.xlu0 %1247
  %1249 = vrot.lane.b32.xlu0 %v780, 96
  %v1250 = vpop.permute.xlu0 %1249
  %1251 = vrot.lane.b32.xlu0 %v785, 96
  %v1252 = vpop.permute.xlu0 %1251
  %1253 = vrot.lane.b32.xlu0 %v790, 96
  %v1254 = vpop.permute.xlu0 %1253
  %1255 = vrot.lane.b32.xlu0 %v795, 96
  %v1256 = vpop.permute.xlu0 %1255
  %1257 = vrot.lane.b32.xlu0 %v800, 96
  %v1258 = vpop.permute.xlu0 %1257
  %1259 = vrot.lane.b32.xlu0 %v805, 96
  %v1260 = vpop.permute.xlu0 %1259
  %1261 = vrot.lane.b32.xlu0 %v810, 96
  %v1262 = vpop.permute.xlu0 %1261
  %1279 = vmatprep.subr.mxu0 0.0
  %1280 = vmatpush1.msra.mxu0 %v1232
  %1281 = vmatprep.subr.mxu0 0.0
  %1282 = vmatpush1.msra.mxu0 %v1234
  %1283 = vmatprep.subr.mxu0 0.0
  %1284 = vmatpush1.msra.mxu0 %v1236
  %1285 = vmatprep.subr.mxu0 0.0
  %1286 = vmatpush1.msra.mxu0 %v1238
  %1287 = vmatprep.subr.mxu0 0.0
  %1288 = vmatpush1.msra.mxu0 %v1240
  %1289 = vmatprep.subr.mxu0 0.0
  %1290 = vmatpush1.msra.mxu0 %v1242
  %1291 = vmatprep.subr.mxu0 0.0
  %1292 = vmatpush1.msra.mxu0 %v1244
  %1293 = vmatprep.subr.mxu0 0.0
  %1294 = vmatpush1.msra.mxu0 %v1246
  %1295 = vmatprep.subr.mxu0 0.0
  %1296 = vmatpush1.msra.mxu0 %v1248
  %1297 = vmatprep.subr.mxu0 0.0
  %1298 = vmatpush1.msra.mxu0 %v1250
  %1299 = vmatprep.subr.mxu0 0.0
  %1300 = vmatpush1.msra.mxu0 %v1252
  %1301 = vmatprep.subr.mxu0 0.0
  %1302 = vmatpush1.msra.mxu0 %v1254
  %1303 = vmatprep.subr.mxu0 0.0
  %1304 = vmatpush1.msra.mxu0 %v1256
  %1305 = vmatprep.subr.mxu0 0.0
  %1306 = vmatpush1.msra.mxu0 %v1258
  %1307 = vmatprep.subr.mxu0 0.0
  %1308 = vmatpush1.msra.mxu0 %v1260
  %1309 = vmatprep.subr.mxu0 0.0
  %1310 = vmatpush1.msra.mxu0 %v1262
  %1311 = vmatprep.subr.mxu0 0.0
  %1312 = vmatpush1.msra.mxu0 0.0
  %1313 = vmatprep.subr.mxu0 0.0
  %1314 = vmatpush1.msra.mxu0 0.0
  %1315 = vmatprep.subr.mxu0 0.0
  %1316 = vmatpush1.msra.mxu0 0.0
  %1317 = vmatprep.subr.mxu0 0.0
  %1318 = vmatpush1.msra.mxu0 0.0
  %1319 = vmatprep.subr.mxu0 0.0
  %1320 = vmatpush1.msra.mxu0 0.0
  %1321 = vmatprep.subr.mxu0 0.0
  %1322 = vmatpush1.msra.mxu0 0.0
  %1323 = vmatprep.subr.mxu0 0.0
  %1324 = vmatpush1.msra.mxu0 0.0
  %1325 = vmatprep.subr.mxu0 0.0
  %1326 = vmatpush1.msra.mxu0 0.0
  %1327 = vmatprep.subr.mxu0 0.0
  %1328 = vmatpush1.msra.mxu0 0.0
  %1329 = vmatprep.subr.mxu0 0.0
  %1330 = vmatpush1.msra.mxu0 0.0
  %1331 = vmatprep.subr.mxu0 0.0
  %1332 = vmatpush1.msra.mxu0 0.0
  %1333 = vmatprep.subr.mxu0 0.0
  %1334 = vmatpush1.msra.mxu0 0.0
  %1335 = vmatprep.subr.mxu0 0.0
  %1336 = vmatpush1.msra.mxu0 0.0
  %1337 = vmatprep.subr.mxu0 0.0
  %1338 = vmatpush1.msra.mxu0 0.0
  %1339 = vmatprep.subr.mxu0 0.0
  %1340 = vmatpush1.msra.mxu0 0.0
  %1341 = vmatprep.subr.mxu0 0.0
  %1342 = vmatpush1.msra.mxu0 0.0
  %1343 = vmatprep.mubr.f32.mxu0 0.0
  %1344 = vmatmul.mubr.f32.gmra.mrb[0].mxu0 %v1215
  %v1345 = vpop.f32.mrb[0].mxu0
  %v1346 = vadd.f32 0.0, %v1345
  %v1347 = vpop.f32.mrb[0].mxu0
  %1348 = vmatprep.mubr.f32.mxu0 0.0
  %1349 = vmatmul.mubr.f32.gmra.mrb[0].mxu0 %v1216
  %v1350 = vpop.f32.mrb[0].mxu0
  %v1351 = vadd.f32 0.0, %v1350
  %v1352 = vpop.f32.mrb[0].mxu0
  %1353 = vmatprep.mubr.f32.mxu0 0.0
  %1354 = vmatmul.mubr.f32.gmra.mrb[0].mxu0 %v1217
  %v1355 = vpop.f32.mrb[0].mxu0
  %v1356 = vadd.f32 0.0, %v1355
  %v1357 = vpop.f32.mrb[0].mxu0
  %1358 = vmatprep.mubr.f32.mxu0 0.0
  %1359 = vmatmul.mubr.f32.gmra.mrb[0].mxu0 %v1218
  %v1360 = vpop.f32.mrb[0].mxu0
  %v1361 = vadd.f32 0.0, %v1360
  %v1362 = vpop.f32.mrb[0].mxu0
  %1363 = vmatprep.mubr.f32.mxu0 0.0
  %1364 = vmatmul.mubr.f32.gmra.mrb[0].mxu0 %v1219
  %v1365 = vpop.f32.mrb[0].mxu0
  %v1366 = vadd.f32 0.0, %v1365
  %v1367 = vpop.f32.mrb[0].mxu0
  %1368 = vmatprep.mubr.f32.mxu0 0.0
  %1369 = vmatmul.mubr.f32.gmra.mrb[0].mxu0 %v1220
  %v1370 = vpop.f32.mrb[0].mxu0
  %v1371 = vadd.f32 0.0, %v1370
  %v1372 = vpop.f32.mrb[0].mxu0
  %1373 = vmatprep.mubr.f32.mxu0 0.0
  %1374 = vmatmul.mubr.f32.gmra.mrb[0].mxu0 %v1221
  %v1375 = vpop.f32.mrb[0].mxu0
  %v1376 = vadd.f32 0.0, %v1375
  %v1377 = vpop.f32.mrb[0].mxu0
  %1378 = vmatprep.mubr.f32.mxu0 0.0
  %1379 = vmatmul.mubr.f32.gmra.mrb[0].mxu0 %v1222
  %v1380 = vpop.f32.mrb[0].mxu0
  %v1381 = vadd.f32 0.0, %v1380
  %v1382 = vpop.f32.mrb[0].mxu0
  %1383 = vmatprep.mubr.f32.mxu0 0.0
  %1384 = vmatmul.mubr.f32.gmra.mrb[0].mxu0 %v1223
  %v1385 = vpop.f32.mrb[0].mxu0
  %v1386 = vadd.f32 0.0, %v1385
  %v1387 = vpop.f32.mrb[0].mxu0
  %1388 = vmatprep.mubr.f32.mxu0 0.0
  %1389 = vmatmul.mubr.f32.gmra.mrb[0].mxu0 %v1224
  %v1390 = vpop.f32.mrb[0].mxu0
  %v1391 = vadd.f32 0.0, %v1390
  %v1392 = vpop.f32.mrb[0].mxu0
  %1393 = vmatprep.mubr.f32.mxu0 0.0
  %1394 = vmatmul.mubr.f32.gmra.mrb[0].mxu0 %v1225
  %v1395 = vpop.f32.mrb[0].mxu0
  %v1396 = vadd.f32 0.0, %v1395
  %v1397 = vpop.f32.mrb[0].mxu0
  %1398 = vmatprep.mubr.f32.mxu0 0.0
  %1399 = vmatmul.mubr.f32.gmra.mrb[0].mxu0 %v1226
  %v1400 = vpop.f32.mrb[0].mxu0
  %v1401 = vadd.f32 0.0, %v1400
  %v1402 = vpop.f32.mrb[0].mxu0
  %1403 = vmatprep.mubr.f32.mxu0 0.0
  %1404 = vmatmul.mubr.f32.gmra.mrb[0].mxu0 %v1227
  %v1405 = vpop.f32.mrb[0].mxu0
  %v1406 = vadd.f32 0.0, %v1405
  %v1407 = vpop.f32.mrb[0].mxu0
  %1408 = vmatprep.mubr.f32.mxu0 0.0
  %1409 = vmatmul.mubr.f32.gmra.mrb[0].mxu0 %v1228
  %v1410 = vpop.f32.mrb[0].mxu0
  %v1411 = vadd.f32 0.0, %v1410
  %v1412 = vpop.f32.mrb[0].mxu0
  %1413 = vmatprep.mubr.f32.mxu0 0.0
  %1414 = vmatmul.mubr.f32.gmra.mrb[0].mxu0 %v1229
  %v1415 = vpop.f32.mrb[0].mxu0
  %v1416 = vadd.f32 0.0, %v1415
  %v1417 = vpop.f32.mrb[0].mxu0
  %1418 = vmatprep.mubr.f32.mxu0 0.0
  %1419 = vmatmul.mubr.f32.gmra.mrb[0].mxu0 %v1230
  %v1420 = vpop.f32.mrb[0].mxu0
  %v1421 = vadd.f32 0.0, %v1420
  %v1422 = vpop.f32.mrb[0].mxu0
  %1423 = vdwg.mxu0
  %v1424 = vld [vmem:[%s4] sm:$0xff]
  %v1425 = vld [vmem:[%s4 + $0x8] sm:$0xff]
  %v1427 = vsel %vm861, %v1346, 0
  %v1430 = vsel %vm861, %v1351, 0
  %v1433 = vsel %vm861, %v1356, 0
  %v1436 = vsel %vm861, %v1361, 0
  %v1439 = vsel %vm861, %v1366, 0
  %v1442 = vsel %vm861, %v1371, 0
  %v1445 = vsel %vm861, %v1376, 0
  %v1448 = vsel %vm861, %v1381, 0
  %v1451 = vsel %vm861, %v1386, 0
  %v1454 = vsel %vm861, %v1391, 0
  %v1457 = vsel %vm861, %v1396, 0
  %v1460 = vsel %vm861, %v1401, 0
  %v1463 = vsel %vm861, %v1406, 0
  %v1466 = vsel %vm861, %v1411, 0
  %v1469 = vsel %vm861, %v1416, 0
  %v1472 = vsel %vm861, %v1421, 0
  %1474 = vmatprep.subr.mxu0 0.0
  %1475 = vmatpush1.msra.mxu0 %v1424
  %1476 = vmatprep.subr.mxu0 0.0
  %1477 = vmatpush1.msra.mxu0 %v1425
  %1478 = vmatprep.subr.mxu0 0.0
  %1479 = vmatpush1.msra.mxu0 0.0
  %1480 = vmatprep.subr.mxu0 0.0
  %1481 = vmatpush1.msra.mxu0 0.0
  %1482 = vmatprep.subr.mxu0 0.0
  %1483 = vmatpush1.msra.mxu0 0.0
  %1484 = vmatprep.subr.mxu0 0.0
  %1485 = vmatpush1.msra.mxu0 0.0
  %1486 = vmatprep.subr.mxu0 0.0
  %1487 = vmatpush1.msra.mxu0 0.0
  %1488 = vmatprep.subr.mxu0 0.0
  %1489 = vmatpush1.msra.mxu0 0.0
  %1490 = vmatprep.subr.mxu0 0.0
  %1491 = vmatpush1.msra.mxu0 0.0
  %1492 = vmatprep.subr.mxu0 0.0
  %1493 = vmatpush1.msra.mxu0 0.0
  %1494 = vmatprep.subr.mxu0 0.0
  %1495 = vmatpush1.msra.mxu0 0.0
  %1496 = vmatprep.subr.mxu0 0.0
  %1497 = vmatpush1.msra.mxu0 0.0
  %1498 = vmatprep.subr.mxu0 0.0
  %1499 = vmatpush1.msra.mxu0 0.0
  %1500 = vmatprep.subr.mxu0 0.0
  %1501 = vmatpush1.msra.mxu0 0.0
  %1502 = vmatprep.subr.mxu0 0.0
  %1503 = vmatpush1.msra.mxu0 0.0
  %1504 = vmatprep.subr.mxu0 0.0
  %1505 = vmatpush1.msra.mxu0 0.0
  %1506 = vmatprep.subr.mxu0 0.0
  %1507 = vmatpush1.msra.mxu0 0.0
  %1508 = vmatprep.subr.mxu0 0.0
  %1509 = vmatpush1.msra.mxu0 0.0
  %1510 = vmatprep.subr.mxu0 0.0
  %1511 = vmatpush1.msra.mxu0 0.0
  %1512 = vmatprep.subr.mxu0 0.0
  %1513 = vmatpush1.msra.mxu0 0.0
  %1514 = vmatprep.subr.mxu0 0.0
  %1515 = vmatpush1.msra.mxu0 0.0
  %1516 = vmatprep.subr.mxu0 0.0
  %1517 = vmatpush1.msra.mxu0 0.0
  %1518 = vmatprep.subr.mxu0 0.0
  %1519 = vmatpush1.msra.mxu0 0.0
  %1520 = vmatprep.subr.mxu0 0.0
  %1521 = vmatpush1.msra.mxu0 0.0
  %1522 = vmatprep.subr.mxu0 0.0
  %1523 = vmatpush1.msra.mxu0 0.0
  %1524 = vmatprep.subr.mxu0 0.0
  %1525 = vmatpush1.msra.mxu0 0.0
  %1526 = vmatprep.subr.mxu0 0.0
  %1527 = vmatpush1.msra.mxu0 0.0
  %1528 = vmatprep.subr.mxu0 0.0
  %1529 = vmatpush1.msra.mxu0 0.0
  %1530 = vmatprep.subr.mxu0 0.0
  %1531 = vmatpush1.msra.mxu0 0.0
  %1532 = vmatprep.subr.mxu0 0.0
  %1533 = vmatpush1.msra.mxu0 0.0
  %1534 = vmatprep.subr.mxu0 0.0
  %1535 = vmatpush1.msra.mxu0 0.0
  %1536 = vmatprep.subr.mxu0 0.0
  %1537 = vmatpush1.msra.mxu0 0.0
  %1538 = vmatprep.mubr.f32.mxu0 0.0
  %1539 = vmatmul.mubr.f32.gmra.mrb[0].mxu0 %v1427
  %v1540 = vpop.f32.mrb[0].mxu0
  %v1541 = vadd.f32 0.0, %v1540
  %v1542 = vpop.f32.mrb[0].mxu0
  %1543 = vmatprep.mubr.f32.mxu0 0.0
  %1544 = vmatmul.mubr.f32.gmra.mrb[0].mxu0 %v1430
  %v1545 = vpop.f32.mrb[0].mxu0
  %v1546 = vadd.f32 0.0, %v1545
  %v1547 = vpop.f32.mrb[0].mxu0
  %1548 = vmatprep.mubr.f32.mxu0 0.0
  %1549 = vmatmul.mubr.f32.gmra.mrb[0].mxu0 %v1433
  %v1550 = vpop.f32.mrb[0].mxu0
  %v1551 = vadd.f32 0.0, %v1550
  %v1552 = vpop.f32.mrb[0].mxu0
  %1553 = vmatprep.mubr.f32.mxu0 0.0
  %1554 = vmatmul.mubr.f32.gmra.mrb[0].mxu0 %v1436
  %v1555 = vpop.f32.mrb[0].mxu0
  %v1556 = vadd.f32 0.0, %v1555
  %v1557 = vpop.f32.mrb[0].mxu0
  %1558 = vmatprep.mubr.f32.mxu0 0.0
  %1559 = vmatmul.mubr.f32.gmra.mrb[0].mxu0 %v1439
  %v1560 = vpop.f32.mrb[0].mxu0
  %v1561 = vadd.f32 0.0, %v1560
  %v1562 = vpop.f32.mrb[0].mxu0
  %1563 = vmatprep.mubr.f32.mxu0 0.0
  %1564 = vmatmul.mubr.f32.gmra.mrb[0].mxu0 %v1442
  %v1565 = vpop.f32.mrb[0].mxu0
  %v1566 = vadd.f32 0.0, %v1565
  %v1567 = vpop.f32.mrb[0].mxu0
  %1568 = vmatprep.mubr.f32.mxu0 0.0
  %1569 = vmatmul.mubr.f32.gmra.mrb[0].mxu0 %v1445
  %v1570 = vpop.f32.mrb[0].mxu0
  %v1571 = vadd.f32 0.0, %v1570
  %v1572 = vpop.f32.mrb[0].mxu0
  %1573 = vmatprep.mubr.f32.mxu0 0.0
  %1574 = vmatmul.mubr.f32.gmra.mrb[0].mxu0 %v1448
  %v1575 = vpop.f32.mrb[0].mxu0
  %v1576 = vadd.f32 0.0, %v1575
  %v1577 = vpop.f32.mrb[0].mxu0
  %1578 = vmatprep.mubr.f32.mxu0 0.0
  %1579 = vmatmul.mubr.f32.gmra.mrb[0].mxu0 %v1451
  %v1580 = vpop.f32.mrb[0].mxu0
  %v1581 = vadd.f32 0.0, %v1580
  %v1582 = vpop.f32.mrb[0].mxu0
  %1583 = vmatprep.mubr.f32.mxu0 0.0
  %1584 = vmatmul.mubr.f32.gmra.mrb[0].mxu0 %v1454
  %v1585 = vpop.f32.mrb[0].mxu0
  %v1586 = vadd.f32 0.0, %v1585
  %v1587 = vpop.f32.mrb[0].mxu0
  %1588 = vmatprep.mubr.f32.mxu0 0.0
  %1589 = vmatmul.mubr.f32.gmra.mrb[0].mxu0 %v1457
  %v1590 = vpop.f32.mrb[0].mxu0
  %v1591 = vadd.f32 0.0, %v1590
  %v1592 = vpop.f32.mrb[0].mxu0
  %1593 = vmatprep.mubr.f32.mxu0 0.0
  %1594 = vmatmul.mubr.f32.gmra.mrb[0].mxu0 %v1460
  %v1595 = vpop.f32.mrb[0].mxu0
  %v1596 = vadd.f32 0.0, %v1595
  %v1597 = vpop.f32.mrb[0].mxu0
  %1598 = vmatprep.mubr.f32.mxu0 0.0
  %1599 = vmatmul.mubr.f32.gmra.mrb[0].mxu0 %v1463
  %v1600 = vpop.f32.mrb[0].mxu0
  %v1601 = vadd.f32 0.0, %v1600
  %v1602 = vpop.f32.mrb[0].mxu0
  %1603 = vmatprep.mubr.f32.mxu0 0.0
  %1604 = vmatmul.mubr.f32.gmra.mrb[0].mxu0 %v1466
  %v1605 = vpop.f32.mrb[0].mxu0
  %v1606 = vadd.f32 0.0, %v1605
  %v1607 = vpop.f32.mrb[0].mxu0
  %1608 = vmatprep.mubr.f32.mxu0 0.0
  %1609 = vmatmul.mubr.f32.gmra.mrb[0].mxu0 %v1469
  %v1610 = vpop.f32.mrb[0].mxu0
  %v1611 = vadd.f32 0.0, %v1610
  %v1612 = vpop.f32.mrb[0].mxu0
  %1613 = vmatprep.mubr.f32.mxu0 0.0
  %1614 = vmatmul.mubr.f32.gmra.mrb[0].mxu0 %v1472
  %v1615 = vpop.f32.mrb[0].mxu0
  %v1616 = vadd.f32 0.0, %v1615
  %v1617 = vpop.f32.mrb[0].mxu0
  %1618 = vdwg.mxu0
  %v1619 = vadd.f32 %v182, %v1541
  %v1620 = vadd.f32 %v187, %v1546
  %v1621 = vadd.f32 %v192, %v1551
  %v1622 = vadd.f32 %v197, %v1556
  %v1623 = vadd.f32 %v202, %v1561
  %v1624 = vadd.f32 %v207, %v1566
  %v1625 = vadd.f32 %v212, %v1571
  %v1626 = vadd.f32 %v217, %v1576
  %v1627 = vadd.f32 %v222, %v1581
  %v1628 = vadd.f32 %v227, %v1586
  %v1629 = vadd.f32 %v232, %v1591
  %v1630 = vadd.f32 %v237, %v1596
  %v1631 = vadd.f32 %v242, %v1601
  %v1632 = vadd.f32 %v247, %v1606
  %v1633 = vadd.f32 %v252, %v1611
  %v1634 = vadd.f32 %v257, %v1616
  %v1635 = vld [vmem:[%s5] sm:$0xff]
  %v1636 = vld [vmem:[%s5 + $0x8] sm:$0xff]
  %v1637 = vld [vmem:[%s5 + $0x10] sm:$0xff]
  %v1638 = vld [vmem:[%s5 + $0x18] sm:$0xff]
  %v1639 = vld [vmem:[%s6] sm:$0x1]
  %v1641 = vlaneseq
  %v1642 = vshrl.u32 %v1641, 7
  %v1643 = vsub.s32 0, %v1642
  %v1644 = vrot.slane %v1639, %v1643
  %v1647 = vsel %vm573, %v1619, 0
  %v1650 = vsel %vm573, %v1620, 0
  %v1653 = vsel %vm573, %v1621, 0
  %v1656 = vsel %vm573, %v1622, 0
  %v1659 = vsel %vm573, %v1623, 0
  %v1662 = vsel %vm573, %v1624, 0
  %v1665 = vsel %vm573, %v1625, 0
  %v1668 = vsel %vm573, %v1626, 0
  %v1671 = vsel %vm573, %v1627, 0
  %v1674 = vsel %vm573, %v1628, 0
  %v1677 = vsel %vm573, %v1629, 0
  %v1680 = vsel %vm573, %v1630, 0
  %v1683 = vsel %vm573, %v1631, 0
  %v1686 = vsel %vm573, %v1632, 0
  %v1689 = vsel %vm573, %v1633, 0
  %v1692 = vsel %vm573, %v1634, 0
  %1694 = vmatprep.subr.mxu0 0.0
  %1695 = vmatpush1.msra.mxu0 %v1635
  %1696 = vmatprep.subr.mxu0 0.0
  %1697 = vmatpush1.msra.mxu0 %v1636
  %1698 = vmatprep.subr.mxu0 0.0
  %1699 = vmatpush1.msra.mxu0 %v1637
  %1700 = vmatprep.subr.mxu0 0.0
  %1701 = vmatpush1.msra.mxu0 %v1638
  %1702 = vmatprep.subr.mxu0 0.0
  %1703 = vmatpush1.msra.mxu0 0.0
  %1704 = vmatprep.subr.mxu0 0.0
  %1705 = vmatpush1.msra.mxu0 0.0
  %1706 = vmatprep.subr.mxu0 0.0
  %1707 = vmatpush1.msra.mxu0 0.0
  %1708 = vmatprep.subr.mxu0 0.0
  %1709 = vmatpush1.msra.mxu0 0.0
  %1710 = vmatprep.subr.mxu0 0.0
  %1711 = vmatpush1.msra.mxu0 0.0
  %1712 = vmatprep.subr.mxu0 0.0
  %1713 = vmatpush1.msra.mxu0 0.0
  %1714 = vmatprep.subr.mxu0 0.0
  %1715 = vmatpush1.msra.mxu0 0.0
  %1716 = vmatprep.subr.mxu0 0.0
  %1717 = vmatpush1.msra.mxu0 0.0
  %1718 = vmatprep.subr.mxu0 0.0
  %1719 = vmatpush1.msra.mxu0 0.0
  %1720 = vmatprep.subr.mxu0 0.0
  %1721 = vmatpush1.msra.mxu0 0.0
  %1722 = vmatprep.subr.mxu0 0.0
  %1723 = vmatpush1.msra.mxu0 0.0
  %1724 = vmatprep.subr.mxu0 0.0
  %1725 = vmatpush1.msra.mxu0 0.0
  %1726 = vmatprep.subr.mxu0 0.0
  %1727 = vmatpush1.msra.mxu0 0.0
  %1728 = vmatprep.subr.mxu0 0.0
  %1729 = vmatpush1.msra.mxu0 0.0
  %1730 = vmatprep.subr.mxu0 0.0
  %1731 = vmatpush1.msra.mxu0 0.0
  %1732 = vmatprep.subr.mxu0 0.0
  %1733 = vmatpush1.msra.mxu0 0.0
  %1734 = vmatprep.subr.mxu0 0.0
  %1735 = vmatpush1.msra.mxu0 0.0
  %1736 = vmatprep.subr.mxu0 0.0
  %1737 = vmatpush1.msra.mxu0 0.0
  %1738 = vmatprep.subr.mxu0 0.0
  %1739 = vmatpush1.msra.mxu0 0.0
  %1740 = vmatprep.subr.mxu0 0.0
  %1741 = vmatpush1.msra.mxu0 0.0
  %1742 = vmatprep.subr.mxu0 0.0
  %1743 = vmatpush1.msra.mxu0 0.0
  %1744 = vmatprep.subr.mxu0 0.0
  %1745 = vmatpush1.msra.mxu0 0.0
  %1746 = vmatprep.subr.mxu0 0.0
  %1747 = vmatpush1.msra.mxu0 0.0
  %1748 = vmatprep.subr.mxu0 0.0
  %1749 = vmatpush1.msra.mxu0 0.0
  %1750 = vmatprep.subr.mxu0 0.0
  %1751 = vmatpush1.msra.mxu0 0.0
  %1752 = vmatprep.subr.mxu0 0.0
  %1753 = vmatpush1.msra.mxu0 0.0
  %1754 = vmatprep.subr.mxu0 0.0
  %1755 = vmatpush1.msra.mxu0 0.0
  %1756 = vmatprep.subr.mxu0 0.0
  %1757 = vmatpush1.msra.mxu0 0.0
  %1758 = vmatprep.mubr.f32.mxu0 0.0
  %1759 = vmatmul.mubr.f32.gmra.mrb[0].mxu0 %v1647
  %v1760 = vpop.f32.mrb[0].mxu0
  %v1761 = vadd.f32 %v1644, %v1760
  %v1762 = vpop.f32.mrb[0].mxu0
  %1763 = vmatprep.mubr.f32.mxu0 0.0
  %1764 = vmatmul.mubr.f32.gmra.mrb[0].mxu0 %v1650
  %v1765 = vpop.f32.mrb[0].mxu0
  %v1766 = vadd.f32 %v1644, %v1765
  %v1767 = vpop.f32.mrb[0].mxu0
  %1768 = vmatprep.mubr.f32.mxu0 0.0
  %1769 = vmatmul.mubr.f32.gmra.mrb[0].mxu0 %v1653
  %v1770 = vpop.f32.mrb[0].mxu0
  %v1771 = vadd.f32 %v1644, %v1770
  %v1772 = vpop.f32.mrb[0].mxu0
  %1773 = vmatprep.mubr.f32.mxu0 0.0
  %1774 = vmatmul.mubr.f32.gmra.mrb[0].mxu0 %v1656
  %v1775 = vpop.f32.mrb[0].mxu0
  %v1776 = vadd.f32 %v1644, %v1775
  %v1777 = vpop.f32.mrb[0].mxu0
  %1778 = vmatprep.mubr.f32.mxu0 0.0
  %1779 = vmatmul.mubr.f32.gmra.mrb[0].mxu0 %v1659
  %v1780 = vpop.f32.mrb[0].mxu0
  %v1781 = vadd.f32 %v1644, %v1780
  %v1782 = vpop.f32.mrb[0].mxu0
  %1783 = vmatprep.mubr.f32.mxu0 0.0
  %1784 = vmatmul.mubr.f32.gmra.mrb[0].mxu0 %v1662
  %v1785 = vpop.f32.mrb[0].mxu0
  %v1786 = vadd.f32 %v1644, %v1785
  %v1787 = vpop.f32.mrb[0].mxu0
  %1788 = vmatprep.mubr.f32.mxu0 0.0
  %1789 = vmatmul.mubr.f32.gmra.mrb[0].mxu0 %v1665
  %v1790 = vpop.f32.mrb[0].mxu0
  %v1791 = vadd.f32 %v1644, %v1790
  %v1792 = vpop.f32.mrb[0].mxu0
  %1793 = vmatprep.mubr.f32.mxu0 0.0
  %1794 = vmatmul.mubr.f32.gmra.mrb[0].mxu0 %v1668
  %v1795 = vpop.f32.mrb[0].mxu0
  %v1796 = vadd.f32 %v1644, %v1795
  %v1797 = vpop.f32.mrb[0].mxu0
  %1798 = vmatprep.mubr.f32.mxu0 0.0
  %1799 = vmatmul.mubr.f32.gmra.mrb[0].mxu0 %v1671
  %v1800 = vpop.f32.mrb[0].mxu0
  %v1801 = vadd.f32 %v1644, %v1800
  %v1802 = vpop.f32.mrb[0].mxu0
  %1803 = vmatprep.mubr.f32.mxu0 0.0
  %1804 = vmatmul.mubr.f32.gmra.mrb[0].mxu0 %v1674
  %v1805 = vpop.f32.mrb[0].mxu0
  %v1806 = vadd.f32 %v1644, %v1805
  %v1807 = vpop.f32.mrb[0].mxu0
  %1808 = vmatprep.mubr.f32.mxu0 0.0
  %1809 = vmatmul.mubr.f32.gmra.mrb[0].mxu0 %v1677
  %v1810 = vpop.f32.mrb[0].mxu0
  %v1811 = vadd.f32 %v1644, %v1810
  %v1812 = vpop.f32.mrb[0].mxu0
  %1813 = vmatprep.mubr.f32.mxu0 0.0
  %1814 = vmatmul.mubr.f32.gmra.mrb[0].mxu0 %v1680
  %v1815 = vpop.f32.mrb[0].mxu0
  %v1816 = vadd.f32 %v1644, %v1815
  %v1817 = vpop.f32.mrb[0].mxu0
  %1818 = vmatprep.mubr.f32.mxu0 0.0
  %1819 = vmatmul.mubr.f32.gmra.mrb[0].mxu0 %v1683
  %v1820 = vpop.f32.mrb[0].mxu0
  %v1821 = vadd.f32 %v1644, %v1820
  %v1822 = vpop.f32.mrb[0].mxu0
  %1823 = vmatprep.mubr.f32.mxu0 0.0
  %1824 = vmatmul.mubr.f32.gmra.mrb[0].mxu0 %v1686
  %v1825 = vpop.f32.mrb[0].mxu0
  %v1826 = vadd.f32 %v1644, %v1825
  %v1827 = vpop.f32.mrb[0].mxu0
  %1828 = vmatprep.mubr.f32.mxu0 0.0
  %1829 = vmatmul.mubr.f32.gmra.mrb[0].mxu0 %v1689
  %v1830 = vpop.f32.mrb[0].mxu0
  %v1831 = vadd.f32 %v1644, %v1830
  %v1832 = vpop.f32.mrb[0].mxu0
  %1833 = vmatprep.mubr.f32.mxu0 0.0
  %1834 = vmatmul.mubr.f32.gmra.mrb[0].mxu0 %v1692
  %v1835 = vpop.f32.mrb[0].mxu0
  %v1836 = vadd.f32 %v1644, %v1835
  %v1837 = vpop.f32.mrb[0].mxu0
  %1838 = vdwg.mxu0
  %v1839 = vmax.f32 %v1761, 0.0
  %v1840 = vmax.f32 %v1766, 0.0
  %v1841 = vmax.f32 %v1771, 0.0
  %v1842 = vmax.f32 %v1776, 0.0
  %v1843 = vmax.f32 %v1781, 0.0
  %v1844 = vmax.f32 %v1786, 0.0
  %v1845 = vmax.f32 %v1791, 0.0
  %v1846 = vmax.f32 %v1796, 0.0
  %v1847 = vmax.f32 %v1801, 0.0
  %v1848 = vmax.f32 %v1806, 0.0
  %v1849 = vmax.f32 %v1811, 0.0
  %v1850 = vmax.f32 %v1816, 0.0
  %v1851 = vmax.f32 %v1821, 0.0
  %v1852 = vmax.f32 %v1826, 0.0
  %v1853 = vmax.f32 %v1831, 0.0
  %v1854 = vmax.f32 %v1836, 0.0
  %v1855 = vld [vmem:[%s7] sm:$0xff]
  %v1856 = vld [vmem:[%s7 + $0x8] sm:$0xff]
  %v1857 = vld [vmem:[%s7 + $0x10] sm:$0xff]
  %v1858 = vld [vmem:[%s7 + $0x18] sm:$0xff]
  %v1859 = vld [vmem:[%s8] sm:$0x1]
  %v1861 = vlaneseq
  %v1862 = vshrl.u32 %v1861, 7
  %v1863 = vsub.s32 0, %v1862
  %v1864 = vrot.slane %v1859, %v1863
  %v1867 = vsel %vm573, %v1839, 0
  %v1870 = vsel %vm573, %v1840, 0
  %v1873 = vsel %vm573, %v1841, 0
  %v1876 = vsel %vm573, %v1842, 0
  %v1879 = vsel %vm573, %v1843, 0
  %v1882 = vsel %vm573, %v1844, 0
  %v1885 = vsel %vm573, %v1845, 0
  %v1888 = vsel %vm573, %v1846, 0
  %v1891 = vsel %vm573, %v1847, 0
  %v1894 = vsel %vm573, %v1848, 0
  %v1897 = vsel %vm573, %v1849, 0
  %v1900 = vsel %vm573, %v1850, 0
  %v1903 = vsel %vm573, %v1851, 0
  %v1906 = vsel %vm573, %v1852, 0
  %v1909 = vsel %vm573, %v1853, 0
  %v1912 = vsel %vm573, %v1854, 0
  %1914 = vmatprep.subr.mxu0 0.0
  %1915 = vmatpush1.msra.mxu0 %v1855
  %1916 = vmatprep.subr.mxu0 0.0
  %1917 = vmatpush1.msra.mxu0 %v1856
  %1918 = vmatprep.subr.mxu0 0.0
  %1919 = vmatpush1.msra.mxu0 %v1857
  %1920 = vmatprep.subr.mxu0 0.0
  %1921 = vmatpush1.msra.mxu0 %v1858
  %1922 = vmatprep.subr.mxu0 0.0
  %1923 = vmatpush1.msra.mxu0 0.0
  %1924 = vmatprep.subr.mxu0 0.0
  %1925 = vmatpush1.msra.mxu0 0.0
  %1926 = vmatprep.subr.mxu0 0.0
  %1927 = vmatpush1.msra.mxu0 0.0
  %1928 = vmatprep.subr.mxu0 0.0
  %1929 = vmatpush1.msra.mxu0 0.0
  %1930 = vmatprep.subr.mxu0 0.0
  %1931 = vmatpush1.msra.mxu0 0.0
  %1932 = vmatprep.subr.mxu0 0.0
  %1933 = vmatpush1.msra.mxu0 0.0
  %1934 = vmatprep.subr.mxu0 0.0
  %1935 = vmatpush1.msra.mxu0 0.0
  %1936 = vmatprep.subr.mxu0 0.0
  %1937 = vmatpush1.msra.mxu0 0.0
  %1938 = vmatprep.subr.mxu0 0.0
  %1939 = vmatpush1.msra.mxu0 0.0
  %1940 = vmatprep.subr.mxu0 0.0
  %1941 = vmatpush1.msra.mxu0 0.0
  %1942 = vmatprep.subr.mxu0 0.0
  %1943 = vmatpush1.msra.mxu0 0.0
  %1944 = vmatprep.subr.mxu0 0.0
  %1945 = vmatpush1.msra.mxu0 0.0
  %1946 = vmatprep.subr.mxu0 0.0
  %1947 = vmatpush1.msra.mxu0 0.0
  %1948 = vmatprep.subr.mxu0 0.0
  %1949 = vmatpush1.msra.mxu0 0.0
  %1950 = vmatprep.subr.mxu0 0.0
  %1951 = vmatpush1.msra.mxu0 0.0
  %1952 = vmatprep.subr.mxu0 0.0
  %1953 = vmatpush1.msra.mxu0 0.0
  %1954 = vmatprep.subr.mxu0 0.0
  %1955 = vmatpush1.msra.mxu0 0.0
  %1956 = vmatprep.subr.mxu0 0.0
  %1957 = vmatpush1.msra.mxu0 0.0
  %1958 = vmatprep.subr.mxu0 0.0
  %1959 = vmatpush1.msra.mxu0 0.0
  %1960 = vmatprep.subr.mxu0 0.0
  %1961 = vmatpush1.msra.mxu0 0.0
  %1962 = vmatprep.subr.mxu0 0.0
  %1963 = vmatpush1.msra.mxu0 0.0
  %1964 = vmatprep.subr.mxu0 0.0
  %1965 = vmatpush1.msra.mxu0 0.0
  %1966 = vmatprep.subr.mxu0 0.0
  %1967 = vmatpush1.msra.mxu0 0.0
  %1968 = vmatprep.subr.mxu0 0.0
  %1969 = vmatpush1.msra.mxu0 0.0
  %1970 = vmatprep.subr.mxu0 0.0
  %1971 = vmatpush1.msra.mxu0 0.0
  %1972 = vmatprep.subr.mxu0 0.0
  %1973 = vmatpush1.msra.mxu0 0.0
  %1974 = vmatprep.subr.mxu0 0.0
  %1975 = vmatpush1.msra.mxu0 0.0
  %1976 = vmatprep.subr.mxu0 0.0
  %1977 = vmatpush1.msra.mxu0 0.0
  %1978 = vmatprep.mubr.f32.mxu0 0.0
  %1979 = vmatmul.mubr.f32.gmra.mrb[0].mxu0 %v1867
  %v1980 = vpop.f32.mrb[0].mxu0
  %v1981 = vadd.f32 %v1864, %v1980
  %v1982 = vpop.f32.mrb[0].mxu0
  %1983 = vmatprep.mubr.f32.mxu0 0.0
  %1984 = vmatmul.mubr.f32.gmra.mrb[0].mxu0 %v1870
  %v1985 = vpop.f32.mrb[0].mxu0
  %v1986 = vadd.f32 %v1864, %v1985
  %v1987 = vpop.f32.mrb[0].mxu0
  %1988 = vmatprep.mubr.f32.mxu0 0.0
  %1989 = vmatmul.mubr.f32.gmra.mrb[0].mxu0 %v1873
  %v1990 = vpop.f32.mrb[0].mxu0
  %v1991 = vadd.f32 %v1864, %v1990
  %v1992 = vpop.f32.mrb[0].mxu0
  %1993 = vmatprep.mubr.f32.mxu0 0.0
  %1994 = vmatmul.mubr.f32.gmra.mrb[0].mxu0 %v1876
  %v1995 = vpop.f32.mrb[0].mxu0
  %v1996 = vadd.f32 %v1864, %v1995
  %v1997 = vpop.f32.mrb[0].mxu0
  %1998 = vmatprep.mubr.f32.mxu0 0.0
  %1999 = vmatmul.mubr.f32.gmra.mrb[0].mxu0 %v1879
  %v2000 = vpop.f32.mrb[0].mxu0
  %v2001 = vadd.f32 %v1864, %v2000
  %v2002 = vpop.f32.mrb[0].mxu0
  %2003 = vmatprep.mubr.f32.mxu0 0.0
  %2004 = vmatmul.mubr.f32.gmra.mrb[0].mxu0 %v1882
  %v2005 = vpop.f32.mrb[0].mxu0
  %v2006 = vadd.f32 %v1864, %v2005
  %v2007 = vpop.f32.mrb[0].mxu0
  %2008 = vmatprep.mubr.f32.mxu0 0.0
  %2009 = vmatmul.mubr.f32.gmra.mrb[0].mxu0 %v1885
  %v2010 = vpop.f32.mrb[0].mxu0
  %v2011 = vadd.f32 %v1864, %v2010
  %v2012 = vpop.f32.mrb[0].mxu0
  %2013 = vmatprep.mubr.f32.mxu0 0.0
  %2014 = vmatmul.mubr.f32.gmra.mrb[0].mxu0 %v1888
  %v2015 = vpop.f32.mrb[0].mxu0
  %v2016 = vadd.f32 %v1864, %v2015
  %v2017 = vpop.f32.mrb[0].mxu0
  %2018 = vmatprep.mubr.f32.mxu0 0.0
  %2019 = vmatmul.mubr.f32.gmra.mrb[0].mxu0 %v1891
  %v2020 = vpop.f32.mrb[0].mxu0
  %v2021 = vadd.f32 %v1864, %v2020
  %v2022 = vpop.f32.mrb[0].mxu0
  %2023 = vmatprep.mubr.f32.mxu0 0.0
  %2024 = vmatmul.mubr.f32.gmra.mrb[0].mxu0 %v1894
  %v2025 = vpop.f32.mrb[0].mxu0
  %v2026 = vadd.f32 %v1864, %v2025
  %v2027 = vpop.f32.mrb[0].mxu0
  %2028 = vmatprep.mubr.f32.mxu0 0.0
  %2029 = vmatmul.mubr.f32.gmra.mrb[0].mxu0 %v1897
  %v2030 = vpop.f32.mrb[0].mxu0
  %v2031 = vadd.f32 %v1864, %v2030
  %v2032 = vpop.f32.mrb[0].mxu0
  %2033 = vmatprep.mubr.f32.mxu0 0.0
  %2034 = vmatmul.mubr.f32.gmra.mrb[0].mxu0 %v1900
  %v2035 = vpop.f32.mrb[0].mxu0
  %v2036 = vadd.f32 %v1864, %v2035
  %v2037 = vpop.f32.mrb[0].mxu0
  %2038 = vmatprep.mubr.f32.mxu0 0.0
  %2039 = vmatmul.mubr.f32.gmra.mrb[0].mxu0 %v1903
  %v2040 = vpop.f32.mrb[0].mxu0
  %v2041 = vadd.f32 %v1864, %v2040
  %v2042 = vpop.f32.mrb[0].mxu0
  %2043 = vmatprep.mubr.f32.mxu0 0.0
  %2044 = vmatmul.mubr.f32.gmra.mrb[0].mxu0 %v1906
  %v2045 = vpop.f32.mrb[0].mxu0
  %v2046 = vadd.f32 %v1864, %v2045
  %v2047 = vpop.f32.mrb[0].mxu0
  %2048 = vmatprep.mubr.f32.mxu0 0.0
  %2049 = vmatmul.mubr.f32.gmra.mrb[0].mxu0 %v1909
  %v2050 = vpop.f32.mrb[0].mxu0
  %v2051 = vadd.f32 %v1864, %v2050
  %v2052 = vpop.f32.mrb[0].mxu0
  %2053 = vmatprep.mubr.f32.mxu0 0.0
  %2054 = vmatmul.mubr.f32.gmra.mrb[0].mxu0 %v1912
  %v2055 = vpop.f32.mrb[0].mxu0
  %v2056 = vadd.f32 %v1864, %v2055
  %v2057 = vpop.f32.mrb[0].mxu0
  %2058 = vdwg.mxu0
  %v2059 = vadd.f32 %v1619, %v1981
  %v2060 = vadd.f32 %v1620, %v1986
  %v2061 = vadd.f32 %v1621, %v1991
  %v2062 = vadd.f32 %v1622, %v1996
  %v2063 = vadd.f32 %v1623, %v2001
  %v2064 = vadd.f32 %v1624, %v2006
  %v2065 = vadd.f32 %v1625, %v2011
  %v2066 = vadd.f32 %v1626, %v2016
  %v2067 = vadd.f32 %v1627, %v2021
  %v2068 = vadd.f32 %v1628, %v2026
  %v2069 = vadd.f32 %v1629, %v2031
  %v2070 = vadd.f32 %v1630, %v2036
  %v2071 = vadd.f32 %v1631, %v2041
  %v2072 = vadd.f32 %v1632, %v2046
  %v2073 = vadd.f32 %v1633, %v2051
  %v2074 = vadd.f32 %v1634, %v2056
  %v2075 = vrot.slane %v2059, 7
  %v2076 = vrot.slane %v2060, 7
  %v2077 = vrot.slane %v2061, 7
  %v2078 = vrot.slane %v2062, 7
  %v2079 = vrot.slane %v2063, 7
  %v2080 = vrot.slane %v2064, 7
  %v2081 = vrot.slane %v2065, 7
  %v2082 = vrot.slane %v2066, 7
  %v2083 = vrot.slane %v2067, 7
  %v2084 = vrot.slane %v2068, 7
  %v2085 = vrot.slane %v2069, 7
  %v2086 = vrot.slane %v2070, 7
  %v2087 = vrot.slane %v2071, 7
  %v2088 = vrot.slane %v2072, 7
  %v2089 = vrot.slane %v2073, 7
  %v2090 = vrot.slane %v2074, 7
  %v2091 = vmul.f32 %v2075, %v264
  %v2092 = vmul.f32 %v2076, %v264
  %v2093 = vmul.f32 %v2077, %v264
  %v2094 = vmul.f32 %v2078, %v264
  %v2095 = vmul.f32 %v2079, %v264
  %v2096 = vmul.f32 %v2080, %v264
  %v2097 = vmul.f32 %v2081, %v264
  %v2098 = vmul.f32 %v2082, %v264
  %v2099 = vmul.f32 %v2083, %v264
  %v2100 = vmul.f32 %v2084, %v264
  %v2101 = vmul.f32 %v2085, %v264
  %v2102 = vmul.f32 %v2086, %v264
  %v2103 = vmul.f32 %v2087, %v264
  %v2104 = vmul.f32 %v2088, %v264
  %v2105 = vmul.f32 %v2089, %v264
  %v2106 = vmul.f32 %v2090, %v264
  %v2107 = vrot.slane %v2059, 6
  %v2108 = vrot.slane %v2060, 6
  %v2109 = vrot.slane %v2061, 6
  %v2110 = vrot.slane %v2062, 6
  %v2111 = vrot.slane %v2063, 6
  %v2112 = vrot.slane %v2064, 6
  %v2113 = vrot.slane %v2065, 6
  %v2114 = vrot.slane %v2066, 6
  %v2115 = vrot.slane %v2067, 6
  %v2116 = vrot.slane %v2068, 6
  %v2117 = vrot.slane %v2069, 6
  %v2118 = vrot.slane %v2070, 6
  %v2119 = vrot.slane %v2071, 6
  %v2120 = vrot.slane %v2072, 6
  %v2121 = vrot.slane %v2073, 6
  %v2122 = vrot.slane %v2074, 6
  %v2123 = vmul.f32 %v2107, %v267
  %v2124 = vmul.f32 %v2108, %v267
  %v2125 = vmul.f32 %v2109, %v267
  %v2126 = vmul.f32 %v2110, %v267
  %v2127 = vmul.f32 %v2111, %v267
  %v2128 = vmul.f32 %v2112, %v267
  %v2129 = vmul.f32 %v2113, %v267
  %v2130 = vmul.f32 %v2114, %v267
  %v2131 = vmul.f32 %v2115, %v267
  %v2132 = vmul.f32 %v2116, %v267
  %v2133 = vmul.f32 %v2117, %v267
  %v2134 = vmul.f32 %v2118, %v267
  %v2135 = vmul.f32 %v2119, %v267
  %v2136 = vmul.f32 %v2120, %v267
  %v2137 = vmul.f32 %v2121, %v267
  %v2138 = vmul.f32 %v2122, %v267
  %2155 = vrot.lane.b32.xlu0 %v2091, 32
  %v2156 = vpop.permute.xlu0 %2155
  %2157 = vrot.lane.b32.xlu0 %v2092, 32
  %v2158 = vpop.permute.xlu0 %2157
  %2159 = vrot.lane.b32.xlu0 %v2093, 32
  %v2160 = vpop.permute.xlu0 %2159
  %2161 = vrot.lane.b32.xlu0 %v2094, 32
  %v2162 = vpop.permute.xlu0 %2161
  %2163 = vrot.lane.b32.xlu0 %v2095, 32
  %v2164 = vpop.permute.xlu0 %2163
  %2165 = vrot.lane.b32.xlu0 %v2096, 32
  %v2166 = vpop.permute.xlu0 %2165
  %2167 = vrot.lane.b32.xlu0 %v2097, 32
  %v2168 = vpop.permute.xlu0 %2167
  %2169 = vrot.lane.b32.xlu0 %v2098, 32
  %v2170 = vpop.permute.xlu0 %2169
  %2171 = vrot.lane.b32.xlu0 %v2099, 32
  %v2172 = vpop.permute.xlu0 %2171
  %2173 = vrot.lane.b32.xlu0 %v2100, 32
  %v2174 = vpop.permute.xlu0 %2173
  %2175 = vrot.lane.b32.xlu0 %v2101, 32
  %v2176 = vpop.permute.xlu0 %2175
  %2177 = vrot.lane.b32.xlu0 %v2102, 32
  %v2178 = vpop.permute.xlu0 %2177
  %2179 = vrot.lane.b32.xlu0 %v2103, 32
  %v2180 = vpop.permute.xlu0 %2179
  %2181 = vrot.lane.b32.xlu0 %v2104, 32
  %v2182 = vpop.permute.xlu0 %2181
  %2183 = vrot.lane.b32.xlu0 %v2105, 32
  %v2184 = vpop.permute.xlu0 %2183
  %2185 = vrot.lane.b32.xlu0 %v2106, 32
  %v2186 = vpop.permute.xlu0 %2185
  %2219 = vrot.lane.b32.xlu0 %v2059, 64
  %v2220 = vpop.permute.xlu0 %2219
  %2221 = vrot.lane.b32.xlu0 %v2060, 64
  %v2222 = vpop.permute.xlu0 %2221
  %2223 = vrot.lane.b32.xlu0 %v2061, 64
  %v2224 = vpop.permute.xlu0 %2223
  %2225 = vrot.lane.b32.xlu0 %v2062, 64
  %v2226 = vpop.permute.xlu0 %2225
  %2227 = vrot.lane.b32.xlu0 %v2063, 64
  %v2228 = vpop.permute.xlu0 %2227
  %2229 = vrot.lane.b32.xlu0 %v2064, 64
  %v2230 = vpop.permute.xlu0 %2229
  %2231 = vrot.lane.b32.xlu0 %v2065, 64
  %v2232 = vpop.permute.xlu0 %2231
  %2233 = vrot.lane.b32.xlu0 %v2066, 64
  %v2234 = vpop.permute.xlu0 %2233
  %2235 = vrot.lane.b32.xlu0 %v2067, 64
  %v2236 = vpop.permute.xlu0 %2235
  %2237 = vrot.lane.b32.xlu0 %v2068, 64
  %v2238 = vpop.permute.xlu0 %2237
  %2239 = vrot.lane.b32.xlu0 %v2069, 64
  %v2240 = vpop.permute.xlu0 %2239
  %2241 = vrot.lane.b32.xlu0 %v2070, 64
  %v2242 = vpop.permute.xlu0 %2241
  %2243 = vrot.lane.b32.xlu0 %v2071, 64
  %v2244 = vpop.permute.xlu0 %2243
  %2245 = vrot.lane.b32.xlu0 %v2072, 64
  %v2246 = vpop.permute.xlu0 %2245
  %2247 = vrot.lane.b32.xlu0 %v2073, 64
  %v2248 = vpop.permute.xlu0 %2247
  %2249 = vrot.lane.b32.xlu0 %v2074, 64
  %v2250 = vpop.permute.xlu0 %2249
  %v2267 = vsel %vm573, %v2123, %v2156
  %v2268 = vsel %vm573, %v2124, %v2158
  %v2269 = vsel %vm573, %v2125, %v2160
  %v2270 = vsel %vm573, %v2126, %v2162
  %v2271 = vsel %vm573, %v2127, %v2164
  %v2272 = vsel %vm573, %v2128, %v2166
  %v2273 = vsel %vm573, %v2129, %v2168
  %v2274 = vsel %vm573, %v2130, %v2170
  %v2275 = vsel %vm573, %v2131, %v2172
  %v2276 = vsel %vm573, %v2132, %v2174
  %v2277 = vsel %vm573, %v2133, %v2176
  %v2278 = vsel %vm573, %v2134, %v2178
  %v2279 = vsel %vm573, %v2135, %v2180
  %v2280 = vsel %vm573, %v2136, %v2182
  %v2281 = vsel %vm573, %v2137, %v2184
  %v2282 = vsel %vm573, %v2138, %v2186
  %v2283 = vsel %vm590, %v2267, %v2220
  %v2284 = vsel %vm590, %v2268, %v2222
  %v2285 = vsel %vm590, %v2269, %v2224
  %v2286 = vsel %vm590, %v2270, %v2226
  %v2287 = vsel %vm590, %v2271, %v2228
  %v2288 = vsel %vm590, %v2272, %v2230
  %v2289 = vsel %vm590, %v2273, %v2232
  %v2290 = vsel %vm590, %v2274, %v2234
  %v2291 = vsel %vm590, %v2275, %v2236
  %v2292 = vsel %vm590, %v2276, %v2238
  %v2293 = vsel %vm590, %v2277, %v2240
  %v2294 = vsel %vm590, %v2278, %v2242
  %v2295 = vsel %vm590, %v2279, %v2244
  %v2296 = vsel %vm590, %v2280, %v2246
  %v2297 = vsel %vm590, %v2281, %v2248
  %v2298 = vsel %vm590, %v2282, %v2250
  %s2299 = scalar_lea.vmem %s3, 96
  %v2300 = vld [vmem:[%s2299] sm:$0xff]
  %v2301 = vld [vmem:[%s2299 + $0x8] sm:$0xff]
  %v2302 = vld [vmem:[%s2299 + $0x10] sm:$0xff]
  %v2303 = vld [vmem:[%s2299 + $0x18] sm:$0xff]
  %v2304 = vld [vmem:[%s2299 + $0x20] sm:$0xff]
  %v2305 = vld [vmem:[%s2299 + $0x28] sm:$0xff]
  %v2306 = vld [vmem:[%s2299 + $0x30] sm:$0xff]
  %v2307 = vld [vmem:[%s2299 + $0x38] sm:$0xff]
  %v2308 = vld [vmem:[%s2299 + $0x40] sm:$0xff]
  %v2309 = vld [vmem:[%s2299 + $0x48] sm:$0xff]
  %v2310 = vld [vmem:[%s2299 + $0x50] sm:$0xff]
  %v2311 = vld [vmem:[%s2299 + $0x58] sm:$0xff]
  %v2313 = vsel %vm619, %v2283, 0
  %v2316 = vsel %vm619, %v2284, 0
  %v2319 = vsel %vm619, %v2285, 0
  %v2322 = vsel %vm619, %v2286, 0
  %v2325 = vsel %vm619, %v2287, 0
  %v2328 = vsel %vm619, %v2288, 0
  %v2331 = vsel %vm619, %v2289, 0
  %v2334 = vsel %vm619, %v2290, 0
  %v2337 = vsel %vm619, %v2291, 0
  %v2340 = vsel %vm619, %v2292, 0
  %v2343 = vsel %vm619, %v2293, 0
  %v2346 = vsel %vm619, %v2294, 0
  %v2349 = vsel %vm619, %v2295, 0
  %v2352 = vsel %vm619, %v2296, 0
  %v2355 = vsel %vm619, %v2297, 0
  %v2358 = vsel %vm619, %v2298, 0
  %2360 = vmatprep.subr.mxu0 0.0
  %2361 = vmatpush1.msra.mxu0 %v2300
  %2362 = vmatprep.subr.mxu0 0.0
  %2363 = vmatpush1.msra.mxu0 %v2301
  %2364 = vmatprep.subr.mxu0 0.0
  %2365 = vmatpush1.msra.mxu0 %v2302
  %2366 = vmatprep.subr.mxu0 0.0
  %2367 = vmatpush1.msra.mxu0 %v2303
  %2368 = vmatprep.subr.mxu0 0.0
  %2369 = vmatpush1.msra.mxu0 %v2304
  %2370 = vmatprep.subr.mxu0 0.0
  %2371 = vmatpush1.msra.mxu0 %v2305
  %2372 = vmatprep.subr.mxu0 0.0
  %2373 = vmatpush1.msra.mxu0 %v2306
  %2374 = vmatprep.subr.mxu0 0.0
  %2375 = vmatpush1.msra.mxu0 %v2307
  %2376 = vmatprep.subr.mxu0 0.0
  %2377 = vmatpush1.msra.mxu0 %v2308
  %2378 = vmatprep.subr.mxu0 0.0
  %2379 = vmatpush1.msra.mxu0 %v2309
  %2380 = vmatprep.subr.mxu0 0.0
  %2381 = vmatpush1.msra.mxu0 %v2310
  %2382 = vmatprep.subr.mxu0 0.0
  %2383 = vmatpush1.msra.mxu0 %v2311
  %2384 = vmatprep.subr.mxu0 0.0
  %2385 = vmatpush1.msra.mxu0 0.0
  %2386 = vmatprep.subr.mxu0 0.0
  %2387 = vmatpush1.msra.mxu0 0.0
  %2388 = vmatprep.subr.mxu0 0.0
  %2389 = vmatpush1.msra.mxu0 0.0
  %2390 = vmatprep.subr.mxu0 0.0
  %2391 = vmatpush1.msra.mxu0 0.0
  %2392 = vmatprep.subr.mxu0 0.0
  %2393 = vmatpush1.msra.mxu0 0.0
  %2394 = vmatprep.subr.mxu0 0.0
  %2395 = vmatpush1.msra.mxu0 0.0
  %2396 = vmatprep.subr.mxu0 0.0
  %2397 = vmatpush1.msra.mxu0 0.0
  %2398 = vmatprep.subr.mxu0 0.0
  %2399 = vmatpush1.msra.mxu0 0.0
  %2400 = vmatprep.subr.mxu0 0.0
  %2401 = vmatpush1.msra.mxu0 0.0
  %2402 = vmatprep.subr.mxu0 0.0
  %2403 = vmatpush1.msra.mxu0 0.0
  %2404 = vmatprep.subr.mxu0 0.0
  %2405 = vmatpush1.msra.mxu0 0.0
  %2406 = vmatprep.subr.mxu0 0.0
  %2407 = vmatpush1.msra.mxu0 0.0
  %2408 = vmatprep.subr.mxu0 0.0
  %2409 = vmatpush1.msra.mxu0 0.0
  %2410 = vmatprep.subr.mxu0 0.0
  %2411 = vmatpush1.msra.mxu0 0.0
  %2412 = vmatprep.subr.mxu0 0.0
  %2413 = vmatpush1.msra.mxu0 0.0
  %2414 = vmatprep.subr.mxu0 0.0
  %2415 = vmatpush1.msra.mxu0 0.0
  %2416 = vmatprep.subr.mxu0 0.0
  %2417 = vmatpush1.msra.mxu0 0.0
  %2418 = vmatprep.subr.mxu0 0.0
  %2419 = vmatpush1.msra.mxu0 0.0
  %2420 = vmatprep.subr.mxu0 0.0
  %2421 = vmatpush1.msra.mxu0 0.0
  %2422 = vmatprep.subr.mxu0 0.0
  %2423 = vmatpush1.msra.mxu0 0.0
  %2424 = vmatprep.mubr.f32.mxu0 0.0
  %2425 = vmatmul.mubr.f32.gmra.mrb[0].mxu0 %v2313
  %v2426 = vpop.f32.mrb[0].mxu0
  %v2427 = vadd.f32 0.0, %v2426
  %v2428 = vpop.f32.mrb[0].mxu0
  %2429 = vmatprep.mubr.f32.mxu0 0.0
  %2430 = vmatmul.mubr.f32.gmra.mrb[0].mxu0 %v2316
  %v2431 = vpop.f32.mrb[0].mxu0
  %v2432 = vadd.f32 0.0, %v2431
  %v2433 = vpop.f32.mrb[0].mxu0
  %2434 = vmatprep.mubr.f32.mxu0 0.0
  %2435 = vmatmul.mubr.f32.gmra.mrb[0].mxu0 %v2319
  %v2436 = vpop.f32.mrb[0].mxu0
  %v2437 = vadd.f32 0.0, %v2436
  %v2438 = vpop.f32.mrb[0].mxu0
  %2439 = vmatprep.mubr.f32.mxu0 0.0
  %2440 = vmatmul.mubr.f32.gmra.mrb[0].mxu0 %v2322
  %v2441 = vpop.f32.mrb[0].mxu0
  %v2442 = vadd.f32 0.0, %v2441
  %v2443 = vpop.f32.mrb[0].mxu0
  %2444 = vmatprep.mubr.f32.mxu0 0.0
  %2445 = vmatmul.mubr.f32.gmra.mrb[0].mxu0 %v2325
  %v2446 = vpop.f32.mrb[0].mxu0
  %v2447 = vadd.f32 0.0, %v2446
  %v2448 = vpop.f32.mrb[0].mxu0
  %2449 = vmatprep.mubr.f32.mxu0 0.0
  %2450 = vmatmul.mubr.f32.gmra.mrb[0].mxu0 %v2328
  %v2451 = vpop.f32.mrb[0].mxu0
  %v2452 = vadd.f32 0.0, %v2451
  %v2453 = vpop.f32.mrb[0].mxu0
  %2454 = vmatprep.mubr.f32.mxu0 0.0
  %2455 = vmatmul.mubr.f32.gmra.mrb[0].mxu0 %v2331
  %v2456 = vpop.f32.mrb[0].mxu0
  %v2457 = vadd.f32 0.0, %v2456
  %v2458 = vpop.f32.mrb[0].mxu0
  %2459 = vmatprep.mubr.f32.mxu0 0.0
  %2460 = vmatmul.mubr.f32.gmra.mrb[0].mxu0 %v2334
  %v2461 = vpop.f32.mrb[0].mxu0
  %v2462 = vadd.f32 0.0, %v2461
  %v2463 = vpop.f32.mrb[0].mxu0
  %2464 = vmatprep.mubr.f32.mxu0 0.0
  %2465 = vmatmul.mubr.f32.gmra.mrb[0].mxu0 %v2337
  %v2466 = vpop.f32.mrb[0].mxu0
  %v2467 = vadd.f32 0.0, %v2466
  %v2468 = vpop.f32.mrb[0].mxu0
  %2469 = vmatprep.mubr.f32.mxu0 0.0
  %2470 = vmatmul.mubr.f32.gmra.mrb[0].mxu0 %v2340
  %v2471 = vpop.f32.mrb[0].mxu0
  %v2472 = vadd.f32 0.0, %v2471
  %v2473 = vpop.f32.mrb[0].mxu0
  %2474 = vmatprep.mubr.f32.mxu0 0.0
  %2475 = vmatmul.mubr.f32.gmra.mrb[0].mxu0 %v2343
  %v2476 = vpop.f32.mrb[0].mxu0
  %v2477 = vadd.f32 0.0, %v2476
  %v2478 = vpop.f32.mrb[0].mxu0
  %2479 = vmatprep.mubr.f32.mxu0 0.0
  %2480 = vmatmul.mubr.f32.gmra.mrb[0].mxu0 %v2346
  %v2481 = vpop.f32.mrb[0].mxu0
  %v2482 = vadd.f32 0.0, %v2481
  %v2483 = vpop.f32.mrb[0].mxu0
  %2484 = vmatprep.mubr.f32.mxu0 0.0
  %2485 = vmatmul.mubr.f32.gmra.mrb[0].mxu0 %v2349
  %v2486 = vpop.f32.mrb[0].mxu0
  %v2487 = vadd.f32 0.0, %v2486
  %v2488 = vpop.f32.mrb[0].mxu0
  %2489 = vmatprep.mubr.f32.mxu0 0.0
  %2490 = vmatmul.mubr.f32.gmra.mrb[0].mxu0 %v2352
  %v2491 = vpop.f32.mrb[0].mxu0
  %v2492 = vadd.f32 0.0, %v2491
  %v2493 = vpop.f32.mrb[0].mxu0
  %2494 = vmatprep.mubr.f32.mxu0 0.0
  %2495 = vmatmul.mubr.f32.gmra.mrb[0].mxu0 %v2355
  %v2496 = vpop.f32.mrb[0].mxu0
  %v2497 = vadd.f32 0.0, %v2496
  %v2498 = vpop.f32.mrb[0].mxu0
  %2499 = vmatprep.mubr.f32.mxu0 0.0
  %2500 = vmatmul.mubr.f32.gmra.mrb[0].mxu0 %v2358
  %v2501 = vpop.f32.mrb[0].mxu0
  %v2502 = vadd.f32 0.0, %v2501
  %v2503 = vpop.f32.mrb[0].mxu0
  %2504 = vdwg.mxu0
  %2521 = vrot.lane.b32.xlu0 %v2427, 112
  %v2522 = vpop.permute.xlu0 %2521
  %2523 = vrot.lane.b32.xlu0 %v2432, 112
  %v2524 = vpop.permute.xlu0 %2523
  %2525 = vrot.lane.b32.xlu0 %v2437, 112
  %v2526 = vpop.permute.xlu0 %2525
  %2527 = vrot.lane.b32.xlu0 %v2442, 112
  %v2528 = vpop.permute.xlu0 %2527
  %2529 = vrot.lane.b32.xlu0 %v2447, 112
  %v2530 = vpop.permute.xlu0 %2529
  %2531 = vrot.lane.b32.xlu0 %v2452, 112
  %v2532 = vpop.permute.xlu0 %2531
  %2533 = vrot.lane.b32.xlu0 %v2457, 112
  %v2534 = vpop.permute.xlu0 %2533
  %2535 = vrot.lane.b32.xlu0 %v2462, 112
  %v2536 = vpop.permute.xlu0 %2535
  %2537 = vrot.lane.b32.xlu0 %v2467, 112
  %v2538 = vpop.permute.xlu0 %2537
  %2539 = vrot.lane.b32.xlu0 %v2472, 112
  %v2540 = vpop.permute.xlu0 %2539
  %2541 = vrot.lane.b32.xlu0 %v2477, 112
  %v2542 = vpop.permute.xlu0 %2541
  %2543 = vrot.lane.b32.xlu0 %v2482, 112
  %v2544 = vpop.permute.xlu0 %2543
  %2545 = vrot.lane.b32.xlu0 %v2487, 112
  %v2546 = vpop.permute.xlu0 %2545
  %2547 = vrot.lane.b32.xlu0 %v2492, 112
  %v2548 = vpop.permute.xlu0 %2547
  %2549 = vrot.lane.b32.xlu0 %v2497, 112
  %v2550 = vpop.permute.xlu0 %2549
  %2551 = vrot.lane.b32.xlu0 %v2502, 112
  %v2552 = vpop.permute.xlu0 %2551
  %v2553 = vsel %vm861, %v2427, 0
  %v2555 = vsel %vm861, %v2432, 0
  %v2557 = vsel %vm861, %v2437, 0
  %v2559 = vsel %vm861, %v2442, 0
  %v2561 = vsel %vm861, %v2447, 0
  %v2563 = vsel %vm861, %v2452, 0
  %v2565 = vsel %vm861, %v2457, 0
  %v2567 = vsel %vm861, %v2462, 0
  %v2569 = vsel %vm861, %v2467, 0
  %v2571 = vsel %vm861, %v2472, 0
  %v2573 = vsel %vm861, %v2477, 0
  %v2575 = vsel %vm861, %v2482, 0
  %v2577 = vsel %vm861, %v2487, 0
  %v2579 = vsel %vm861, %v2492, 0
  %v2581 = vsel %vm861, %v2497, 0
  %v2583 = vsel %vm861, %v2502, 0
  %v2585 = vsel %vm861, %v2522, 0
  %v2587 = vsel %vm861, %v2524, 0
  %v2589 = vsel %vm861, %v2526, 0
  %v2591 = vsel %vm861, %v2528, 0
  %v2593 = vsel %vm861, %v2530, 0
  %v2595 = vsel %vm861, %v2532, 0
  %v2597 = vsel %vm861, %v2534, 0
  %v2599 = vsel %vm861, %v2536, 0
  %v2601 = vsel %vm861, %v2538, 0
  %v2603 = vsel %vm861, %v2540, 0
  %v2605 = vsel %vm861, %v2542, 0
  %v2607 = vsel %vm861, %v2544, 0
  %v2609 = vsel %vm861, %v2546, 0
  %v2611 = vsel %vm861, %v2548, 0
  %v2613 = vsel %vm861, %v2550, 0
  %v2615 = vsel %vm861, %v2552, 0
  %2617 = vmatprep.subr.mxu0 0.0
  %2618 = vmatpush1.xpose.msra.mxu0 %v2585
  %2619 = vmatprep.subr.mxu0 0.0
  %2620 = vmatpush1.xpose.msra.mxu0 %v2587
  %2621 = vmatprep.subr.mxu0 0.0
  %2622 = vmatpush1.xpose.msra.mxu0 %v2589
  %2623 = vmatprep.subr.mxu0 0.0
  %2624 = vmatpush1.xpose.msra.mxu0 %v2591
  %2625 = vmatprep.subr.mxu0 0.0
  %2626 = vmatpush1.xpose.msra.mxu0 %v2593
  %2627 = vmatprep.subr.mxu0 0.0
  %2628 = vmatpush1.xpose.msra.mxu0 %v2595
  %2629 = vmatprep.subr.mxu0 0.0
  %2630 = vmatpush1.xpose.msra.mxu0 %v2597
  %2631 = vmatprep.subr.mxu0 0.0
  %2632 = vmatpush1.xpose.msra.mxu0 %v2599
  %2633 = vmatprep.subr.mxu0 0.0
  %2634 = vmatpush1.xpose.msra.mxu0 %v2601
  %2635 = vmatprep.subr.mxu0 0.0
  %2636 = vmatpush1.xpose.msra.mxu0 %v2603
  %2637 = vmatprep.subr.mxu0 0.0
  %2638 = vmatpush1.xpose.msra.mxu0 %v2605
  %2639 = vmatprep.subr.mxu0 0.0
  %2640 = vmatpush1.xpose.msra.mxu0 %v2607
  %2641 = vmatprep.subr.mxu0 0.0
  %2642 = vmatpush1.xpose.msra.mxu0 %v2609
  %2643 = vmatprep.subr.mxu0 0.0
  %2644 = vmatpush1.xpose.msra.mxu0 %v2611
  %2645 = vmatprep.subr.mxu0 0.0
  %2646 = vmatpush1.xpose.msra.mxu0 %v2613
  %2647 = vmatprep.subr.mxu0 0.0
  %2648 = vmatpush1.xpose.msra.mxu0 %v2615
  %2649 = vmatprep.subr.mxu0 0.0
  %2650 = vmatpush1.xpose.msra.mxu0 0.0
  %2651 = vmatprep.subr.mxu0 0.0
  %2652 = vmatpush1.xpose.msra.mxu0 0.0
  %2653 = vmatprep.subr.mxu0 0.0
  %2654 = vmatpush1.xpose.msra.mxu0 0.0
  %2655 = vmatprep.subr.mxu0 0.0
  %2656 = vmatpush1.xpose.msra.mxu0 0.0
  %2657 = vmatprep.subr.mxu0 0.0
  %2658 = vmatpush1.xpose.msra.mxu0 0.0
  %2659 = vmatprep.subr.mxu0 0.0
  %2660 = vmatpush1.xpose.msra.mxu0 0.0
  %2661 = vmatprep.subr.mxu0 0.0
  %2662 = vmatpush1.xpose.msra.mxu0 0.0
  %2663 = vmatprep.subr.mxu0 0.0
  %2664 = vmatpush1.xpose.msra.mxu0 0.0
  %2665 = vmatprep.subr.mxu0 0.0
  %2666 = vmatpush1.xpose.msra.mxu0 0.0
  %2667 = vmatprep.subr.mxu0 0.0
  %2668 = vmatpush1.xpose.msra.mxu0 0.0
  %2669 = vmatprep.subr.mxu0 0.0
  %2670 = vmatpush1.xpose.msra.mxu0 0.0
  %2671 = vmatprep.subr.mxu0 0.0
  %2672 = vmatpush1.xpose.msra.mxu0 0.0
  %2673 = vmatprep.subr.mxu0 0.0
  %2674 = vmatpush1.xpose.msra.mxu0 0.0
  %2675 = vmatprep.subr.mxu0 0.0
  %2676 = vmatpush1.xpose.msra.mxu0 0.0
  %2677 = vmatprep.subr.mxu0 0.0
  %2678 = vmatpush1.xpose.msra.mxu0 0.0
  %2679 = vmatprep.subr.mxu0 0.0
  %2680 = vmatpush1.xpose.msra.mxu0 0.0
  %2681 = vmatprep.mubr.f32.mxu0 0.0
  %2682 = vmatmul.mubr.f32.gmra.mrb[0].mxu0 %v2553
  %v2683 = vpop.f32.mrb[0].mxu0
  %v2684 = vadd.f32 0.0, %v2683
  %v2685 = vpop.f32.mrb[0].mxu0
  %2686 = vmatprep.mubr.f32.mxu0 0.0
  %2687 = vmatmul.mubr.f32.gmra.mrb[0].mxu0 %v2555
  %v2688 = vpop.f32.mrb[0].mxu0
  %v2689 = vadd.f32 0.0, %v2688
  %v2690 = vpop.f32.mrb[0].mxu0
  %2691 = vmatprep.mubr.f32.mxu0 0.0
  %2692 = vmatmul.mubr.f32.gmra.mrb[0].mxu0 %v2557
  %v2693 = vpop.f32.mrb[0].mxu0
  %v2694 = vadd.f32 0.0, %v2693
  %v2695 = vpop.f32.mrb[0].mxu0
  %2696 = vmatprep.mubr.f32.mxu0 0.0
  %2697 = vmatmul.mubr.f32.gmra.mrb[0].mxu0 %v2559
  %v2698 = vpop.f32.mrb[0].mxu0
  %v2699 = vadd.f32 0.0, %v2698
  %v2700 = vpop.f32.mrb[0].mxu0
  %2701 = vmatprep.mubr.f32.mxu0 0.0
  %2702 = vmatmul.mubr.f32.gmra.mrb[0].mxu0 %v2561
  %v2703 = vpop.f32.mrb[0].mxu0
  %v2704 = vadd.f32 0.0, %v2703
  %v2705 = vpop.f32.mrb[0].mxu0
  %2706 = vmatprep.mubr.f32.mxu0 0.0
  %2707 = vmatmul.mubr.f32.gmra.mrb[0].mxu0 %v2563
  %v2708 = vpop.f32.mrb[0].mxu0
  %v2709 = vadd.f32 0.0, %v2708
  %v2710 = vpop.f32.mrb[0].mxu0
  %2711 = vmatprep.mubr.f32.mxu0 0.0
  %2712 = vmatmul.mubr.f32.gmra.mrb[0].mxu0 %v2565
  %v2713 = vpop.f32.mrb[0].mxu0
  %v2714 = vadd.f32 0.0, %v2713
  %v2715 = vpop.f32.mrb[0].mxu0
  %2716 = vmatprep.mubr.f32.mxu0 0.0
  %2717 = vmatmul.mubr.f32.gmra.mrb[0].mxu0 %v2567
  %v2718 = vpop.f32.mrb[0].mxu0
  %v2719 = vadd.f32 0.0, %v2718
  %v2720 = vpop.f32.mrb[0].mxu0
  %2721 = vmatprep.mubr.f32.mxu0 0.0
  %2722 = vmatmul.mubr.f32.gmra.mrb[0].mxu0 %v2569
  %v2723 = vpop.f32.mrb[0].mxu0
  %v2724 = vadd.f32 0.0, %v2723
  %v2725 = vpop.f32.mrb[0].mxu0
  %2726 = vmatprep.mubr.f32.mxu0 0.0
  %2727 = vmatmul.mubr.f32.gmra.mrb[0].mxu0 %v2571
  %v2728 = vpop.f32.mrb[0].mxu0
  %v2729 = vadd.f32 0.0, %v2728
  %v2730 = vpop.f32.mrb[0].mxu0
  %2731 = vmatprep.mubr.f32.mxu0 0.0
  %2732 = vmatmul.mubr.f32.gmra.mrb[0].mxu0 %v2573
  %v2733 = vpop.f32.mrb[0].mxu0
  %v2734 = vadd.f32 0.0, %v2733
  %v2735 = vpop.f32.mrb[0].mxu0
  %2736 = vmatprep.mubr.f32.mxu0 0.0
  %2737 = vmatmul.mubr.f32.gmra.mrb[0].mxu0 %v2575
  %v2738 = vpop.f32.mrb[0].mxu0
  %v2739 = vadd.f32 0.0, %v2738
  %v2740 = vpop.f32.mrb[0].mxu0
  %2741 = vmatprep.mubr.f32.mxu0 0.0
  %2742 = vmatmul.mubr.f32.gmra.mrb[0].mxu0 %v2577
  %v2743 = vpop.f32.mrb[0].mxu0
  %v2744 = vadd.f32 0.0, %v2743
  %v2745 = vpop.f32.mrb[0].mxu0
  %2746 = vmatprep.mubr.f32.mxu0 0.0
  %2747 = vmatmul.mubr.f32.gmra.mrb[0].mxu0 %v2579
  %v2748 = vpop.f32.mrb[0].mxu0
  %v2749 = vadd.f32 0.0, %v2748
  %v2750 = vpop.f32.mrb[0].mxu0
  %2751 = vmatprep.mubr.f32.mxu0 0.0
  %2752 = vmatmul.mubr.f32.gmra.mrb[0].mxu0 %v2581
  %v2753 = vpop.f32.mrb[0].mxu0
  %v2754 = vadd.f32 0.0, %v2753
  %v2755 = vpop.f32.mrb[0].mxu0
  %2756 = vmatprep.mubr.f32.mxu0 0.0
  %2757 = vmatmul.mubr.f32.gmra.mrb[0].mxu0 %v2583
  %v2758 = vpop.f32.mrb[0].mxu0
  %v2759 = vadd.f32 0.0, %v2758
  %v2760 = vpop.f32.mrb[0].mxu0
  %2761 = vdwg.mxu0
  %v2762 = vsub.f32 %v2684, %v365
  %v2763 = vsub.f32 %v2689, %v366
  %v2764 = vsub.f32 %v2694, %v367
  %v2765 = vsub.f32 %v2699, %v368
  %v2766 = vsub.f32 %v2704, %v369
  %v2767 = vsub.f32 %v2709, %v370
  %v2768 = vsub.f32 %v2714, %v371
  %v2769 = vsub.f32 %v2719, %v372
  %v2770 = vsub.f32 %v2724, %v373
  %v2771 = vsub.f32 %v2729, %v374
  %v2772 = vsub.f32 %v2734, %v375
  %v2773 = vsub.f32 %v2739, %v376
  %v2774 = vsub.f32 %v2744, %v377
  %v2775 = vsub.f32 %v2749, %v378
  %v2776 = vsub.f32 %v2754, %v379
  %v2777 = vsub.f32 %v2759, %v380
  %2778 = vmax.xlane.f32.xlu0 %v2762
  %v2779 = vpop.xlane.xlu0 %2778
  %2780 = vmax.xlane.f32.xlu0 %v2763
  %v2781 = vpop.xlane.xlu0 %2780
  %2782 = vmax.xlane.f32.xlu0 %v2764
  %v2783 = vpop.xlane.xlu0 %2782
  %2784 = vmax.xlane.f32.xlu0 %v2765
  %v2785 = vpop.xlane.xlu0 %2784
  %2786 = vmax.xlane.f32.xlu0 %v2766
  %v2787 = vpop.xlane.xlu0 %2786
  %2788 = vmax.xlane.f32.xlu0 %v2767
  %v2789 = vpop.xlane.xlu0 %2788
  %2790 = vmax.xlane.f32.xlu0 %v2768
  %v2791 = vpop.xlane.xlu0 %2790
  %2792 = vmax.xlane.f32.xlu0 %v2769
  %v2793 = vpop.xlane.xlu0 %2792
  %2794 = vmax.xlane.f32.xlu0 %v2770
  %v2795 = vpop.xlane.xlu0 %2794
  %2796 = vmax.xlane.f32.xlu0 %v2771
  %v2797 = vpop.xlane.xlu0 %2796
  %2798 = vmax.xlane.f32.xlu0 %v2772
  %v2799 = vpop.xlane.xlu0 %2798
  %2800 = vmax.xlane.f32.xlu0 %v2773
  %v2801 = vpop.xlane.xlu0 %2800
  %2802 = vmax.xlane.f32.xlu0 %v2774
  %v2803 = vpop.xlane.xlu0 %2802
  %2804 = vmax.xlane.f32.xlu0 %v2775
  %v2805 = vpop.xlane.xlu0 %2804
  %2806 = vmax.xlane.f32.xlu0 %v2776
  %v2807 = vpop.xlane.xlu0 %2806
  %2808 = vmax.xlane.f32.xlu0 %v2777
  %v2809 = vpop.xlane.xlu0 %2808
  %v2810 = vsub.f32 %v2762, %v2779
  %v2811 = vsub.f32 %v2763, %v2781
  %v2812 = vsub.f32 %v2764, %v2783
  %v2813 = vsub.f32 %v2765, %v2785
  %v2814 = vsub.f32 %v2766, %v2787
  %v2815 = vsub.f32 %v2767, %v2789
  %v2816 = vsub.f32 %v2768, %v2791
  %v2817 = vsub.f32 %v2769, %v2793
  %v2818 = vsub.f32 %v2770, %v2795
  %v2819 = vsub.f32 %v2771, %v2797
  %v2820 = vsub.f32 %v2772, %v2799
  %v2821 = vsub.f32 %v2773, %v2801
  %v2822 = vsub.f32 %v2774, %v2803
  %v2823 = vsub.f32 %v2775, %v2805
  %v2824 = vsub.f32 %v2776, %v2807
  %v2825 = vsub.f32 %v2777, %v2809
  %v2826 = vmul.f32 %v2810, 1.442695
  %v2827 = vpow.pop %v2826
  %v2828 = vmul.f32 %v2811, 1.442695
  %v2829 = vpow.pop %v2828
  %v2830 = vmul.f32 %v2812, 1.442695
  %v2831 = vpow.pop %v2830
  %v2832 = vmul.f32 %v2813, 1.442695
  %v2833 = vpow.pop %v2832
  %v2834 = vmul.f32 %v2814, 1.442695
  %v2835 = vpow.pop %v2834
  %v2836 = vmul.f32 %v2815, 1.442695
  %v2837 = vpow.pop %v2836
  %v2838 = vmul.f32 %v2816, 1.442695
  %v2839 = vpow.pop %v2838
  %v2840 = vmul.f32 %v2817, 1.442695
  %v2841 = vpow.pop %v2840
  %v2842 = vmul.f32 %v2818, 1.442695
  %v2843 = vpow.pop %v2842
  %v2844 = vmul.f32 %v2819, 1.442695
  %v2845 = vpow.pop %v2844
  %v2846 = vmul.f32 %v2820, 1.442695
  %v2847 = vpow.pop %v2846
  %v2848 = vmul.f32 %v2821, 1.442695
  %v2849 = vpow.pop %v2848
  %v2850 = vmul.f32 %v2822, 1.442695
  %v2851 = vpow.pop %v2850
  %v2852 = vmul.f32 %v2823, 1.442695
  %v2853 = vpow.pop %v2852
  %v2854 = vmul.f32 %v2824, 1.442695
  %v2855 = vpow.pop %v2854
  %v2856 = vmul.f32 %v2825, 1.442695
  %v2857 = vpow.pop %v2856
  %2858 = vadd.xlane.f32.xlu0 %v2827
  %v2859 = vpop.xlane.xlu0 %2858
  %2860 = vadd.xlane.f32.xlu0 %v2829
  %v2861 = vpop.xlane.xlu0 %2860
  %2862 = vadd.xlane.f32.xlu0 %v2831
  %v2863 = vpop.xlane.xlu0 %2862
  %2864 = vadd.xlane.f32.xlu0 %v2833
  %v2865 = vpop.xlane.xlu0 %2864
  %2866 = vadd.xlane.f32.xlu0 %v2835
  %v2867 = vpop.xlane.xlu0 %2866
  %2868 = vadd.xlane.f32.xlu0 %v2837
  %v2869 = vpop.xlane.xlu0 %2868
  %2870 = vadd.xlane.f32.xlu0 %v2839
  %v2871 = vpop.xlane.xlu0 %2870
  %2872 = vadd.xlane.f32.xlu0 %v2841
  %v2873 = vpop.xlane.xlu0 %2872
  %2874 = vadd.xlane.f32.xlu0 %v2843
  %v2875 = vpop.xlane.xlu0 %2874
  %2876 = vadd.xlane.f32.xlu0 %v2845
  %v2877 = vpop.xlane.xlu0 %2876
  %2878 = vadd.xlane.f32.xlu0 %v2847
  %v2879 = vpop.xlane.xlu0 %2878
  %2880 = vadd.xlane.f32.xlu0 %v2849
  %v2881 = vpop.xlane.xlu0 %2880
  %2882 = vadd.xlane.f32.xlu0 %v2851
  %v2883 = vpop.xlane.xlu0 %2882
  %2884 = vadd.xlane.f32.xlu0 %v2853
  %v2885 = vpop.xlane.xlu0 %2884
  %2886 = vadd.xlane.f32.xlu0 %v2855
  %v2887 = vpop.xlane.xlu0 %2886
  %2888 = vadd.xlane.f32.xlu0 %v2857
  %v2889 = vpop.xlane.xlu0 %2888
  %v2890 = vrcp.pop %v2859
  %v2891 = vrcp.pop %v2861
  %v2892 = vrcp.pop %v2863
  %v2893 = vrcp.pop %v2865
  %v2894 = vrcp.pop %v2867
  %v2895 = vrcp.pop %v2869
  %v2896 = vrcp.pop %v2871
  %v2897 = vrcp.pop %v2873
  %v2898 = vrcp.pop %v2875
  %v2899 = vrcp.pop %v2877
  %v2900 = vrcp.pop %v2879
  %v2901 = vrcp.pop %v2881
  %v2902 = vrcp.pop %v2883
  %v2903 = vrcp.pop %v2885
  %v2904 = vrcp.pop %v2887
  %v2905 = vrcp.pop %v2889
  %v2906 = vmul.f32 %v2827, %v2890
  %v2907 = vmul.f32 %v2829, %v2891
  %v2908 = vmul.f32 %v2831, %v2892
  %v2909 = vmul.f32 %v2833, %v2893
  %v2910 = vmul.f32 %v2835, %v2894
  %v2911 = vmul.f32 %v2837, %v2895
  %v2912 = vmul.f32 %v2839, %v2896
  %v2913 = vmul.f32 %v2841, %v2897
  %v2914 = vmul.f32 %v2843, %v2898
  %v2915 = vmul.f32 %v2845, %v2899
  %v2916 = vmul.f32 %v2847, %v2900
  %v2917 = vmul.f32 %v2849, %v2901
  %v2918 = vmul.f32 %v2851, %v2902
  %v2919 = vmul.f32 %v2853, %v2903
  %v2920 = vmul.f32 %v2855, %v2904
  %v2921 = vmul.f32 %v2857, %v2905
  %2922 = vrot.lane.b32.xlu0 %v2427, 96
  %v2923 = vpop.permute.xlu0 %2922
  %2924 = vrot.lane.b32.xlu0 %v2432, 96
  %v2925 = vpop.permute.xlu0 %2924
  %2926 = vrot.lane.b32.xlu0 %v2437, 96
  %v2927 = vpop.permute.xlu0 %2926
  %2928 = vrot.lane.b32.xlu0 %v2442, 96
  %v2929 = vpop.permute.xlu0 %2928
  %2930 = vrot.lane.b32.xlu0 %v2447, 96
  %v2931 = vpop.permute.xlu0 %2930
  %2932 = vrot.lane.b32.xlu0 %v2452, 96
  %v2933 = vpop.permute.xlu0 %2932
  %2934 = vrot.lane.b32.xlu0 %v2457, 96
  %v2935 = vpop.permute.xlu0 %2934
  %2936 = vrot.lane.b32.xlu0 %v2462, 96
  %v2937 = vpop.permute.xlu0 %2936
  %2938 = vrot.lane.b32.xlu0 %v2467, 96
  %v2939 = vpop.permute.xlu0 %2938
  %2940 = vrot.lane.b32.xlu0 %v2472, 96
  %v2941 = vpop.permute.xlu0 %2940
  %2942 = vrot.lane.b32.xlu0 %v2477, 96
  %v2943 = vpop.permute.xlu0 %2942
  %2944 = vrot.lane.b32.xlu0 %v2482, 96
  %v2945 = vpop.permute.xlu0 %2944
  %2946 = vrot.lane.b32.xlu0 %v2487, 96
  %v2947 = vpop.permute.xlu0 %2946
  %2948 = vrot.lane.b32.xlu0 %v2492, 96
  %v2949 = vpop.permute.xlu0 %2948
  %2950 = vrot.lane.b32.xlu0 %v2497, 96
  %v2951 = vpop.permute.xlu0 %2950
  %2952 = vrot.lane.b32.xlu0 %v2502, 96
  %v2953 = vpop.permute.xlu0 %2952
  %2970 = vmatprep.subr.mxu0 0.0
  %2971 = vmatpush1.msra.mxu0 %v2923
  %2972 = vmatprep.subr.mxu0 0.0
  %2973 = vmatpush1.msra.mxu0 %v2925
  %2974 = vmatprep.subr.mxu0 0.0
  %2975 = vmatpush1.msra.mxu0 %v2927
  %2976 = vmatprep.subr.mxu0 0.0
  %2977 = vmatpush1.msra.mxu0 %v2929
  %2978 = vmatprep.subr.mxu0 0.0
  %2979 = vmatpush1.msra.mxu0 %v2931
  %2980 = vmatprep.subr.mxu0 0.0
  %2981 = vmatpush1.msra.mxu0 %v2933
  %2982 = vmatprep.subr.mxu0 0.0
  %2983 = vmatpush1.msra.mxu0 %v2935
  %2984 = vmatprep.subr.mxu0 0.0
  %2985 = vmatpush1.msra.mxu0 %v2937
  %2986 = vmatprep.subr.mxu0 0.0
  %2987 = vmatpush1.msra.mxu0 %v2939
  %2988 = vmatprep.subr.mxu0 0.0
  %2989 = vmatpush1.msra.mxu0 %v2941
  %2990 = vmatprep.subr.mxu0 0.0
  %2991 = vmatpush1.msra.mxu0 %v2943
  %2992 = vmatprep.subr.mxu0 0.0
  %2993 = vmatpush1.msra.mxu0 %v2945
  %2994 = vmatprep.subr.mxu0 0.0
  %2995 = vmatpush1.msra.mxu0 %v2947
  %2996 = vmatprep.subr.mxu0 0.0
  %2997 = vmatpush1.msra.mxu0 %v2949
  %2998 = vmatprep.subr.mxu0 0.0
  %2999 = vmatpush1.msra.mxu0 %v2951
  %3000 = vmatprep.subr.mxu0 0.0
  %3001 = vmatpush1.msra.mxu0 %v2953
  %3002 = vmatprep.subr.mxu0 0.0
  %3003 = vmatpush1.msra.mxu0 0.0
  %3004 = vmatprep.subr.mxu0 0.0
  %3005 = vmatpush1.msra.mxu0 0.0
  %3006 = vmatprep.subr.mxu0 0.0
  %3007 = vmatpush1.msra.mxu0 0.0
  %3008 = vmatprep.subr.mxu0 0.0
  %3009 = vmatpush1.msra.mxu0 0.0
  %3010 = vmatprep.subr.mxu0 0.0
  %3011 = vmatpush1.msra.mxu0 0.0
  %3012 = vmatprep.subr.mxu0 0.0
  %3013 = vmatpush1.msra.mxu0 0.0
  %3014 = vmatprep.subr.mxu0 0.0
  %3015 = vmatpush1.msra.mxu0 0.0
  %3016 = vmatprep.subr.mxu0 0.0
  %3017 = vmatpush1.msra.mxu0 0.0
  %3018 = vmatprep.subr.mxu0 0.0
  %3019 = vmatpush1.msra.mxu0 0.0
  %3020 = vmatprep.subr.mxu0 0.0
  %3021 = vmatpush1.msra.mxu0 0.0
  %3022 = vmatprep.subr.mxu0 0.0
  %3023 = vmatpush1.msra.mxu0 0.0
  %3024 = vmatprep.subr.mxu0 0.0
  %3025 = vmatpush1.msra.mxu0 0.0
  %3026 = vmatprep.subr.mxu0 0.0
  %3027 = vmatpush1.msra.mxu0 0.0
  %3028 = vmatprep.subr.mxu0 0.0
  %3029 = vmatpush1.msra.mxu0 0.0
  %3030 = vmatprep.subr.mxu0 0.0
  %3031 = vmatpush1.msra.mxu0 0.0
  %3032 = vmatprep.subr.mxu0 0.0
  %3033 = vmatpush1.msra.mxu0 0.0
  %3034 = vmatprep.mubr.f32.mxu0 0.0
  %3035 = vmatmul.mubr.f32.gmra.mrb[0].mxu0 %v2906
  %v3036 = vpop.f32.mrb[0].mxu0
  %v3037 = vadd.f32 0.0, %v3036
  %v3038 = vpop.f32.mrb[0].mxu0
  %3039 = vmatprep.mubr.f32.mxu0 0.0
  %3040 = vmatmul.mubr.f32.gmra.mrb[0].mxu0 %v2907
  %v3041 = vpop.f32.mrb[0].mxu0
  %v3042 = vadd.f32 0.0, %v3041
  %v3043 = vpop.f32.mrb[0].mxu0
  %3044 = vmatprep.mubr.f32.mxu0 0.0
  %3045 = vmatmul.mubr.f32.gmra.mrb[0].mxu0 %v2908
  %v3046 = vpop.f32.mrb[0].mxu0
  %v3047 = vadd.f32 0.0, %v3046
  %v3048 = vpop.f32.mrb[0].mxu0
  %3049 = vmatprep.mubr.f32.mxu0 0.0
  %3050 = vmatmul.mubr.f32.gmra.mrb[0].mxu0 %v2909
  %v3051 = vpop.f32.mrb[0].mxu0
  %v3052 = vadd.f32 0.0, %v3051
  %v3053 = vpop.f32.mrb[0].mxu0
  %3054 = vmatprep.mubr.f32.mxu0 0.0
  %3055 = vmatmul.mubr.f32.gmra.mrb[0].mxu0 %v2910
  %v3056 = vpop.f32.mrb[0].mxu0
  %v3057 = vadd.f32 0.0, %v3056
  %v3058 = vpop.f32.mrb[0].mxu0
  %3059 = vmatprep.mubr.f32.mxu0 0.0
  %3060 = vmatmul.mubr.f32.gmra.mrb[0].mxu0 %v2911
  %v3061 = vpop.f32.mrb[0].mxu0
  %v3062 = vadd.f32 0.0, %v3061
  %v3063 = vpop.f32.mrb[0].mxu0
  %3064 = vmatprep.mubr.f32.mxu0 0.0
  %3065 = vmatmul.mubr.f32.gmra.mrb[0].mxu0 %v2912
  %v3066 = vpop.f32.mrb[0].mxu0
  %v3067 = vadd.f32 0.0, %v3066
  %v3068 = vpop.f32.mrb[0].mxu0
  %3069 = vmatprep.mubr.f32.mxu0 0.0
  %3070 = vmatmul.mubr.f32.gmra.mrb[0].mxu0 %v2913
  %v3071 = vpop.f32.mrb[0].mxu0
  %v3072 = vadd.f32 0.0, %v3071
  %v3073 = vpop.f32.mrb[0].mxu0
  %3074 = vmatprep.mubr.f32.mxu0 0.0
  %3075 = vmatmul.mubr.f32.gmra.mrb[0].mxu0 %v2914
  %v3076 = vpop.f32.mrb[0].mxu0
  %v3077 = vadd.f32 0.0, %v3076
  %v3078 = vpop.f32.mrb[0].mxu0
  %3079 = vmatprep.mubr.f32.mxu0 0.0
  %3080 = vmatmul.mubr.f32.gmra.mrb[0].mxu0 %v2915
  %v3081 = vpop.f32.mrb[0].mxu0
  %v3082 = vadd.f32 0.0, %v3081
  %v3083 = vpop.f32.mrb[0].mxu0
  %3084 = vmatprep.mubr.f32.mxu0 0.0
  %3085 = vmatmul.mubr.f32.gmra.mrb[0].mxu0 %v2916
  %v3086 = vpop.f32.mrb[0].mxu0
  %v3087 = vadd.f32 0.0, %v3086
  %v3088 = vpop.f32.mrb[0].mxu0
  %3089 = vmatprep.mubr.f32.mxu0 0.0
  %3090 = vmatmul.mubr.f32.gmra.mrb[0].mxu0 %v2917
  %v3091 = vpop.f32.mrb[0].mxu0
  %v3092 = vadd.f32 0.0, %v3091
  %v3093 = vpop.f32.mrb[0].mxu0
  %3094 = vmatprep.mubr.f32.mxu0 0.0
  %3095 = vmatmul.mubr.f32.gmra.mrb[0].mxu0 %v2918
  %v3096 = vpop.f32.mrb[0].mxu0
  %v3097 = vadd.f32 0.0, %v3096
  %v3098 = vpop.f32.mrb[0].mxu0
  %3099 = vmatprep.mubr.f32.mxu0 0.0
  %3100 = vmatmul.mubr.f32.gmra.mrb[0].mxu0 %v2919
  %v3101 = vpop.f32.mrb[0].mxu0
  %v3102 = vadd.f32 0.0, %v3101
  %v3103 = vpop.f32.mrb[0].mxu0
  %3104 = vmatprep.mubr.f32.mxu0 0.0
  %3105 = vmatmul.mubr.f32.gmra.mrb[0].mxu0 %v2920
  %v3106 = vpop.f32.mrb[0].mxu0
  %v3107 = vadd.f32 0.0, %v3106
  %v3108 = vpop.f32.mrb[0].mxu0
  %3109 = vmatprep.mubr.f32.mxu0 0.0
  %3110 = vmatmul.mubr.f32.gmra.mrb[0].mxu0 %v2921
  %v3111 = vpop.f32.mrb[0].mxu0
  %v3112 = vadd.f32 0.0, %v3111
  %v3113 = vpop.f32.mrb[0].mxu0
  %3114 = vdwg.mxu0
  %s3115 = scalar_lea.vmem %s4, 16
  %v3116 = vld [vmem:[%s3115] sm:$0xff]
  %v3117 = vld [vmem:[%s3115 + $0x8] sm:$0xff]
  %v3119 = vsel %vm861, %v3037, 0
  %v3122 = vsel %vm861, %v3042, 0
  %v3125 = vsel %vm861, %v3047, 0
  %v3128 = vsel %vm861, %v3052, 0
  %v3131 = vsel %vm861, %v3057, 0
  %v3134 = vsel %vm861, %v3062, 0
  %v3137 = vsel %vm861, %v3067, 0
  %v3140 = vsel %vm861, %v3072, 0
  %v3143 = vsel %vm861, %v3077, 0
  %v3146 = vsel %vm861, %v3082, 0
  %v3149 = vsel %vm861, %v3087, 0
  %v3152 = vsel %vm861, %v3092, 0
  %v3155 = vsel %vm861, %v3097, 0
  %v3158 = vsel %vm861, %v3102, 0
  %v3161 = vsel %vm861, %v3107, 0
  %v3164 = vsel %vm861, %v3112, 0
  %3166 = vmatprep.subr.mxu0 0.0
  %3167 = vmatpush1.msra.mxu0 %v3116
  %3168 = vmatprep.subr.mxu0 0.0
  %3169 = vmatpush1.msra.mxu0 %v3117
  %3170 = vmatprep.subr.mxu0 0.0
  %3171 = vmatpush1.msra.mxu0 0.0
  %3172 = vmatprep.subr.mxu0 0.0
  %3173 = vmatpush1.msra.mxu0 0.0
  %3174 = vmatprep.subr.mxu0 0.0
  %3175 = vmatpush1.msra.mxu0 0.0
  %3176 = vmatprep.subr.mxu0 0.0
  %3177 = vmatpush1.msra.mxu0 0.0
  %3178 = vmatprep.subr.mxu0 0.0
  %3179 = vmatpush1.msra.mxu0 0.0
  %3180 = vmatprep.subr.mxu0 0.0
  %3181 = vmatpush1.msra.mxu0 0.0
  %3182 = vmatprep.subr.mxu0 0.0
  %3183 = vmatpush1.msra.mxu0 0.0
  %3184 = vmatprep.subr.mxu0 0.0
  %3185 = vmatpush1.msra.mxu0 0.0
  %3186 = vmatprep.subr.mxu0 0.0
  %3187 = vmatpush1.msra.mxu0 0.0
  %3188 = vmatprep.subr.mxu0 0.0
  %3189 = vmatpush1.msra.mxu0 0.0
  %3190 = vmatprep.subr.mxu0 0.0
  %3191 = vmatpush1.msra.mxu0 0.0
  %3192 = vmatprep.subr.mxu0 0.0
  %3193 = vmatpush1.msra.mxu0 0.0
  %3194 = vmatprep.subr.mxu0 0.0
  %3195 = vmatpush1.msra.mxu0 0.0
  %3196 = vmatprep.subr.mxu0 0.0
  %3197 = vmatpush1.msra.mxu0 0.0
  %3198 = vmatprep.subr.mxu0 0.0
  %3199 = vmatpush1.msra.mxu0 0.0
  %3200 = vmatprep.subr.mxu0 0.0
  %3201 = vmatpush1.msra.mxu0 0.0
  %3202 = vmatprep.subr.mxu0 0.0
  %3203 = vmatpush1.msra.mxu0 0.0
  %3204 = vmatprep.subr.mxu0 0.0
  %3205 = vmatpush1.msra.mxu0 0.0
  %3206 = vmatprep.subr.mxu0 0.0
  %3207 = vmatpush1.msra.mxu0 0.0
  %3208 = vmatprep.subr.mxu0 0.0
  %3209 = vmatpush1.msra.mxu0 0.0
  %3210 = vmatprep.subr.mxu0 0.0
  %3211 = vmatpush1.msra.mxu0 0.0
  %3212 = vmatprep.subr.mxu0 0.0
  %3213 = vmatpush1.msra.mxu0 0.0
  %3214 = vmatprep.subr.mxu0 0.0
  %3215 = vmatpush1.msra.mxu0 0.0
  %3216 = vmatprep.subr.mxu0 0.0
  %3217 = vmatpush1.msra.mxu0 0.0
  %3218 = vmatprep.subr.mxu0 0.0
  %3219 = vmatpush1.msra.mxu0 0.0
  %3220 = vmatprep.subr.mxu0 0.0
  %3221 = vmatpush1.msra.mxu0 0.0
  %3222 = vmatprep.subr.mxu0 0.0
  %3223 = vmatpush1.msra.mxu0 0.0
  %3224 = vmatprep.subr.mxu0 0.0
  %3225 = vmatpush1.msra.mxu0 0.0
  %3226 = vmatprep.subr.mxu0 0.0
  %3227 = vmatpush1.msra.mxu0 0.0
  %3228 = vmatprep.subr.mxu0 0.0
  %3229 = vmatpush1.msra.mxu0 0.0
  %3230 = vmatprep.mubr.f32.mxu0 0.0
  %3231 = vmatmul.mubr.f32.gmra.mrb[0].mxu0 %v3119
  %v3232 = vpop.f32.mrb[0].mxu0
  %v3233 = vadd.f32 0.0, %v3232
  %v3234 = vpop.f32.mrb[0].mxu0
  %3235 = vmatprep.mubr.f32.mxu0 0.0
  %3236 = vmatmul.mubr.f32.gmra.mrb[0].mxu0 %v3122
  %v3237 = vpop.f32.mrb[0].mxu0
  %v3238 = vadd.f32 0.0, %v3237
  %v3239 = vpop.f32.mrb[0].mxu0
  %3240 = vmatprep.mubr.f32.mxu0 0.0
  %3241 = vmatmul.mubr.f32.gmra.mrb[0].mxu0 %v3125
  %v3242 = vpop.f32.mrb[0].mxu0
  %v3243 = vadd.f32 0.0, %v3242
  %v3244 = vpop.f32.mrb[0].mxu0
  %3245 = vmatprep.mubr.f32.mxu0 0.0
  %3246 = vmatmul.mubr.f32.gmra.mrb[0].mxu0 %v3128
  %v3247 = vpop.f32.mrb[0].mxu0
  %v3248 = vadd.f32 0.0, %v3247
  %v3249 = vpop.f32.mrb[0].mxu0
  %3250 = vmatprep.mubr.f32.mxu0 0.0
  %3251 = vmatmul.mubr.f32.gmra.mrb[0].mxu0 %v3131
  %v3252 = vpop.f32.mrb[0].mxu0
  %v3253 = vadd.f32 0.0, %v3252
  %v3254 = vpop.f32.mrb[0].mxu0
  %3255 = vmatprep.mubr.f32.mxu0 0.0
  %3256 = vmatmul.mubr.f32.gmra.mrb[0].mxu0 %v3134
  %v3257 = vpop.f32.mrb[0].mxu0
  %v3258 = vadd.f32 0.0, %v3257
  %v3259 = vpop.f32.mrb[0].mxu0
  %3260 = vmatprep.mubr.f32.mxu0 0.0
  %3261 = vmatmul.mubr.f32.gmra.mrb[0].mxu0 %v3137
  %v3262 = vpop.f32.mrb[0].mxu0
  %v3263 = vadd.f32 0.0, %v3262
  %v3264 = vpop.f32.mrb[0].mxu0
  %3265 = vmatprep.mubr.f32.mxu0 0.0
  %3266 = vmatmul.mubr.f32.gmra.mrb[0].mxu0 %v3140
  %v3267 = vpop.f32.mrb[0].mxu0
  %v3268 = vadd.f32 0.0, %v3267
  %v3269 = vpop.f32.mrb[0].mxu0
  %3270 = vmatprep.mubr.f32.mxu0 0.0
  %3271 = vmatmul.mubr.f32.gmra.mrb[0].mxu0 %v3143
  %v3272 = vpop.f32.mrb[0].mxu0
  %v3273 = vadd.f32 0.0, %v3272
  %v3274 = vpop.f32.mrb[0].mxu0
  %3275 = vmatprep.mubr.f32.mxu0 0.0
  %3276 = vmatmul.mubr.f32.gmra.mrb[0].mxu0 %v3146
  %v3277 = vpop.f32.mrb[0].mxu0
  %v3278 = vadd.f32 0.0, %v3277
  %v3279 = vpop.f32.mrb[0].mxu0
  %3280 = vmatprep.mubr.f32.mxu0 0.0
  %3281 = vmatmul.mubr.f32.gmra.mrb[0].mxu0 %v3149
  %v3282 = vpop.f32.mrb[0].mxu0
  %v3283 = vadd.f32 0.0, %v3282
  %v3284 = vpop.f32.mrb[0].mxu0
  %3285 = vmatprep.mubr.f32.mxu0 0.0
  %3286 = vmatmul.mubr.f32.gmra.mrb[0].mxu0 %v3152
  %v3287 = vpop.f32.mrb[0].mxu0
  %v3288 = vadd.f32 0.0, %v3287
  %v3289 = vpop.f32.mrb[0].mxu0
  %3290 = vmatprep.mubr.f32.mxu0 0.0
  %3291 = vmatmul.mubr.f32.gmra.mrb[0].mxu0 %v3155
  %v3292 = vpop.f32.mrb[0].mxu0
  %v3293 = vadd.f32 0.0, %v3292
  %v3294 = vpop.f32.mrb[0].mxu0
  %3295 = vmatprep.mubr.f32.mxu0 0.0
  %3296 = vmatmul.mubr.f32.gmra.mrb[0].mxu0 %v3158
  %v3297 = vpop.f32.mrb[0].mxu0
  %v3298 = vadd.f32 0.0, %v3297
  %v3299 = vpop.f32.mrb[0].mxu0
  %3300 = vmatprep.mubr.f32.mxu0 0.0
  %3301 = vmatmul.mubr.f32.gmra.mrb[0].mxu0 %v3161
  %v3302 = vpop.f32.mrb[0].mxu0
  %v3303 = vadd.f32 0.0, %v3302
  %v3304 = vpop.f32.mrb[0].mxu0
  %3305 = vmatprep.mubr.f32.mxu0 0.0
  %3306 = vmatmul.mubr.f32.gmra.mrb[0].mxu0 %v3164
  %v3307 = vpop.f32.mrb[0].mxu0
  %v3308 = vadd.f32 0.0, %v3307
  %v3309 = vpop.f32.mrb[0].mxu0
  %3310 = vdwg.mxu0
  %v3311 = vadd.f32 %v2059, %v3233
  %v3312 = vadd.f32 %v2060, %v3238
  %v3313 = vadd.f32 %v2061, %v3243
  %v3314 = vadd.f32 %v2062, %v3248
  %v3315 = vadd.f32 %v2063, %v3253
  %v3316 = vadd.f32 %v2064, %v3258
  %v3317 = vadd.f32 %v2065, %v3263
  %v3318 = vadd.f32 %v2066, %v3268
  %v3319 = vadd.f32 %v2067, %v3273
  %v3320 = vadd.f32 %v2068, %v3278
  %v3321 = vadd.f32 %v2069, %v3283
  %v3322 = vadd.f32 %v2070, %v3288
  %v3323 = vadd.f32 %v2071, %v3293
  %v3324 = vadd.f32 %v2072, %v3298
  %v3325 = vadd.f32 %v2073, %v3303
  %v3326 = vadd.f32 %v2074, %v3308
  %s3327 = scalar_lea.vmem %s5, 32
  %v3328 = vld [vmem:[%s3327] sm:$0xff]
  %v3329 = vld [vmem:[%s3327 + $0x8] sm:$0xff]
  %v3330 = vld [vmem:[%s3327 + $0x10] sm:$0xff]
  %v3331 = vld [vmem:[%s3327 + $0x18] sm:$0xff]
  %s3332 = scalar_lea.vmem %s6, 1
  %v3333 = vld [vmem:[%s3332] sm:$0x1]
  %v3335 = vlaneseq
  %v3336 = vshrl.u32 %v3335, 7
  %v3337 = vsub.s32 0, %v3336
  %v3338 = vrot.slane %v3333, %v3337
  %v3341 = vsel %vm573, %v3311, 0
  %v3344 = vsel %vm573, %v3312, 0
  %v3347 = vsel %vm573, %v3313, 0
  %v3350 = vsel %vm573, %v3314, 0
  %v3353 = vsel %vm573, %v3315, 0
  %v3356 = vsel %vm573, %v3316, 0
  %v3359 = vsel %vm573, %v3317, 0
  %v3362 = vsel %vm573, %v3318, 0
  %v3365 = vsel %vm573, %v3319, 0
  %v3368 = vsel %vm573, %v3320, 0
  %v3371 = vsel %vm573, %v3321, 0
  %v3374 = vsel %vm573, %v3322, 0
  %v3377 = vsel %vm573, %v3323, 0
  %v3380 = vsel %vm573, %v3324, 0
  %v3383 = vsel %vm573, %v3325, 0
  %v3386 = vsel %vm573, %v3326, 0
  %3388 = vmatprep.subr.mxu0 0.0
  %3389 = vmatpush1.msra.mxu0 %v3328
  %3390 = vmatprep.subr.mxu0 0.0
  %3391 = vmatpush1.msra.mxu0 %v3329
  %3392 = vmatprep.subr.mxu0 0.0
  %3393 = vmatpush1.msra.mxu0 %v3330
  %3394 = vmatprep.subr.mxu0 0.0
  %3395 = vmatpush1.msra.mxu0 %v3331
  %3396 = vmatprep.subr.mxu0 0.0
  %3397 = vmatpush1.msra.mxu0 0.0
  %3398 = vmatprep.subr.mxu0 0.0
  %3399 = vmatpush1.msra.mxu0 0.0
  %3400 = vmatprep.subr.mxu0 0.0
  %3401 = vmatpush1.msra.mxu0 0.0
  %3402 = vmatprep.subr.mxu0 0.0
  %3403 = vmatpush1.msra.mxu0 0.0
  %3404 = vmatprep.subr.mxu0 0.0
  %3405 = vmatpush1.msra.mxu0 0.0
  %3406 = vmatprep.subr.mxu0 0.0
  %3407 = vmatpush1.msra.mxu0 0.0
  %3408 = vmatprep.subr.mxu0 0.0
  %3409 = vmatpush1.msra.mxu0 0.0
  %3410 = vmatprep.subr.mxu0 0.0
  %3411 = vmatpush1.msra.mxu0 0.0
  %3412 = vmatprep.subr.mxu0 0.0
  %3413 = vmatpush1.msra.mxu0 0.0
  %3414 = vmatprep.subr.mxu0 0.0
  %3415 = vmatpush1.msra.mxu0 0.0
  %3416 = vmatprep.subr.mxu0 0.0
  %3417 = vmatpush1.msra.mxu0 0.0
  %3418 = vmatprep.subr.mxu0 0.0
  %3419 = vmatpush1.msra.mxu0 0.0
  %3420 = vmatprep.subr.mxu0 0.0
  %3421 = vmatpush1.msra.mxu0 0.0
  %3422 = vmatprep.subr.mxu0 0.0
  %3423 = vmatpush1.msra.mxu0 0.0
  %3424 = vmatprep.subr.mxu0 0.0
  %3425 = vmatpush1.msra.mxu0 0.0
  %3426 = vmatprep.subr.mxu0 0.0
  %3427 = vmatpush1.msra.mxu0 0.0
  %3428 = vmatprep.subr.mxu0 0.0
  %3429 = vmatpush1.msra.mxu0 0.0
  %3430 = vmatprep.subr.mxu0 0.0
  %3431 = vmatpush1.msra.mxu0 0.0
  %3432 = vmatprep.subr.mxu0 0.0
  %3433 = vmatpush1.msra.mxu0 0.0
  %3434 = vmatprep.subr.mxu0 0.0
  %3435 = vmatpush1.msra.mxu0 0.0
  %3436 = vmatprep.subr.mxu0 0.0
  %3437 = vmatpush1.msra.mxu0 0.0
  %3438 = vmatprep.subr.mxu0 0.0
  %3439 = vmatpush1.msra.mxu0 0.0
  %3440 = vmatprep.subr.mxu0 0.0
  %3441 = vmatpush1.msra.mxu0 0.0
  %3442 = vmatprep.subr.mxu0 0.0
  %3443 = vmatpush1.msra.mxu0 0.0
  %3444 = vmatprep.subr.mxu0 0.0
  %3445 = vmatpush1.msra.mxu0 0.0
  %3446 = vmatprep.subr.mxu0 0.0
  %3447 = vmatpush1.msra.mxu0 0.0
  %3448 = vmatprep.subr.mxu0 0.0
  %3449 = vmatpush1.msra.mxu0 0.0
  %3450 = vmatprep.subr.mxu0 0.0
  %3451 = vmatpush1.msra.mxu0 0.0
  %3452 = vmatprep.mubr.f32.mxu0 0.0
  %3453 = vmatmul.mubr.f32.gmra.mrb[0].mxu0 %v3341
  %v3454 = vpop.f32.mrb[0].mxu0
  %v3455 = vadd.f32 %v3338, %v3454
  %v3456 = vpop.f32.mrb[0].mxu0
  %3457 = vmatprep.mubr.f32.mxu0 0.0
  %3458 = vmatmul.mubr.f32.gmra.mrb[0].mxu0 %v3344
  %v3459 = vpop.f32.mrb[0].mxu0
  %v3460 = vadd.f32 %v3338, %v3459
  %v3461 = vpop.f32.mrb[0].mxu0
  %3462 = vmatprep.mubr.f32.mxu0 0.0
  %3463 = vmatmul.mubr.f32.gmra.mrb[0].mxu0 %v3347
  %v3464 = vpop.f32.mrb[0].mxu0
  %v3465 = vadd.f32 %v3338, %v3464
  %v3466 = vpop.f32.mrb[0].mxu0
  %3467 = vmatprep.mubr.f32.mxu0 0.0
  %3468 = vmatmul.mubr.f32.gmra.mrb[0].mxu0 %v3350
  %v3469 = vpop.f32.mrb[0].mxu0
  %v3470 = vadd.f32 %v3338, %v3469
  %v3471 = vpop.f32.mrb[0].mxu0
  %3472 = vmatprep.mubr.f32.mxu0 0.0
  %3473 = vmatmul.mubr.f32.gmra.mrb[0].mxu0 %v3353
  %v3474 = vpop.f32.mrb[0].mxu0
  %v3475 = vadd.f32 %v3338, %v3474
  %v3476 = vpop.f32.mrb[0].mxu0
  %3477 = vmatprep.mubr.f32.mxu0 0.0
  %3478 = vmatmul.mubr.f32.gmra.mrb[0].mxu0 %v3356
  %v3479 = vpop.f32.mrb[0].mxu0
  %v3480 = vadd.f32 %v3338, %v3479
  %v3481 = vpop.f32.mrb[0].mxu0
  %3482 = vmatprep.mubr.f32.mxu0 0.0
  %3483 = vmatmul.mubr.f32.gmra.mrb[0].mxu0 %v3359
  %v3484 = vpop.f32.mrb[0].mxu0
  %v3485 = vadd.f32 %v3338, %v3484
  %v3486 = vpop.f32.mrb[0].mxu0
  %3487 = vmatprep.mubr.f32.mxu0 0.0
  %3488 = vmatmul.mubr.f32.gmra.mrb[0].mxu0 %v3362
  %v3489 = vpop.f32.mrb[0].mxu0
  %v3490 = vadd.f32 %v3338, %v3489
  %v3491 = vpop.f32.mrb[0].mxu0
  %3492 = vmatprep.mubr.f32.mxu0 0.0
  %3493 = vmatmul.mubr.f32.gmra.mrb[0].mxu0 %v3365
  %v3494 = vpop.f32.mrb[0].mxu0
  %v3495 = vadd.f32 %v3338, %v3494
  %v3496 = vpop.f32.mrb[0].mxu0
  %3497 = vmatprep.mubr.f32.mxu0 0.0
  %3498 = vmatmul.mubr.f32.gmra.mrb[0].mxu0 %v3368
  %v3499 = vpop.f32.mrb[0].mxu0
  %v3500 = vadd.f32 %v3338, %v3499
  %v3501 = vpop.f32.mrb[0].mxu0
  %3502 = vmatprep.mubr.f32.mxu0 0.0
  %3503 = vmatmul.mubr.f32.gmra.mrb[0].mxu0 %v3371
  %v3504 = vpop.f32.mrb[0].mxu0
  %v3505 = vadd.f32 %v3338, %v3504
  %v3506 = vpop.f32.mrb[0].mxu0
  %3507 = vmatprep.mubr.f32.mxu0 0.0
  %3508 = vmatmul.mubr.f32.gmra.mrb[0].mxu0 %v3374
  %v3509 = vpop.f32.mrb[0].mxu0
  %v3510 = vadd.f32 %v3338, %v3509
  %v3511 = vpop.f32.mrb[0].mxu0
  %3512 = vmatprep.mubr.f32.mxu0 0.0
  %3513 = vmatmul.mubr.f32.gmra.mrb[0].mxu0 %v3377
  %v3514 = vpop.f32.mrb[0].mxu0
  %v3515 = vadd.f32 %v3338, %v3514
  %v3516 = vpop.f32.mrb[0].mxu0
  %3517 = vmatprep.mubr.f32.mxu0 0.0
  %3518 = vmatmul.mubr.f32.gmra.mrb[0].mxu0 %v3380
  %v3519 = vpop.f32.mrb[0].mxu0
  %v3520 = vadd.f32 %v3338, %v3519
  %v3521 = vpop.f32.mrb[0].mxu0
  %3522 = vmatprep.mubr.f32.mxu0 0.0
  %3523 = vmatmul.mubr.f32.gmra.mrb[0].mxu0 %v3383
  %v3524 = vpop.f32.mrb[0].mxu0
  %v3525 = vadd.f32 %v3338, %v3524
  %v3526 = vpop.f32.mrb[0].mxu0
  %3527 = vmatprep.mubr.f32.mxu0 0.0
  %3528 = vmatmul.mubr.f32.gmra.mrb[0].mxu0 %v3386
  %v3529 = vpop.f32.mrb[0].mxu0
  %v3530 = vadd.f32 %v3338, %v3529
  %v3531 = vpop.f32.mrb[0].mxu0
  %3532 = vdwg.mxu0
  %v3533 = vmax.f32 %v3455, 0.0
  %v3534 = vmax.f32 %v3460, 0.0
  %v3535 = vmax.f32 %v3465, 0.0
  %v3536 = vmax.f32 %v3470, 0.0
  %v3537 = vmax.f32 %v3475, 0.0
  %v3538 = vmax.f32 %v3480, 0.0
  %v3539 = vmax.f32 %v3485, 0.0
  %v3540 = vmax.f32 %v3490, 0.0
  %v3541 = vmax.f32 %v3495, 0.0
  %v3542 = vmax.f32 %v3500, 0.0
  %v3543 = vmax.f32 %v3505, 0.0
  %v3544 = vmax.f32 %v3510, 0.0
  %v3545 = vmax.f32 %v3515, 0.0
  %v3546 = vmax.f32 %v3520, 0.0
  %v3547 = vmax.f32 %v3525, 0.0
  %v3548 = vmax.f32 %v3530, 0.0
  %s3549 = scalar_lea.vmem %s7, 32
  %v3550 = vld [vmem:[%s3549] sm:$0xff]
  %v3551 = vld [vmem:[%s3549 + $0x8] sm:$0xff]
  %v3552 = vld [vmem:[%s3549 + $0x10] sm:$0xff]
  %v3553 = vld [vmem:[%s3549 + $0x18] sm:$0xff]
  %s3554 = scalar_lea.vmem %s8, 1
  %v3555 = vld [vmem:[%s3554] sm:$0x1]
  %v3557 = vlaneseq
  %v3558 = vshrl.u32 %v3557, 7
  %v3559 = vsub.s32 0, %v3558
  %v3560 = vrot.slane %v3555, %v3559
  %v3563 = vsel %vm573, %v3533, 0
  %v3566 = vsel %vm573, %v3534, 0
  %v3569 = vsel %vm573, %v3535, 0
  %v3572 = vsel %vm573, %v3536, 0
  %v3575 = vsel %vm573, %v3537, 0
  %v3578 = vsel %vm573, %v3538, 0
  %v3581 = vsel %vm573, %v3539, 0
  %v3584 = vsel %vm573, %v3540, 0
  %v3587 = vsel %vm573, %v3541, 0
  %v3590 = vsel %vm573, %v3542, 0
  %v3593 = vsel %vm573, %v3543, 0
  %v3596 = vsel %vm573, %v3544, 0
  %v3599 = vsel %vm573, %v3545, 0
  %v3602 = vsel %vm573, %v3546, 0
  %v3605 = vsel %vm573, %v3547, 0
  %v3608 = vsel %vm573, %v3548, 0
  %3610 = vmatprep.subr.mxu0 0.0
  %3611 = vmatpush1.msra.mxu0 %v3550
  %3612 = vmatprep.subr.mxu0 0.0
  %3613 = vmatpush1.msra.mxu0 %v3551
  %3614 = vmatprep.subr.mxu0 0.0
  %3615 = vmatpush1.msra.mxu0 %v3552
  %3616 = vmatprep.subr.mxu0 0.0
  %3617 = vmatpush1.msra.mxu0 %v3553
  %3618 = vmatprep.subr.mxu0 0.0
  %3619 = vmatpush1.msra.mxu0 0.0
  %3620 = vmatprep.subr.mxu0 0.0
  %3621 = vmatpush1.msra.mxu0 0.0
  %3622 = vmatprep.subr.mxu0 0.0
  %3623 = vmatpush1.msra.mxu0 0.0
  %3624 = vmatprep.subr.mxu0 0.0
  %3625 = vmatpush1.msra.mxu0 0.0
  %3626 = vmatprep.subr.mxu0 0.0
  %3627 = vmatpush1.msra.mxu0 0.0
  %3628 = vmatprep.subr.mxu0 0.0
  %3629 = vmatpush1.msra.mxu0 0.0
  %3630 = vmatprep.subr.mxu0 0.0
  %3631 = vmatpush1.msra.mxu0 0.0
  %3632 = vmatprep.subr.mxu0 0.0
  %3633 = vmatpush1.msra.mxu0 0.0
  %3634 = vmatprep.subr.mxu0 0.0
  %3635 = vmatpush1.msra.mxu0 0.0
  %3636 = vmatprep.subr.mxu0 0.0
  %3637 = vmatpush1.msra.mxu0 0.0
  %3638 = vmatprep.subr.mxu0 0.0
  %3639 = vmatpush1.msra.mxu0 0.0
  %3640 = vmatprep.subr.mxu0 0.0
  %3641 = vmatpush1.msra.mxu0 0.0
  %3642 = vmatprep.subr.mxu0 0.0
  %3643 = vmatpush1.msra.mxu0 0.0
  %3644 = vmatprep.subr.mxu0 0.0
  %3645 = vmatpush1.msra.mxu0 0.0
  %3646 = vmatprep.subr.mxu0 0.0
  %3647 = vmatpush1.msra.mxu0 0.0
  %3648 = vmatprep.subr.mxu0 0.0
  %3649 = vmatpush1.msra.mxu0 0.0
  %3650 = vmatprep.subr.mxu0 0.0
  %3651 = vmatpush1.msra.mxu0 0.0
  %3652 = vmatprep.subr.mxu0 0.0
  %3653 = vmatpush1.msra.mxu0 0.0
  %3654 = vmatprep.subr.mxu0 0.0
  %3655 = vmatpush1.msra.mxu0 0.0
  %3656 = vmatprep.subr.mxu0 0.0
  %3657 = vmatpush1.msra.mxu0 0.0
  %3658 = vmatprep.subr.mxu0 0.0
  %3659 = vmatpush1.msra.mxu0 0.0
  %3660 = vmatprep.subr.mxu0 0.0
  %3661 = vmatpush1.msra.mxu0 0.0
  %3662 = vmatprep.subr.mxu0 0.0
  %3663 = vmatpush1.msra.mxu0 0.0
  %3664 = vmatprep.subr.mxu0 0.0
  %3665 = vmatpush1.msra.mxu0 0.0
  %3666 = vmatprep.subr.mxu0 0.0
  %3667 = vmatpush1.msra.mxu0 0.0
  %3668 = vmatprep.subr.mxu0 0.0
  %3669 = vmatpush1.msra.mxu0 0.0
  %3670 = vmatprep.subr.mxu0 0.0
  %3671 = vmatpush1.msra.mxu0 0.0
  %3672 = vmatprep.subr.mxu0 0.0
  %3673 = vmatpush1.msra.mxu0 0.0
  %3674 = vmatprep.mubr.f32.mxu0 0.0
  %3675 = vmatmul.mubr.f32.gmra.mrb[0].mxu0 %v3563
  %v3676 = vpop.f32.mrb[0].mxu0
  %v3677 = vadd.f32 %v3560, %v3676
  %v3678 = vpop.f32.mrb[0].mxu0
  %3679 = vmatprep.mubr.f32.mxu0 0.0
  %3680 = vmatmul.mubr.f32.gmra.mrb[0].mxu0 %v3566
  %v3681 = vpop.f32.mrb[0].mxu0
  %v3682 = vadd.f32 %v3560, %v3681
  %v3683 = vpop.f32.mrb[0].mxu0
  %3684 = vmatprep.mubr.f32.mxu0 0.0
  %3685 = vmatmul.mubr.f32.gmra.mrb[0].mxu0 %v3569
  %v3686 = vpop.f32.mrb[0].mxu0
  %v3687 = vadd.f32 %v3560, %v3686
  %v3688 = vpop.f32.mrb[0].mxu0
  %3689 = vmatprep.mubr.f32.mxu0 0.0
  %3690 = vmatmul.mubr.f32.gmra.mrb[0].mxu0 %v3572
  %v3691 = vpop.f32.mrb[0].mxu0
  %v3692 = vadd.f32 %v3560, %v3691
  %v3693 = vpop.f32.mrb[0].mxu0
  %3694 = vmatprep.mubr.f32.mxu0 0.0
  %3695 = vmatmul.mubr.f32.gmra.mrb[0].mxu0 %v3575
  %v3696 = vpop.f32.mrb[0].mxu0
  %v3697 = vadd.f32 %v3560, %v3696
  %v3698 = vpop.f32.mrb[0].mxu0
  %3699 = vmatprep.mubr.f32.mxu0 0.0
  %3700 = vmatmul.mubr.f32.gmra.mrb[0].mxu0 %v3578
  %v3701 = vpop.f32.mrb[0].mxu0
  %v3702 = vadd.f32 %v3560, %v3701
  %v3703 = vpop.f32.mrb[0].mxu0
  %3704 = vmatprep.mubr.f32.mxu0 0.0
  %3705 = vmatmul.mubr.f32.gmra.mrb[0].mxu0 %v3581
  %v3706 = vpop.f32.mrb[0].mxu0
  %v3707 = vadd.f32 %v3560, %v3706
  %v3708 = vpop.f32.mrb[0].mxu0
  %3709 = vmatprep.mubr.f32.mxu0 0.0
  %3710 = vmatmul.mubr.f32.gmra.mrb[0].mxu0 %v3584
  %v3711 = vpop.f32.mrb[0].mxu0
  %v3712 = vadd.f32 %v3560, %v3711
  %v3713 = vpop.f32.mrb[0].mxu0
  %3714 = vmatprep.mubr.f32.mxu0 0.0
  %3715 = vmatmul.mubr.f32.gmra.mrb[0].mxu0 %v3587
  %v3716 = vpop.f32.mrb[0].mxu0
  %v3717 = vadd.f32 %v3560, %v3716
  %v3718 = vpop.f32.mrb[0].mxu0
  %3719 = vmatprep.mubr.f32.mxu0 0.0
  %3720 = vmatmul.mubr.f32.gmra.mrb[0].mxu0 %v3590
  %v3721 = vpop.f32.mrb[0].mxu0
  %v3722 = vadd.f32 %v3560, %v3721
  %v3723 = vpop.f32.mrb[0].mxu0
  %3724 = vmatprep.mubr.f32.mxu0 0.0
  %3725 = vmatmul.mubr.f32.gmra.mrb[0].mxu0 %v3593
  %v3726 = vpop.f32.mrb[0].mxu0
  %v3727 = vadd.f32 %v3560, %v3726
  %v3728 = vpop.f32.mrb[0].mxu0
  %3729 = vmatprep.mubr.f32.mxu0 0.0
  %3730 = vmatmul.mubr.f32.gmra.mrb[0].mxu0 %v3596
  %v3731 = vpop.f32.mrb[0].mxu0
  %v3732 = vadd.f32 %v3560, %v3731
  %v3733 = vpop.f32.mrb[0].mxu0
  %3734 = vmatprep.mubr.f32.mxu0 0.0
  %3735 = vmatmul.mubr.f32.gmra.mrb[0].mxu0 %v3599
  %v3736 = vpop.f32.mrb[0].mxu0
  %v3737 = vadd.f32 %v3560, %v3736
  %v3738 = vpop.f32.mrb[0].mxu0
  %3739 = vmatprep.mubr.f32.mxu0 0.0
  %3740 = vmatmul.mubr.f32.gmra.mrb[0].mxu0 %v3602
  %v3741 = vpop.f32.mrb[0].mxu0
  %v3742 = vadd.f32 %v3560, %v3741
  %v3743 = vpop.f32.mrb[0].mxu0
  %3744 = vmatprep.mubr.f32.mxu0 0.0
  %3745 = vmatmul.mubr.f32.gmra.mrb[0].mxu0 %v3605
  %v3746 = vpop.f32.mrb[0].mxu0
  %v3747 = vadd.f32 %v3560, %v3746
  %v3748 = vpop.f32.mrb[0].mxu0
  %3749 = vmatprep.mubr.f32.mxu0 0.0
  %3750 = vmatmul.mubr.f32.gmra.mrb[0].mxu0 %v3608
  %v3751 = vpop.f32.mrb[0].mxu0
  %v3752 = vadd.f32 %v3560, %v3751
  %v3753 = vpop.f32.mrb[0].mxu0
  %3754 = vdwg.mxu0
  %v3755 = vadd.f32 %v3311, %v3677
  %v3756 = vadd.f32 %v3312, %v3682
  %v3757 = vadd.f32 %v3313, %v3687
  %v3758 = vadd.f32 %v3314, %v3692
  %v3759 = vadd.f32 %v3315, %v3697
  %v3760 = vadd.f32 %v3316, %v3702
  %v3761 = vadd.f32 %v3317, %v3707
  %v3762 = vadd.f32 %v3318, %v3712
  %v3763 = vadd.f32 %v3319, %v3717
  %v3764 = vadd.f32 %v3320, %v3722
  %v3765 = vadd.f32 %v3321, %v3727
  %v3766 = vadd.f32 %v3322, %v3732
  %v3767 = vadd.f32 %v3323, %v3737
  %v3768 = vadd.f32 %v3324, %v3742
  %v3769 = vadd.f32 %v3325, %v3747
  %v3770 = vadd.f32 %v3326, %v3752
  %v3771 = vld [vmem:[%s9] sm:$0xff]
  %v3772 = vld [vmem:[%s9 + $0x8] sm:$0xff]
  %v3773 = vld [vmem:[%s9 + $0x10] sm:$0xff]
  %v3774 = vld [vmem:[%s9 + $0x18] sm:$0xff]
  %v3775 = vld [vmem:[%s10] sm:$0x1]
  %v3777 = vlaneseq
  %v3778 = vshrl.u32 %v3777, 7
  %v3779 = vsub.s32 0, %v3778
  %v3780 = vrot.slane %v3775, %v3779
  %v3798 = vrot.slane %v3755, 7
  %v3799 = vrot.slane %v3756, 6
  %vm3800 = vcmask 1041409
  %v3801 = vsel %vm3800, %v3799, %v3798
  %v3802 = vrot.slane %v3757, 5
  %vm3803 = vcmask 1042434
  %v3804 = vsel %vm3803, %v3802, %v3801
  %v3805 = vrot.slane %v3758, 4
  %vm3806 = vcmask 1043459
  %v3807 = vsel %vm3806, %v3805, %v3804
  %v3808 = vrot.slane %v3759, 3
  %vm3809 = vcmask 1044484
  %v3810 = vsel %vm3809, %v3808, %v3807
  %v3811 = vrot.slane %v3760, 2
  %vm3812 = vcmask 1045509
  %v3813 = vsel %vm3812, %v3811, %v3810
  %v3814 = vrot.slane %v3761, 1
  %vm3815 = vcmask 1046534
  %v3816 = vsel %vm3815, %v3814, %v3813
  %vm3817 = vcmask 1047559
  %v3818 = vsel %vm3817, %v3762, %v3816
  %v3819 = vrot.slane %v3763, 7
  %v3820 = vrot.slane %v3764, 6
  %v3821 = vsel %vm3800, %v3820, %v3819
  %v3822 = vrot.slane %v3765, 5
  %v3823 = vsel %vm3803, %v3822, %v3821
  %v3824 = vrot.slane %v3766, 4
  %v3825 = vsel %vm3806, %v3824, %v3823
  %v3826 = vrot.slane %v3767, 3
  %v3827 = vsel %vm3809, %v3826, %v3825
  %v3828 = vrot.slane %v3768, 2
  %v3829 = vsel %vm3812, %v3828, %v3827
  %v3830 = vrot.slane %v3769, 1
  %v3831 = vsel %vm3815, %v3830, %v3829
  %v3832 = vsel %vm3817, %v3770, %v3831
  %v3833 = vsel %vm573, %v3818, 0
  %v3835 = vsel %vm573, %v3832, 0
  %3837 = vmatprep.subr.mxu0 0.0
  %3838 = vmatpush1.msra.mxu0 %v3771
  %3839 = vmatprep.subr.mxu0 0.0
  %3840 = vmatpush1.msra.mxu0 %v3772
  %3841 = vmatprep.subr.mxu0 0.0
  %3842 = vmatpush1.msra.mxu0 %v3773
  %3843 = vmatprep.subr.mxu0 0.0
  %3844 = vmatpush1.msra.mxu0 %v3774
  %3845 = vmatprep.subr.mxu0 0.0
  %3846 = vmatpush1.msra.mxu0 0.0
  %3847 = vmatprep.subr.mxu0 0.0
  %3848 = vmatpush1.msra.mxu0 0.0
  %3849 = vmatprep.subr.mxu0 0.0
  %3850 = vmatpush1.msra.mxu0 0.0
  %3851 = vmatprep.subr.mxu0 0.0
  %3852 = vmatpush1.msra.mxu0 0.0
  %3853 = vmatprep.subr.mxu0 0.0
  %3854 = vmatpush1.msra.mxu0 0.0
  %3855 = vmatprep.subr.mxu0 0.0
  %3856 = vmatpush1.msra.mxu0 0.0
  %3857 = vmatprep.subr.mxu0 0.0
  %3858 = vmatpush1.msra.mxu0 0.0
  %3859 = vmatprep.subr.mxu0 0.0
  %3860 = vmatpush1.msra.mxu0 0.0
  %3861 = vmatprep.subr.mxu0 0.0
  %3862 = vmatpush1.msra.mxu0 0.0
  %3863 = vmatprep.subr.mxu0 0.0
  %3864 = vmatpush1.msra.mxu0 0.0
  %3865 = vmatprep.subr.mxu0 0.0
  %3866 = vmatpush1.msra.mxu0 0.0
  %3867 = vmatprep.subr.mxu0 0.0
  %3868 = vmatpush1.msra.mxu0 0.0
  %3869 = vmatprep.subr.mxu0 0.0
  %3870 = vmatpush1.msra.mxu0 0.0
  %3871 = vmatprep.subr.mxu0 0.0
  %3872 = vmatpush1.msra.mxu0 0.0
  %3873 = vmatprep.subr.mxu0 0.0
  %3874 = vmatpush1.msra.mxu0 0.0
  %3875 = vmatprep.subr.mxu0 0.0
  %3876 = vmatpush1.msra.mxu0 0.0
  %3877 = vmatprep.subr.mxu0 0.0
  %3878 = vmatpush1.msra.mxu0 0.0
  %3879 = vmatprep.subr.mxu0 0.0
  %3880 = vmatpush1.msra.mxu0 0.0
  %3881 = vmatprep.subr.mxu0 0.0
  %3882 = vmatpush1.msra.mxu0 0.0
  %3883 = vmatprep.subr.mxu0 0.0
  %3884 = vmatpush1.msra.mxu0 0.0
  %3885 = vmatprep.subr.mxu0 0.0
  %3886 = vmatpush1.msra.mxu0 0.0
  %3887 = vmatprep.subr.mxu0 0.0
  %3888 = vmatpush1.msra.mxu0 0.0
  %3889 = vmatprep.subr.mxu0 0.0
  %3890 = vmatpush1.msra.mxu0 0.0
  %3891 = vmatprep.subr.mxu0 0.0
  %3892 = vmatpush1.msra.mxu0 0.0
  %3893 = vmatprep.subr.mxu0 0.0
  %3894 = vmatpush1.msra.mxu0 0.0
  %3895 = vmatprep.subr.mxu0 0.0
  %3896 = vmatpush1.msra.mxu0 0.0
  %3897 = vmatprep.subr.mxu0 0.0
  %3898 = vmatpush1.msra.mxu0 0.0
  %3899 = vmatprep.subr.mxu0 0.0
  %3900 = vmatpush1.msra.mxu0 0.0
  %3901 = vmatprep.mubr.f32.mxu0 0.0
  %3902 = vmatmul.mubr.f32.gmra.mrb[0].mxu0 %v3833
  %v3903 = vpop.f32.mrb[0].mxu0
  %v3904 = vadd.f32 %v3780, %v3903
  %v3905 = vpop.f32.mrb[0].mxu0
  %3906 = vmatprep.mubr.f32.mxu0 0.0
  %3907 = vmatmul.mubr.f32.gmra.mrb[0].mxu0 %v3835
  %v3908 = vpop.f32.mrb[0].mxu0
  %v3909 = vadd.f32 %v3780, %v3908
  %v3910 = vpop.f32.mrb[0].mxu0
  %3911 = vdwg.mxu0
  %3912 = vst [vmem:[%s11] sm:$0xff] %v3904
  %3913 = vst [vmem:[%s11 + $0x8] sm:$0xff] %v3909
  // Predicated region
  $region46: #{transformer_forward.1} parent=0 // pred_check
    _
  $region47: #{transformer_forward.1} parent=0 // pred_check_branch
    %3915 = sbr.rel (0) target = $region49
  $region48: #{transformer_forward.1} parent=0 // pred_region
    _
  $region49: #{transformer_forward.1} parent=0 // pred_fallthru
    _
  // Predicated region
  $region50: #{transformer_forward.1} parent=0 // pred_check
    _
  $region51: #{transformer_forward.1} parent=0 // pred_check_branch
    %3917 = sbr.rel (0) target = $region53
  $region52: #{transformer_forward.1} parent=0 // pred_region
    _
  $region53: #{transformer_forward.1} parent=0 // pred_fallthru
    _

</llo_original>
